<compile_context>
chip_gen: v5e
topology: v5e:2x2
jax: 0.10.0
libtpu: 0.0.40
codegen_flags: <defaults>
</compile_context>

<pallas_src>
import jax
import jax.numpy as jnp
import numpy as np
from jax.experimental import pallas as pl
from jax.experimental.pallas import tpu as pltpu


def decoder_rnn_kernel(
    x_ref, yb_ref,
    w1h_ref, w1c_ref, w1x_ref, b1_ref,        # lin_in[0] split over [h | c | x]
    w2_ref,                                   # lin_in[2] weight row (bias cancels in softmax)
    wupd_ctx_ref,                             # lin_upd ctx-part (y-part folded into yb on host)
    wih4_ref, whh4_ref, bl4_ref,              # LSTM weights pre-split per gate [i, f, g, o]
    wout_h_ref, wout_ctx_ref, bout_ref,       # lin_out split over [h | ctx]
    out_ref,
):
    x = x_ref[...]                  # (B, Tm1, E)  float32
    yb = yb_ref[...]                # (Tm1, B, 1)  = y * wupd_y + bupd, time-major
    B, Tm1, E = x.shape
    DH = whh4_ref.shape[1]

    w1h = w1h_ref[...]              # (DH, E)
    w1c = w1c_ref[...]              # (DH, E)
    w1x = w1x_ref[...]              # (E,  E)
    wupd_ctx = wupd_ctx_ref[...]    # (E, 1)
    wih4 = wih4_ref[...]            # (4, 1, DH)
    whh4 = whh4_ref[...]            # (4, DH, DH)
    bl4 = bl4_ref[...]              # (4, 1, DH)
    wout_h = wout_h_ref[...]        # (DH, 1)
    wout_ctx = wout_ctx_ref[...]    # (E, 1)
    bout = bout_ref[...]            # (1, 1)

    # Loop-invariant broadcasts hoisted out of the recurrence.
    b1b = jnp.broadcast_to(b1_ref[...], (B, E))                      # (B, E)
    w2b = jnp.broadcast_to(w2_ref[...].reshape(1, 1, E), (B, Tm1, E))
    wih_i, wih_f, wih_g, wih_o = wih4[0], wih4[1], wih4[2], wih4[3]  # (1, DH) each
    whh_i, whh_f, whh_g, whh_o = whh4[0], whh4[1], whh4[2], whh4[3]  # (DH, DH) each
    bl_i = jnp.broadcast_to(bl4[0], (B, DH))
    bl_f = jnp.broadcast_to(bl4[1], (B, DH))
    bl_g = jnp.broadcast_to(bl4[2], (B, DH))
    bl_o = jnp.broadcast_to(bl4[3], (B, DH))

    # x-dependent part of the attention MLP is identical every step: hoist it.
    xz = jnp.dot(x.reshape(B * Tm1, E), w1x).reshape(B, Tm1, E)

    h = jnp.zeros((B, DH), jnp.float32)
    c = jnp.zeros((B, DH), jnp.float32)
    ctx = jnp.zeros((B, E), jnp.float32)

    # Fully unrolled recurrence (Tm1 is a small static trip count).
    for t in range(Tm1):
        # --- attention: softmax(lin_in([h; c; x])) over the T-1 axis ---
        base = jnp.dot(h, w1h) + jnp.dot(c, w1c) + b1b               # (B, E)
        z = jnp.tanh(xz + base[:, None, :])                          # (B, Tm1, E)
        s = jnp.sum(z * w2b, axis=2)                                 # (B, Tm1)
        s = s - jnp.max(s, axis=1, keepdims=True)
        p = jnp.exp(s)
        b_attn = p * pl.reciprocal(jnp.sum(p, axis=1, keepdims=True),
                                   approx=True)                      # (B, Tm1)

        # context_step = bmm(b, x)
        ctx = jnp.sum(b_attn[:, :, None] * x, axis=1)                # (B, E)

        # lin_upd([ctx; y_t])  (y-part & bias pre-folded into yb on the host)
        y_new = jnp.dot(ctx, wupd_ctx) + yb[t]                       # (B, 1)

        # LSTM cell, PyTorch gate order [i, f, g, o], weights pre-split per gate.
        i_g = jax.nn.sigmoid(y_new * wih_i + jnp.dot(h, whh_i) + bl_i)
        f_g = jax.nn.sigmoid(y_new * wih_f + jnp.dot(h, whh_f) + bl_f)
        g_g = jnp.tanh(y_new * wih_g + jnp.dot(h, whh_g) + bl_g)
        o_g = jax.nn.sigmoid(y_new * wih_o + jnp.dot(h, whh_o) + bl_o)
        c = f_g * c + i_g * g_g
        h = o_g * jnp.tanh(c)

    # prediction = lin_out([h; ctx])
    out_ref[...] = jnp.dot(h, wout_h) + jnp.dot(ctx, wout_ctx) + bout


def decoder_rnn_pallas(x, y, params):
    B0, Tm1, E = x.shape

    # Pad batch to a multiple of 8 so f32 vregs have full sublanes (padded rows
    # are independent and sliced off below).
    B = max(8, ((B0 + 7) // 8) * 8)
    if B != B0:
        x = jnp.pad(x, ((0, B - B0), (0, 0), (0, 0)))
        y = jnp.pad(y, ((0, B - B0), (0, 0)))

    # Fold lin_upd's y-weight and bias into y once, time-major (Tm1, B, 1) so
    # each step reads a static leading-dim tile instead of a one-hot gather.
    yb = (y * params["wupd_y"] + params["bupd"]).T.reshape(Tm1, B, 1)

    args = (x, yb,
            params["w1h"], params["w1c"], params["w1x"], params["b1"],
            params["w2_row"],
            params["wupd_ctx"],
            params["wih4"], params["whh4"], params["bl4"],
            params["wout_h"], params["wout_ctx"], params["bout"])
    in_specs = [pl.BlockSpec(memory_space=pltpu.MemorySpace.VMEM) for _ in args]
    out = pl.pallas_call(
        decoder_rnn_kernel,
        out_shape=jax.ShapeDtypeStruct((B, 1), jnp.float32),
        in_specs=in_specs,
        out_specs=pl.BlockSpec(memory_space=pltpu.MemorySpace.VMEM),
    )(*args)
    return out[:B0]


def decoder_rnn_ref(x, y, params):
    """Pure-JAX reference mirroring the PyTorch forward pass."""
    B, Tm1, E = x.shape
    DH = params["whh_t"].shape[0]
    W1 = jnp.concatenate([params["w1h"], params["w1c"], params["w1x"]], axis=0)
    h = jnp.zeros((B, DH), jnp.float32)
    c = jnp.zeros((B, DH), jnp.float32)
    ctx = jnp.zeros((B, E), jnp.float32)
    for t in range(Tm1):
        l = jnp.concatenate(
            [jnp.broadcast_to(h[:, None, :], (B, Tm1, DH)),
             jnp.broadcast_to(c[:, None, :], (B, Tm1, DH)),
             x], axis=2).reshape(B * Tm1, -1)
        z = jnp.tanh(l @ W1 + params["b1"])
        s = (z @ params["w2_row"].T + params["b2"]).reshape(B, Tm1)
        b = jax.nn.softmax(s, axis=1)
        ctx = jnp.einsum("bt,bte->be", b, x)
        y_t = y[:, t:t + 1]
        y_new = ctx @ params["wupd_ctx"] + y_t * params["wupd_y"] + params["bupd"]
        gates = y_new * params["wih_t"] + h @ params["whh_t"] + params["blstm"]
        i = jax.nn.sigmoid(gates[:, :DH]); f = jax.nn.sigmoid(gates[:, DH:2 * DH])
        g = jnp.tanh(gates[:, 2 * DH:3 * DH]); o = jax.nn.sigmoid(gates[:, 3 * DH:])
        c = f * c + i * g
        h = o * jnp.tanh(c)
    return h @ params["wout_h"] + ctx @ params["wout_ctx"] + params["bout"]


def make_params(key, dec_hidden, enc_hidden):
    """Deterministic synthetic parameters with the PyTorch module's shapes."""
    DH, E = dec_hidden, enc_hidden
    ks = jax.random.split(key, 12)
    f32 = jnp.float32
    # PyTorch-shaped weights (out_features, in_features)
    lin_in0_w = 0.1 * jax.random.normal(ks[0], (E, 2 * DH + E), f32)
    lin_in0_b = 0.1 * jax.random.normal(ks[1], (E,), f32)
    lin_in2_w = 0.1 * jax.random.normal(ks[2], (1, E), f32)
    lin_in2_b = 0.1 * jax.random.normal(ks[3], (1,), f32)
    lin_upd_w = jax.random.normal(ks[4], (1, E + 1), f32)          # .normal_() in torch
    lin_upd_b = 0.1 * jax.random.normal(ks[5], (1,), f32)
    w_ih = 0.1 * jax.random.normal(ks[6], (4 * DH, 1), f32)
    w_hh = 0.1 * jax.random.normal(ks[7], (4 * DH, DH), f32)
    b_ih = 0.1 * jax.random.normal(ks[8], (4 * DH,), f32)
    b_hh = 0.1 * jax.random.normal(ks[9], (4 * DH,), f32)
    lin_out_w = 0.1 * jax.random.normal(ks[10], (1, DH + E), f32)
    lin_out_b = 0.1 * jax.random.normal(ks[11], (1,), f32)

    W1t = lin_in0_w.T                       # (2DH+E, E)
    wupd_t = lin_upd_w.T                    # (E+1, 1)
    wout_t = lin_out_w.T                    # (DH+E, 1)
    wih_t = w_ih.T                          # (1, 4DH)
    whh_t = w_hh.T                          # (DH, 4DH)
    blstm = (b_ih + b_hh).reshape(1, 4 * DH)

    # Per-gate split (PyTorch gate order [i, f, g, o]) done once on the host so
    # the kernel never lane-slices a (B, 4*DH) gates vreg.
    wih4 = jnp.stack([wih_t[:, g * DH:(g + 1) * DH] for g in range(4)])   # (4, 1, DH)
    whh4 = jnp.stack([whh_t[:, g * DH:(g + 1) * DH] for g in range(4)])   # (4, DH, DH)
    bl4 = jnp.stack([blstm[:, g * DH:(g + 1) * DH] for g in range(4)])    # (4, 1, DH)

    return {
        "w1h": W1t[:DH], "w1c": W1t[DH:2 * DH], "w1x": W1t[2 * DH:],
        "b1": lin_in0_b.reshape(1, E),
        "w2_row": lin_in2_w, "b2": lin_in2_b.reshape(1, 1),
        "wupd_ctx": wupd_t[:E], "wupd_y": wupd_t[E:].reshape(1, 1),
        "bupd": lin_upd_b.reshape(1, 1),
        "wih_t": wih_t, "whh_t": whh_t, "blstm": blstm,
        "wih4": wih4, "whh4": whh4, "bl4": bl4,
        "wout_h": wout_t[:DH], "wout_ctx": wout_t[DH:],
        "bout": lin_out_b.reshape(1, 1),
    }


if __name__ == "__main__":
    B = 4
    dec_hidden = 32
    enc_hidden = 32
    T = 9            # -> T-1 = 8 recurrent steps / attention positions

    key = jax.random.PRNGKey(0)
    kp, kx, ky = jax.random.split(key, 3)
    params = make_params(kp, dec_hidden, enc_hidden)
    x = 0.5 * jax.random.normal(kx, (B, T - 1, enc_hidden), jnp.float32)
    y = 0.5 * jax.random.normal(ky, (B, T - 1), jnp.float32)

    out = jax.block_until_ready(decoder_rnn_pallas(x, y, params))
    ref = jax.block_until_ready(decoder_rnn_ref(x, y, params))

    assert out.shape == (B, 1)
    np.testing.assert_allclose(np.asarray(out), np.asarray(ref), rtol=2e-2, atol=2e-2)
    print("KERNEL_OK")
</pallas_src>

<mosaic_0001>
module attributes {stable_mosaic.version = 11 : i64} {
  func.func @decoder_rnn_kernel(%arg0: memref<8x8x32xf32, #tpu.memory_space<vmem>>, %arg1: memref<8x8x1xf32, #tpu.memory_space<vmem>>, %arg2: memref<32x32xf32, #tpu.memory_space<vmem>>, %arg3: memref<32x32xf32, #tpu.memory_space<vmem>>, %arg4: memref<32x32xf32, #tpu.memory_space<vmem>>, %arg5: memref<1x32xf32, #tpu.memory_space<vmem>>, %arg6: memref<1x32xf32, #tpu.memory_space<vmem>>, %arg7: memref<32x1xf32, #tpu.memory_space<vmem>>, %arg8: memref<4x1x32xf32, #tpu.memory_space<vmem>>, %arg9: memref<4x32x32xf32, #tpu.memory_space<vmem>>, %arg10: memref<4x1x32xf32, #tpu.memory_space<vmem>>, %arg11: memref<32x1xf32, #tpu.memory_space<vmem>>, %arg12: memref<32x1xf32, #tpu.memory_space<vmem>>, %arg13: memref<1x1xf32, #tpu.memory_space<vmem>>, %arg14: memref<8x1xf32, #tpu.memory_space<vmem>>) attributes {dimension_semantics = [], scalar_prefetch = 0 : i64, scratch_operands = 0 : i64, tpu.core_type = #tpu.core_type<tc>} {
    %c0 = arith.constant 0 : index
    %c0_0 = arith.constant 0 : index
    %c0_1 = arith.constant 0 : index
    %0 = vector.load %arg0[%c0, %c0_0, %c0_1] : memref<8x8x32xf32, #tpu.memory_space<vmem>>, vector<8x8x32xf32>
    %c0_2 = arith.constant 0 : index
    %c0_3 = arith.constant 0 : index
    %c0_4 = arith.constant 0 : index
    %1 = vector.load %arg1[%c0_2, %c0_3, %c0_4] : memref<8x8x1xf32, #tpu.memory_space<vmem>>, vector<8x8x1xf32>
    %c0_5 = arith.constant 0 : index
    %c0_6 = arith.constant 0 : index
    %2 = vector.load %arg2[%c0_5, %c0_6] : memref<32x32xf32, #tpu.memory_space<vmem>>, vector<32x32xf32>
    %c0_7 = arith.constant 0 : index
    %c0_8 = arith.constant 0 : index
    %3 = vector.load %arg3[%c0_7, %c0_8] : memref<32x32xf32, #tpu.memory_space<vmem>>, vector<32x32xf32>
    %c0_9 = arith.constant 0 : index
    %c0_10 = arith.constant 0 : index
    %4 = vector.load %arg4[%c0_9, %c0_10] : memref<32x32xf32, #tpu.memory_space<vmem>>, vector<32x32xf32>
    %c0_11 = arith.constant 0 : index
    %c0_12 = arith.constant 0 : index
    %5 = vector.load %arg7[%c0_11, %c0_12] : memref<32x1xf32, #tpu.memory_space<vmem>>, vector<32x1xf32>
    %c0_13 = arith.constant 0 : index
    %c0_14 = arith.constant 0 : index
    %c0_15 = arith.constant 0 : index
    %6 = vector.load %arg8[%c0_13, %c0_14, %c0_15] : memref<4x1x32xf32, #tpu.memory_space<vmem>>, vector<4x1x32xf32>
    %c0_16 = arith.constant 0 : index
    %c0_17 = arith.constant 0 : index
    %c0_18 = arith.constant 0 : index
    %7 = vector.load %arg9[%c0_16, %c0_17, %c0_18] : memref<4x32x32xf32, #tpu.memory_space<vmem>>, vector<4x32x32xf32>
    %c0_19 = arith.constant 0 : index
    %c0_20 = arith.constant 0 : index
    %c0_21 = arith.constant 0 : index
    %8 = vector.load %arg10[%c0_19, %c0_20, %c0_21] : memref<4x1x32xf32, #tpu.memory_space<vmem>>, vector<4x1x32xf32>
    %c0_22 = arith.constant 0 : index
    %c0_23 = arith.constant 0 : index
    %9 = vector.load %arg11[%c0_22, %c0_23] : memref<32x1xf32, #tpu.memory_space<vmem>>, vector<32x1xf32>
    %c0_24 = arith.constant 0 : index
    %c0_25 = arith.constant 0 : index
    %10 = vector.load %arg12[%c0_24, %c0_25] : memref<32x1xf32, #tpu.memory_space<vmem>>, vector<32x1xf32>
    %c0_26 = arith.constant 0 : index
    %c0_27 = arith.constant 0 : index
    %11 = vector.load %arg13[%c0_26, %c0_27] : memref<1x1xf32, #tpu.memory_space<vmem>>, vector<1x1xf32>
    %c0_28 = arith.constant 0 : index
    %c0_29 = arith.constant 0 : index
    %12 = vector.load %arg5[%c0_28, %c0_29] : memref<1x32xf32, #tpu.memory_space<vmem>>, vector<1x32xf32>
    %13 = vector.shape_cast %12 : vector<1x32xf32> to vector<1x32xf32>
    %14 = vector.broadcast %13 : vector<1x32xf32> to vector<8x32xf32>
    %c0_30 = arith.constant 0 : index
    %c0_31 = arith.constant 0 : index
    %15 = vector.load %arg6[%c0_30, %c0_31] : memref<1x32xf32, #tpu.memory_space<vmem>>, vector<1x32xf32>
    %16 = vector.shape_cast %15 : vector<1x32xf32> to vector<1x1x32xf32>
    %17 = vector.shape_cast %16 : vector<1x1x32xf32> to vector<1x1x32xf32>
    %18 = vector.broadcast %17 : vector<1x1x32xf32> to vector<8x8x32xf32>
    %19 = vector.extract_strided_slice %6 {offsets = [0, 0, 0], sizes = [1, 1, 32], strides = [1, 1, 1]} : vector<4x1x32xf32> to vector<1x1x32xf32>
    %20 = vector.shape_cast %19 : vector<1x1x32xf32> to vector<1x32xf32>
    %21 = vector.extract_strided_slice %6 {offsets = [1, 0, 0], sizes = [1, 1, 32], strides = [1, 1, 1]} : vector<4x1x32xf32> to vector<1x1x32xf32>
    %22 = vector.shape_cast %21 : vector<1x1x32xf32> to vector<1x32xf32>
    %23 = vector.extract_strided_slice %6 {offsets = [2, 0, 0], sizes = [1, 1, 32], strides = [1, 1, 1]} : vector<4x1x32xf32> to vector<1x1x32xf32>
    %24 = vector.shape_cast %23 : vector<1x1x32xf32> to vector<1x32xf32>
    %25 = vector.extract_strided_slice %6 {offsets = [3, 0, 0], sizes = [1, 1, 32], strides = [1, 1, 1]} : vector<4x1x32xf32> to vector<1x1x32xf32>
    %26 = vector.shape_cast %25 : vector<1x1x32xf32> to vector<1x32xf32>
    %27 = vector.extract_strided_slice %7 {offsets = [0, 0, 0], sizes = [1, 32, 32], strides = [1, 1, 1]} : vector<4x32x32xf32> to vector<1x32x32xf32>
    %28 = vector.shape_cast %27 : vector<1x32x32xf32> to vector<32x32xf32>
    %29 = vector.extract_strided_slice %7 {offsets = [1, 0, 0], sizes = [1, 32, 32], strides = [1, 1, 1]} : vector<4x32x32xf32> to vector<1x32x32xf32>
    %30 = vector.shape_cast %29 : vector<1x32x32xf32> to vector<32x32xf32>
    %31 = vector.extract_strided_slice %7 {offsets = [2, 0, 0], sizes = [1, 32, 32], strides = [1, 1, 1]} : vector<4x32x32xf32> to vector<1x32x32xf32>
    %32 = vector.shape_cast %31 : vector<1x32x32xf32> to vector<32x32xf32>
    %33 = vector.extract_strided_slice %7 {offsets = [3, 0, 0], sizes = [1, 32, 32], strides = [1, 1, 1]} : vector<4x32x32xf32> to vector<1x32x32xf32>
    %34 = vector.shape_cast %33 : vector<1x32x32xf32> to vector<32x32xf32>
    %35 = vector.extract_strided_slice %8 {offsets = [0, 0, 0], sizes = [1, 1, 32], strides = [1, 1, 1]} : vector<4x1x32xf32> to vector<1x1x32xf32>
    %36 = vector.shape_cast %35 : vector<1x1x32xf32> to vector<1x32xf32>
    %37 = vector.shape_cast %36 : vector<1x32xf32> to vector<1x32xf32>
    %38 = vector.broadcast %37 : vector<1x32xf32> to vector<8x32xf32>
    %39 = vector.extract_strided_slice %8 {offsets = [1, 0, 0], sizes = [1, 1, 32], strides = [1, 1, 1]} : vector<4x1x32xf32> to vector<1x1x32xf32>
    %40 = vector.shape_cast %39 : vector<1x1x32xf32> to vector<1x32xf32>
    %41 = vector.shape_cast %40 : vector<1x32xf32> to vector<1x32xf32>
    %42 = vector.broadcast %41 : vector<1x32xf32> to vector<8x32xf32>
    %43 = vector.extract_strided_slice %8 {offsets = [2, 0, 0], sizes = [1, 1, 32], strides = [1, 1, 1]} : vector<4x1x32xf32> to vector<1x1x32xf32>
    %44 = vector.shape_cast %43 : vector<1x1x32xf32> to vector<1x32xf32>
    %45 = vector.shape_cast %44 : vector<1x32xf32> to vector<1x32xf32>
    %46 = vector.broadcast %45 : vector<1x32xf32> to vector<8x32xf32>
    %47 = vector.extract_strided_slice %8 {offsets = [3, 0, 0], sizes = [1, 1, 32], strides = [1, 1, 1]} : vector<4x1x32xf32> to vector<1x1x32xf32>
    %48 = vector.shape_cast %47 : vector<1x1x32xf32> to vector<1x32xf32>
    %49 = vector.shape_cast %48 : vector<1x32xf32> to vector<1x32xf32>
    %50 = vector.broadcast %49 : vector<1x32xf32> to vector<8x32xf32>
    %51 = vector.shape_cast %0 : vector<8x8x32xf32> to vector<64x32xf32>
    %cst = arith.constant dense<0.000000e+00> : vector<64x32xf32>
    %52 = tpu.matmul %51, %4, %cst {dimension_numbers = #tpu.dot_dimension_numbers<[1], [0], [0], [1], [0, 0, 1, 1], [], []>} : vector<64x32xf32>, vector<32x32xf32>, vector<64x32xf32> -> vector<64x32xf32>
    %53 = vector.shape_cast %52 : vector<64x32xf32> to vector<8x8x32xf32>
    %cst_32 = arith.constant 0.000000e+00 : f32
    %54 = vector.broadcast %cst_32 : f32 to vector<8x32xf32>
    %cst_33 = arith.constant 0.000000e+00 : f32
    %55 = vector.broadcast %cst_33 : f32 to vector<8x32xf32>
    %cst_34 = arith.constant dense<0.000000e+00> : vector<8x32xf32>
    %56 = tpu.matmul %54, %2, %cst_34 {dimension_numbers = #tpu.dot_dimension_numbers<[1], [0], [0], [1], [0, 0, 1, 1], [], []>} : vector<8x32xf32>, vector<32x32xf32>, vector<8x32xf32> -> vector<8x32xf32>
    %cst_35 = arith.constant dense<0.000000e+00> : vector<8x32xf32>
    %57 = tpu.matmul %55, %3, %cst_35 {dimension_numbers = #tpu.dot_dimension_numbers<[1], [0], [0], [1], [0, 0, 1, 1], [], []>} : vector<8x32xf32>, vector<32x32xf32>, vector<8x32xf32> -> vector<8x32xf32>
    %58 = arith.addf %56, %57 : vector<8x32xf32>
    %59 = arith.addf %58, %14 : vector<8x32xf32>
    %60 = vector.shape_cast %59 : vector<8x32xf32> to vector<8x1x32xf32>
    %61 = vector.broadcast %60 : vector<8x1x32xf32> to vector<8x8x32xf32>
    %62 = arith.addf %53, %61 : vector<8x8x32xf32>
    %63 = math.tanh %62 : vector<8x8x32xf32>
    %64 = arith.mulf %63, %18 : vector<8x8x32xf32>
    %cst_36 = arith.constant dense<0.000000e+00> : vector<8x8xf32>
    %65 = vector.multi_reduction <add>, %64, %cst_36 [2] : vector<8x8x32xf32> to vector<8x8xf32>
    %cst_37 = arith.constant dense<0xFF800000> : vector<8xf32>
    %66 = vector.multi_reduction <maximumf>, %65, %cst_37 [1] : vector<8x8xf32> to vector<8xf32>
    %67 = vector.shape_cast %66 : vector<8xf32> to vector<8x1xf32>
    %68 = vector.broadcast %67 : vector<8x1xf32> to vector<8x8xf32>
    %69 = arith.subf %65, %68 : vector<8x8xf32>
    %70 = math.exp %69 : vector<8x8xf32>
    %cst_38 = arith.constant dense<0.000000e+00> : vector<8xf32>
    %71 = vector.multi_reduction <add>, %70, %cst_38 [1] : vector<8x8xf32> to vector<8xf32>
    %72 = vector.shape_cast %71 : vector<8xf32> to vector<8x1xf32>
    %73 = tpu.reciprocal %72 {approx = true} : vector<8x1xf32> -> vector<8x1xf32>
    %74 = vector.broadcast %73 : vector<8x1xf32> to vector<8x8xf32>
    %75 = arith.mulf %70, %74 : vector<8x8xf32>
    %76 = vector.shape_cast %75 : vector<8x8xf32> to vector<8x8x1xf32>
    %77 = vector.broadcast %76 : vector<8x8x1xf32> to vector<8x8x32xf32>
    %78 = arith.mulf %77, %0 : vector<8x8x32xf32>
    %cst_39 = arith.constant dense<0.000000e+00> : vector<8x32xf32>
    %79 = vector.multi_reduction <add>, %78, %cst_39 [1] : vector<8x8x32xf32> to vector<8x32xf32>
    %cst_40 = arith.constant dense<0.000000e+00> : vector<8x1xf32>
    %80 = tpu.matmul %79, %5, %cst_40 {dimension_numbers = #tpu.dot_dimension_numbers<[1], [0], [0], [1], [0, 0, 1, 1], [], []>} : vector<8x32xf32>, vector<32x1xf32>, vector<8x1xf32> -> vector<8x1xf32>
    %81 = vector.extract_strided_slice %1 {offsets = [0, 0, 0], sizes = [1, 8, 1], strides = [1, 1, 1]} : vector<8x8x1xf32> to vector<1x8x1xf32>
    %82 = vector.shape_cast %81 : vector<1x8x1xf32> to vector<8x1xf32>
    %83 = arith.addf %80, %82 : vector<8x1xf32>
    %84 = vector.broadcast %83 : vector<8x1xf32> to vector<8x32xf32>
    %85 = vector.broadcast %20 : vector<1x32xf32> to vector<8x32xf32>
    %86 = arith.mulf %84, %85 : vector<8x32xf32>
    %cst_41 = arith.constant dense<0.000000e+00> : vector<8x32xf32>
    %87 = tpu.matmul %54, %28, %cst_41 {dimension_numbers = #tpu.dot_dimension_numbers<[1], [0], [0], [1], [0, 0, 1, 1], [], []>} : vector<8x32xf32>, vector<32x32xf32>, vector<8x32xf32> -> vector<8x32xf32>
    %88 = arith.addf %86, %87 : vector<8x32xf32>
    %89 = arith.addf %88, %38 : vector<8x32xf32>
    %90 = arith.negf %89 : vector<8x32xf32>
    %91 = math.exp %90 : vector<8x32xf32>
    %cst_42 = arith.constant 1.000000e+00 : f32
    %92 = vector.broadcast %cst_42 : f32 to vector<8x32xf32>
    %93 = arith.addf %92, %91 : vector<8x32xf32>
    %94 = arith.divf %92, %93 : vector<8x32xf32>
    %95 = vector.broadcast %83 : vector<8x1xf32> to vector<8x32xf32>
    %96 = vector.broadcast %22 : vector<1x32xf32> to vector<8x32xf32>
    %97 = arith.mulf %95, %96 : vector<8x32xf32>
    %cst_43 = arith.constant dense<0.000000e+00> : vector<8x32xf32>
    %98 = tpu.matmul %54, %30, %cst_43 {dimension_numbers = #tpu.dot_dimension_numbers<[1], [0], [0], [1], [0, 0, 1, 1], [], []>} : vector<8x32xf32>, vector<32x32xf32>, vector<8x32xf32> -> vector<8x32xf32>
    %99 = arith.addf %97, %98 : vector<8x32xf32>
    %100 = arith.addf %99, %42 : vector<8x32xf32>
    %101 = arith.negf %100 : vector<8x32xf32>
    %102 = math.exp %101 : vector<8x32xf32>
    %cst_44 = arith.constant 1.000000e+00 : f32
    %103 = vector.broadcast %cst_44 : f32 to vector<8x32xf32>
    %104 = arith.addf %103, %102 : vector<8x32xf32>
    %105 = arith.divf %103, %104 : vector<8x32xf32>
    %106 = vector.broadcast %83 : vector<8x1xf32> to vector<8x32xf32>
    %107 = vector.broadcast %24 : vector<1x32xf32> to vector<8x32xf32>
    %108 = arith.mulf %106, %107 : vector<8x32xf32>
    %cst_45 = arith.constant dense<0.000000e+00> : vector<8x32xf32>
    %109 = tpu.matmul %54, %32, %cst_45 {dimension_numbers = #tpu.dot_dimension_numbers<[1], [0], [0], [1], [0, 0, 1, 1], [], []>} : vector<8x32xf32>, vector<32x32xf32>, vector<8x32xf32> -> vector<8x32xf32>
    %110 = arith.addf %108, %109 : vector<8x32xf32>
    %111 = arith.addf %110, %46 : vector<8x32xf32>
    %112 = math.tanh %111 : vector<8x32xf32>
    %113 = vector.broadcast %83 : vector<8x1xf32> to vector<8x32xf32>
    %114 = vector.broadcast %26 : vector<1x32xf32> to vector<8x32xf32>
    %115 = arith.mulf %113, %114 : vector<8x32xf32>
    %cst_46 = arith.constant dense<0.000000e+00> : vector<8x32xf32>
    %116 = tpu.matmul %54, %34, %cst_46 {dimension_numbers = #tpu.dot_dimension_numbers<[1], [0], [0], [1], [0, 0, 1, 1], [], []>} : vector<8x32xf32>, vector<32x32xf32>, vector<8x32xf32> -> vector<8x32xf32>
    %117 = arith.addf %115, %116 : vector<8x32xf32>
    %118 = arith.addf %117, %50 : vector<8x32xf32>
    %119 = arith.negf %118 : vector<8x32xf32>
    %120 = math.exp %119 : vector<8x32xf32>
    %cst_47 = arith.constant 1.000000e+00 : f32
    %121 = vector.broadcast %cst_47 : f32 to vector<8x32xf32>
    %122 = arith.addf %121, %120 : vector<8x32xf32>
    %123 = arith.divf %121, %122 : vector<8x32xf32>
    %124 = arith.mulf %105, %55 : vector<8x32xf32>
    %125 = arith.mulf %94, %112 : vector<8x32xf32>
    %126 = arith.addf %124, %125 : vector<8x32xf32>
    %127 = math.tanh %126 : vector<8x32xf32>
    %128 = arith.mulf %123, %127 : vector<8x32xf32>
    %cst_48 = arith.constant dense<0.000000e+00> : vector<8x32xf32>
    %129 = tpu.matmul %128, %2, %cst_48 {dimension_numbers = #tpu.dot_dimension_numbers<[1], [0], [0], [1], [0, 0, 1, 1], [], []>} : vector<8x32xf32>, vector<32x32xf32>, vector<8x32xf32> -> vector<8x32xf32>
    %cst_49 = arith.constant dense<0.000000e+00> : vector<8x32xf32>
    %130 = tpu.matmul %126, %3, %cst_49 {dimension_numbers = #tpu.dot_dimension_numbers<[1], [0], [0], [1], [0, 0, 1, 1], [], []>} : vector<8x32xf32>, vector<32x32xf32>, vector<8x32xf32> -> vector<8x32xf32>
    %131 = arith.addf %129, %130 : vector<8x32xf32>
    %132 = arith.addf %131, %14 : vector<8x32xf32>
    %133 = vector.shape_cast %132 : vector<8x32xf32> to vector<8x1x32xf32>
    %134 = vector.broadcast %133 : vector<8x1x32xf32> to vector<8x8x32xf32>
    %135 = arith.addf %53, %134 : vector<8x8x32xf32>
    %136 = math.tanh %135 : vector<8x8x32xf32>
    %137 = arith.mulf %136, %18 : vector<8x8x32xf32>
    %cst_50 = arith.constant dense<0.000000e+00> : vector<8x8xf32>
    %138 = vector.multi_reduction <add>, %137, %cst_50 [2] : vector<8x8x32xf32> to vector<8x8xf32>
    %cst_51 = arith.constant dense<0xFF800000> : vector<8xf32>
    %139 = vector.multi_reduction <maximumf>, %138, %cst_51 [1] : vector<8x8xf32> to vector<8xf32>
    %140 = vector.shape_cast %139 : vector<8xf32> to vector<8x1xf32>
    %141 = vector.broadcast %140 : vector<8x1xf32> to vector<8x8xf32>
    %142 = arith.subf %138, %141 : vector<8x8xf32>
    %143 = math.exp %142 : vector<8x8xf32>
    %cst_52 = arith.constant dense<0.000000e+00> : vector<8xf32>
    %144 = vector.multi_reduction <add>, %143, %cst_52 [1] : vector<8x8xf32> to vector<8xf32>
    %145 = vector.shape_cast %144 : vector<8xf32> to vector<8x1xf32>
    %146 = tpu.reciprocal %145 {approx = true} : vector<8x1xf32> -> vector<8x1xf32>
    %147 = vector.broadcast %146 : vector<8x1xf32> to vector<8x8xf32>
    %148 = arith.mulf %143, %147 : vector<8x8xf32>
    %149 = vector.shape_cast %148 : vector<8x8xf32> to vector<8x8x1xf32>
    %150 = vector.broadcast %149 : vector<8x8x1xf32> to vector<8x8x32xf32>
    %151 = arith.mulf %150, %0 : vector<8x8x32xf32>
    %cst_53 = arith.constant dense<0.000000e+00> : vector<8x32xf32>
    %152 = vector.multi_reduction <add>, %151, %cst_53 [1] : vector<8x8x32xf32> to vector<8x32xf32>
    %cst_54 = arith.constant dense<0.000000e+00> : vector<8x1xf32>
    %153 = tpu.matmul %152, %5, %cst_54 {dimension_numbers = #tpu.dot_dimension_numbers<[1], [0], [0], [1], [0, 0, 1, 1], [], []>} : vector<8x32xf32>, vector<32x1xf32>, vector<8x1xf32> -> vector<8x1xf32>
    %154 = vector.extract_strided_slice %1 {offsets = [1, 0, 0], sizes = [1, 8, 1], strides = [1, 1, 1]} : vector<8x8x1xf32> to vector<1x8x1xf32>
    %155 = vector.shape_cast %154 : vector<1x8x1xf32> to vector<8x1xf32>
    %156 = arith.addf %153, %155 : vector<8x1xf32>
    %157 = vector.broadcast %156 : vector<8x1xf32> to vector<8x32xf32>
    %158 = vector.broadcast %20 : vector<1x32xf32> to vector<8x32xf32>
    %159 = arith.mulf %157, %158 : vector<8x32xf32>
    %cst_55 = arith.constant dense<0.000000e+00> : vector<8x32xf32>
    %160 = tpu.matmul %128, %28, %cst_55 {dimension_numbers = #tpu.dot_dimension_numbers<[1], [0], [0], [1], [0, 0, 1, 1], [], []>} : vector<8x32xf32>, vector<32x32xf32>, vector<8x32xf32> -> vector<8x32xf32>
    %161 = arith.addf %159, %160 : vector<8x32xf32>
    %162 = arith.addf %161, %38 : vector<8x32xf32>
    %163 = arith.negf %162 : vector<8x32xf32>
    %164 = math.exp %163 : vector<8x32xf32>
    %cst_56 = arith.constant 1.000000e+00 : f32
    %165 = vector.broadcast %cst_56 : f32 to vector<8x32xf32>
    %166 = arith.addf %165, %164 : vector<8x32xf32>
    %167 = arith.divf %165, %166 : vector<8x32xf32>
    %168 = vector.broadcast %156 : vector<8x1xf32> to vector<8x32xf32>
    %169 = vector.broadcast %22 : vector<1x32xf32> to vector<8x32xf32>
    %170 = arith.mulf %168, %169 : vector<8x32xf32>
    %cst_57 = arith.constant dense<0.000000e+00> : vector<8x32xf32>
    %171 = tpu.matmul %128, %30, %cst_57 {dimension_numbers = #tpu.dot_dimension_numbers<[1], [0], [0], [1], [0, 0, 1, 1], [], []>} : vector<8x32xf32>, vector<32x32xf32>, vector<8x32xf32> -> vector<8x32xf32>
    %172 = arith.addf %170, %171 : vector<8x32xf32>
    %173 = arith.addf %172, %42 : vector<8x32xf32>
    %174 = arith.negf %173 : vector<8x32xf32>
    %175 = math.exp %174 : vector<8x32xf32>
    %cst_58 = arith.constant 1.000000e+00 : f32
    %176 = vector.broadcast %cst_58 : f32 to vector<8x32xf32>
    %177 = arith.addf %176, %175 : vector<8x32xf32>
    %178 = arith.divf %176, %177 : vector<8x32xf32>
    %179 = vector.broadcast %156 : vector<8x1xf32> to vector<8x32xf32>
    %180 = vector.broadcast %24 : vector<1x32xf32> to vector<8x32xf32>
    %181 = arith.mulf %179, %180 : vector<8x32xf32>
    %cst_59 = arith.constant dense<0.000000e+00> : vector<8x32xf32>
    %182 = tpu.matmul %128, %32, %cst_59 {dimension_numbers = #tpu.dot_dimension_numbers<[1], [0], [0], [1], [0, 0, 1, 1], [], []>} : vector<8x32xf32>, vector<32x32xf32>, vector<8x32xf32> -> vector<8x32xf32>
    %183 = arith.addf %181, %182 : vector<8x32xf32>
    %184 = arith.addf %183, %46 : vector<8x32xf32>
    %185 = math.tanh %184 : vector<8x32xf32>
    %186 = vector.broadcast %156 : vector<8x1xf32> to vector<8x32xf32>
    %187 = vector.broadcast %26 : vector<1x32xf32> to vector<8x32xf32>
    %188 = arith.mulf %186, %187 : vector<8x32xf32>
    %cst_60 = arith.constant dense<0.000000e+00> : vector<8x32xf32>
    %189 = tpu.matmul %128, %34, %cst_60 {dimension_numbers = #tpu.dot_dimension_numbers<[1], [0], [0], [1], [0, 0, 1, 1], [], []>} : vector<8x32xf32>, vector<32x32xf32>, vector<8x32xf32> -> vector<8x32xf32>
    %190 = arith.addf %188, %189 : vector<8x32xf32>
    %191 = arith.addf %190, %50 : vector<8x32xf32>
    %192 = arith.negf %191 : vector<8x32xf32>
    %193 = math.exp %192 : vector<8x32xf32>
    %cst_61 = arith.constant 1.000000e+00 : f32
    %194 = vector.broadcast %cst_61 : f32 to vector<8x32xf32>
    %195 = arith.addf %194, %193 : vector<8x32xf32>
    %196 = arith.divf %194, %195 : vector<8x32xf32>
    %197 = arith.mulf %178, %126 : vector<8x32xf32>
    %198 = arith.mulf %167, %185 : vector<8x32xf32>
    %199 = arith.addf %197, %198 : vector<8x32xf32>
    %200 = math.tanh %199 : vector<8x32xf32>
    %201 = arith.mulf %196, %200 : vector<8x32xf32>
    %cst_62 = arith.constant dense<0.000000e+00> : vector<8x32xf32>
    %202 = tpu.matmul %201, %2, %cst_62 {dimension_numbers = #tpu.dot_dimension_numbers<[1], [0], [0], [1], [0, 0, 1, 1], [], []>} : vector<8x32xf32>, vector<32x32xf32>, vector<8x32xf32> -> vector<8x32xf32>
    %cst_63 = arith.constant dense<0.000000e+00> : vector<8x32xf32>
    %203 = tpu.matmul %199, %3, %cst_63 {dimension_numbers = #tpu.dot_dimension_numbers<[1], [0], [0], [1], [0, 0, 1, 1], [], []>} : vector<8x32xf32>, vector<32x32xf32>, vector<8x32xf32> -> vector<8x32xf32>
    %204 = arith.addf %202, %203 : vector<8x32xf32>
    %205 = arith.addf %204, %14 : vector<8x32xf32>
    %206 = vector.shape_cast %205 : vector<8x32xf32> to vector<8x1x32xf32>
    %207 = vector.broadcast %206 : vector<8x1x32xf32> to vector<8x8x32xf32>
    %208 = arith.addf %53, %207 : vector<8x8x32xf32>
    %209 = math.tanh %208 : vector<8x8x32xf32>
    %210 = arith.mulf %209, %18 : vector<8x8x32xf32>
    %cst_64 = arith.constant dense<0.000000e+00> : vector<8x8xf32>
    %211 = vector.multi_reduction <add>, %210, %cst_64 [2] : vector<8x8x32xf32> to vector<8x8xf32>
    %cst_65 = arith.constant dense<0xFF800000> : vector<8xf32>
    %212 = vector.multi_reduction <maximumf>, %211, %cst_65 [1] : vector<8x8xf32> to vector<8xf32>
    %213 = vector.shape_cast %212 : vector<8xf32> to vector<8x1xf32>
    %214 = vector.broadcast %213 : vector<8x1xf32> to vector<8x8xf32>
    %215 = arith.subf %211, %214 : vector<8x8xf32>
    %216 = math.exp %215 : vector<8x8xf32>
    %cst_66 = arith.constant dense<0.000000e+00> : vector<8xf32>
    %217 = vector.multi_reduction <add>, %216, %cst_66 [1] : vector<8x8xf32> to vector<8xf32>
    %218 = vector.shape_cast %217 : vector<8xf32> to vector<8x1xf32>
    %219 = tpu.reciprocal %218 {approx = true} : vector<8x1xf32> -> vector<8x1xf32>
    %220 = vector.broadcast %219 : vector<8x1xf32> to vector<8x8xf32>
    %221 = arith.mulf %216, %220 : vector<8x8xf32>
    %222 = vector.shape_cast %221 : vector<8x8xf32> to vector<8x8x1xf32>
    %223 = vector.broadcast %222 : vector<8x8x1xf32> to vector<8x8x32xf32>
    %224 = arith.mulf %223, %0 : vector<8x8x32xf32>
    %cst_67 = arith.constant dense<0.000000e+00> : vector<8x32xf32>
    %225 = vector.multi_reduction <add>, %224, %cst_67 [1] : vector<8x8x32xf32> to vector<8x32xf32>
    %cst_68 = arith.constant dense<0.000000e+00> : vector<8x1xf32>
    %226 = tpu.matmul %225, %5, %cst_68 {dimension_numbers = #tpu.dot_dimension_numbers<[1], [0], [0], [1], [0, 0, 1, 1], [], []>} : vector<8x32xf32>, vector<32x1xf32>, vector<8x1xf32> -> vector<8x1xf32>
    %227 = vector.extract_strided_slice %1 {offsets = [2, 0, 0], sizes = [1, 8, 1], strides = [1, 1, 1]} : vector<8x8x1xf32> to vector<1x8x1xf32>
    %228 = vector.shape_cast %227 : vector<1x8x1xf32> to vector<8x1xf32>
    %229 = arith.addf %226, %228 : vector<8x1xf32>
    %230 = vector.broadcast %229 : vector<8x1xf32> to vector<8x32xf32>
    %231 = vector.broadcast %20 : vector<1x32xf32> to vector<8x32xf32>
    %232 = arith.mulf %230, %231 : vector<8x32xf32>
    %cst_69 = arith.constant dense<0.000000e+00> : vector<8x32xf32>
    %233 = tpu.matmul %201, %28, %cst_69 {dimension_numbers = #tpu.dot_dimension_numbers<[1], [0], [0], [1], [0, 0, 1, 1], [], []>} : vector<8x32xf32>, vector<32x32xf32>, vector<8x32xf32> -> vector<8x32xf32>
    %234 = arith.addf %232, %233 : vector<8x32xf32>
    %235 = arith.addf %234, %38 : vector<8x32xf32>
    %236 = arith.negf %235 : vector<8x32xf32>
    %237 = math.exp %236 : vector<8x32xf32>
    %cst_70 = arith.constant 1.000000e+00 : f32
    %238 = vector.broadcast %cst_70 : f32 to vector<8x32xf32>
    %239 = arith.addf %238, %237 : vector<8x32xf32>
    %240 = arith.divf %238, %239 : vector<8x32xf32>
    %241 = vector.broadcast %229 : vector<8x1xf32> to vector<8x32xf32>
    %242 = vector.broadcast %22 : vector<1x32xf32> to vector<8x32xf32>
    %243 = arith.mulf %241, %242 : vector<8x32xf32>
    %cst_71 = arith.constant dense<0.000000e+00> : vector<8x32xf32>
    %244 = tpu.matmul %201, %30, %cst_71 {dimension_numbers = #tpu.dot_dimension_numbers<[1], [0], [0], [1], [0, 0, 1, 1], [], []>} : vector<8x32xf32>, vector<32x32xf32>, vector<8x32xf32> -> vector<8x32xf32>
    %245 = arith.addf %243, %244 : vector<8x32xf32>
    %246 = arith.addf %245, %42 : vector<8x32xf32>
    %247 = arith.negf %246 : vector<8x32xf32>
    %248 = math.exp %247 : vector<8x32xf32>
    %cst_72 = arith.constant 1.000000e+00 : f32
    %249 = vector.broadcast %cst_72 : f32 to vector<8x32xf32>
    %250 = arith.addf %249, %248 : vector<8x32xf32>
    %251 = arith.divf %249, %250 : vector<8x32xf32>
    %252 = vector.broadcast %229 : vector<8x1xf32> to vector<8x32xf32>
    %253 = vector.broadcast %24 : vector<1x32xf32> to vector<8x32xf32>
    %254 = arith.mulf %252, %253 : vector<8x32xf32>
    %cst_73 = arith.constant dense<0.000000e+00> : vector<8x32xf32>
    %255 = tpu.matmul %201, %32, %cst_73 {dimension_numbers = #tpu.dot_dimension_numbers<[1], [0], [0], [1], [0, 0, 1, 1], [], []>} : vector<8x32xf32>, vector<32x32xf32>, vector<8x32xf32> -> vector<8x32xf32>
    %256 = arith.addf %254, %255 : vector<8x32xf32>
    %257 = arith.addf %256, %46 : vector<8x32xf32>
    %258 = math.tanh %257 : vector<8x32xf32>
    %259 = vector.broadcast %229 : vector<8x1xf32> to vector<8x32xf32>
    %260 = vector.broadcast %26 : vector<1x32xf32> to vector<8x32xf32>
    %261 = arith.mulf %259, %260 : vector<8x32xf32>
    %cst_74 = arith.constant dense<0.000000e+00> : vector<8x32xf32>
    %262 = tpu.matmul %201, %34, %cst_74 {dimension_numbers = #tpu.dot_dimension_numbers<[1], [0], [0], [1], [0, 0, 1, 1], [], []>} : vector<8x32xf32>, vector<32x32xf32>, vector<8x32xf32> -> vector<8x32xf32>
    %263 = arith.addf %261, %262 : vector<8x32xf32>
    %264 = arith.addf %263, %50 : vector<8x32xf32>
    %265 = arith.negf %264 : vector<8x32xf32>
    %266 = math.exp %265 : vector<8x32xf32>
    %cst_75 = arith.constant 1.000000e+00 : f32
    %267 = vector.broadcast %cst_75 : f32 to vector<8x32xf32>
    %268 = arith.addf %267, %266 : vector<8x32xf32>
    %269 = arith.divf %267, %268 : vector<8x32xf32>
    %270 = arith.mulf %251, %199 : vector<8x32xf32>
    %271 = arith.mulf %240, %258 : vector<8x32xf32>
    %272 = arith.addf %270, %271 : vector<8x32xf32>
    %273 = math.tanh %272 : vector<8x32xf32>
    %274 = arith.mulf %269, %273 : vector<8x32xf32>
    %cst_76 = arith.constant dense<0.000000e+00> : vector<8x32xf32>
    %275 = tpu.matmul %274, %2, %cst_76 {dimension_numbers = #tpu.dot_dimension_numbers<[1], [0], [0], [1], [0, 0, 1, 1], [], []>} : vector<8x32xf32>, vector<32x32xf32>, vector<8x32xf32> -> vector<8x32xf32>
    %cst_77 = arith.constant dense<0.000000e+00> : vector<8x32xf32>
    %276 = tpu.matmul %272, %3, %cst_77 {dimension_numbers = #tpu.dot_dimension_numbers<[1], [0], [0], [1], [0, 0, 1, 1], [], []>} : vector<8x32xf32>, vector<32x32xf32>, vector<8x32xf32> -> vector<8x32xf32>
    %277 = arith.addf %275, %276 : vector<8x32xf32>
    %278 = arith.addf %277, %14 : vector<8x32xf32>
    %279 = vector.shape_cast %278 : vector<8x32xf32> to vector<8x1x32xf32>
    %280 = vector.broadcast %279 : vector<8x1x32xf32> to vector<8x8x32xf32>
    %281 = arith.addf %53, %280 : vector<8x8x32xf32>
    %282 = math.tanh %281 : vector<8x8x32xf32>
    %283 = arith.mulf %282, %18 : vector<8x8x32xf32>
    %cst_78 = arith.constant dense<0.000000e+00> : vector<8x8xf32>
    %284 = vector.multi_reduction <add>, %283, %cst_78 [2] : vector<8x8x32xf32> to vector<8x8xf32>
    %cst_79 = arith.constant dense<0xFF800000> : vector<8xf32>
    %285 = vector.multi_reduction <maximumf>, %284, %cst_79 [1] : vector<8x8xf32> to vector<8xf32>
    %286 = vector.shape_cast %285 : vector<8xf32> to vector<8x1xf32>
    %287 = vector.broadcast %286 : vector<8x1xf32> to vector<8x8xf32>
    %288 = arith.subf %284, %287 : vector<8x8xf32>
    %289 = math.exp %288 : vector<8x8xf32>
    %cst_80 = arith.constant dense<0.000000e+00> : vector<8xf32>
    %290 = vector.multi_reduction <add>, %289, %cst_80 [1] : vector<8x8xf32> to vector<8xf32>
    %291 = vector.shape_cast %290 : vector<8xf32> to vector<8x1xf32>
    %292 = tpu.reciprocal %291 {approx = true} : vector<8x1xf32> -> vector<8x1xf32>
    %293 = vector.broadcast %292 : vector<8x1xf32> to vector<8x8xf32>
    %294 = arith.mulf %289, %293 : vector<8x8xf32>
    %295 = vector.shape_cast %294 : vector<8x8xf32> to vector<8x8x1xf32>
    %296 = vector.broadcast %295 : vector<8x8x1xf32> to vector<8x8x32xf32>
    %297 = arith.mulf %296, %0 : vector<8x8x32xf32>
    %cst_81 = arith.constant dense<0.000000e+00> : vector<8x32xf32>
    %298 = vector.multi_reduction <add>, %297, %cst_81 [1] : vector<8x8x32xf32> to vector<8x32xf32>
    %cst_82 = arith.constant dense<0.000000e+00> : vector<8x1xf32>
    %299 = tpu.matmul %298, %5, %cst_82 {dimension_numbers = #tpu.dot_dimension_numbers<[1], [0], [0], [1], [0, 0, 1, 1], [], []>} : vector<8x32xf32>, vector<32x1xf32>, vector<8x1xf32> -> vector<8x1xf32>
    %300 = vector.extract_strided_slice %1 {offsets = [3, 0, 0], sizes = [1, 8, 1], strides = [1, 1, 1]} : vector<8x8x1xf32> to vector<1x8x1xf32>
    %301 = vector.shape_cast %300 : vector<1x8x1xf32> to vector<8x1xf32>
    %302 = arith.addf %299, %301 : vector<8x1xf32>
    %303 = vector.broadcast %302 : vector<8x1xf32> to vector<8x32xf32>
    %304 = vector.broadcast %20 : vector<1x32xf32> to vector<8x32xf32>
    %305 = arith.mulf %303, %304 : vector<8x32xf32>
    %cst_83 = arith.constant dense<0.000000e+00> : vector<8x32xf32>
    %306 = tpu.matmul %274, %28, %cst_83 {dimension_numbers = #tpu.dot_dimension_numbers<[1], [0], [0], [1], [0, 0, 1, 1], [], []>} : vector<8x32xf32>, vector<32x32xf32>, vector<8x32xf32> -> vector<8x32xf32>
    %307 = arith.addf %305, %306 : vector<8x32xf32>
    %308 = arith.addf %307, %38 : vector<8x32xf32>
    %309 = arith.negf %308 : vector<8x32xf32>
    %310 = math.exp %309 : vector<8x32xf32>
    %cst_84 = arith.constant 1.000000e+00 : f32
    %311 = vector.broadcast %cst_84 : f32 to vector<8x32xf32>
    %312 = arith.addf %311, %310 : vector<8x32xf32>
    %313 = arith.divf %311, %312 : vector<8x32xf32>
    %314 = vector.broadcast %302 : vector<8x1xf32> to vector<8x32xf32>
    %315 = vector.broadcast %22 : vector<1x32xf32> to vector<8x32xf32>
    %316 = arith.mulf %314, %315 : vector<8x32xf32>
    %cst_85 = arith.constant dense<0.000000e+00> : vector<8x32xf32>
    %317 = tpu.matmul %274, %30, %cst_85 {dimension_numbers = #tpu.dot_dimension_numbers<[1], [0], [0], [1], [0, 0, 1, 1], [], []>} : vector<8x32xf32>, vector<32x32xf32>, vector<8x32xf32> -> vector<8x32xf32>
    %318 = arith.addf %316, %317 : vector<8x32xf32>
    %319 = arith.addf %318, %42 : vector<8x32xf32>
    %320 = arith.negf %319 : vector<8x32xf32>
    %321 = math.exp %320 : vector<8x32xf32>
    %cst_86 = arith.constant 1.000000e+00 : f32
    %322 = vector.broadcast %cst_86 : f32 to vector<8x32xf32>
    %323 = arith.addf %322, %321 : vector<8x32xf32>
    %324 = arith.divf %322, %323 : vector<8x32xf32>
    %325 = vector.broadcast %302 : vector<8x1xf32> to vector<8x32xf32>
    %326 = vector.broadcast %24 : vector<1x32xf32> to vector<8x32xf32>
    %327 = arith.mulf %325, %326 : vector<8x32xf32>
    %cst_87 = arith.constant dense<0.000000e+00> : vector<8x32xf32>
    %328 = tpu.matmul %274, %32, %cst_87 {dimension_numbers = #tpu.dot_dimension_numbers<[1], [0], [0], [1], [0, 0, 1, 1], [], []>} : vector<8x32xf32>, vector<32x32xf32>, vector<8x32xf32> -> vector<8x32xf32>
    %329 = arith.addf %327, %328 : vector<8x32xf32>
    %330 = arith.addf %329, %46 : vector<8x32xf32>
    %331 = math.tanh %330 : vector<8x32xf32>
    %332 = vector.broadcast %302 : vector<8x1xf32> to vector<8x32xf32>
    %333 = vector.broadcast %26 : vector<1x32xf32> to vector<8x32xf32>
    %334 = arith.mulf %332, %333 : vector<8x32xf32>
    %cst_88 = arith.constant dense<0.000000e+00> : vector<8x32xf32>
    %335 = tpu.matmul %274, %34, %cst_88 {dimension_numbers = #tpu.dot_dimension_numbers<[1], [0], [0], [1], [0, 0, 1, 1], [], []>} : vector<8x32xf32>, vector<32x32xf32>, vector<8x32xf32> -> vector<8x32xf32>
    %336 = arith.addf %334, %335 : vector<8x32xf32>
    %337 = arith.addf %336, %50 : vector<8x32xf32>
    %338 = arith.negf %337 : vector<8x32xf32>
    %339 = math.exp %338 : vector<8x32xf32>
    %cst_89 = arith.constant 1.000000e+00 : f32
    %340 = vector.broadcast %cst_89 : f32 to vector<8x32xf32>
    %341 = arith.addf %340, %339 : vector<8x32xf32>
    %342 = arith.divf %340, %341 : vector<8x32xf32>
    %343 = arith.mulf %324, %272 : vector<8x32xf32>
    %344 = arith.mulf %313, %331 : vector<8x32xf32>
    %345 = arith.addf %343, %344 : vector<8x32xf32>
    %346 = math.tanh %345 : vector<8x32xf32>
    %347 = arith.mulf %342, %346 : vector<8x32xf32>
    %cst_90 = arith.constant dense<0.000000e+00> : vector<8x32xf32>
    %348 = tpu.matmul %347, %2, %cst_90 {dimension_numbers = #tpu.dot_dimension_numbers<[1], [0], [0], [1], [0, 0, 1, 1], [], []>} : vector<8x32xf32>, vector<32x32xf32>, vector<8x32xf32> -> vector<8x32xf32>
    %cst_91 = arith.constant dense<0.000000e+00> : vector<8x32xf32>
    %349 = tpu.matmul %345, %3, %cst_91 {dimension_numbers = #tpu.dot_dimension_numbers<[1], [0], [0], [1], [0, 0, 1, 1], [], []>} : vector<8x32xf32>, vector<32x32xf32>, vector<8x32xf32> -> vector<8x32xf32>
    %350 = arith.addf %348, %349 : vector<8x32xf32>
    %351 = arith.addf %350, %14 : vector<8x32xf32>
    %352 = vector.shape_cast %351 : vector<8x32xf32> to vector<8x1x32xf32>
    %353 = vector.broadcast %352 : vector<8x1x32xf32> to vector<8x8x32xf32>
    %354 = arith.addf %53, %353 : vector<8x8x32xf32>
    %355 = math.tanh %354 : vector<8x8x32xf32>
    %356 = arith.mulf %355, %18 : vector<8x8x32xf32>
    %cst_92 = arith.constant dense<0.000000e+00> : vector<8x8xf32>
    %357 = vector.multi_reduction <add>, %356, %cst_92 [2] : vector<8x8x32xf32> to vector<8x8xf32>
    %cst_93 = arith.constant dense<0xFF800000> : vector<8xf32>
    %358 = vector.multi_reduction <maximumf>, %357, %cst_93 [1] : vector<8x8xf32> to vector<8xf32>
    %359 = vector.shape_cast %358 : vector<8xf32> to vector<8x1xf32>
    %360 = vector.broadcast %359 : vector<8x1xf32> to vector<8x8xf32>
    %361 = arith.subf %357, %360 : vector<8x8xf32>
    %362 = math.exp %361 : vector<8x8xf32>
    %cst_94 = arith.constant dense<0.000000e+00> : vector<8xf32>
    %363 = vector.multi_reduction <add>, %362, %cst_94 [1] : vector<8x8xf32> to vector<8xf32>
    %364 = vector.shape_cast %363 : vector<8xf32> to vector<8x1xf32>
    %365 = tpu.reciprocal %364 {approx = true} : vector<8x1xf32> -> vector<8x1xf32>
    %366 = vector.broadcast %365 : vector<8x1xf32> to vector<8x8xf32>
    %367 = arith.mulf %362, %366 : vector<8x8xf32>
    %368 = vector.shape_cast %367 : vector<8x8xf32> to vector<8x8x1xf32>
    %369 = vector.broadcast %368 : vector<8x8x1xf32> to vector<8x8x32xf32>
    %370 = arith.mulf %369, %0 : vector<8x8x32xf32>
    %cst_95 = arith.constant dense<0.000000e+00> : vector<8x32xf32>
    %371 = vector.multi_reduction <add>, %370, %cst_95 [1] : vector<8x8x32xf32> to vector<8x32xf32>
    %cst_96 = arith.constant dense<0.000000e+00> : vector<8x1xf32>
    %372 = tpu.matmul %371, %5, %cst_96 {dimension_numbers = #tpu.dot_dimension_numbers<[1], [0], [0], [1], [0, 0, 1, 1], [], []>} : vector<8x32xf32>, vector<32x1xf32>, vector<8x1xf32> -> vector<8x1xf32>
    %373 = vector.extract_strided_slice %1 {offsets = [4, 0, 0], sizes = [1, 8, 1], strides = [1, 1, 1]} : vector<8x8x1xf32> to vector<1x8x1xf32>
    %374 = vector.shape_cast %373 : vector<1x8x1xf32> to vector<8x1xf32>
    %375 = arith.addf %372, %374 : vector<8x1xf32>
    %376 = vector.broadcast %375 : vector<8x1xf32> to vector<8x32xf32>
    %377 = vector.broadcast %20 : vector<1x32xf32> to vector<8x32xf32>
    %378 = arith.mulf %376, %377 : vector<8x32xf32>
    %cst_97 = arith.constant dense<0.000000e+00> : vector<8x32xf32>
    %379 = tpu.matmul %347, %28, %cst_97 {dimension_numbers = #tpu.dot_dimension_numbers<[1], [0], [0], [1], [0, 0, 1, 1], [], []>} : vector<8x32xf32>, vector<32x32xf32>, vector<8x32xf32> -> vector<8x32xf32>
    %380 = arith.addf %378, %379 : vector<8x32xf32>
    %381 = arith.addf %380, %38 : vector<8x32xf32>
    %382 = arith.negf %381 : vector<8x32xf32>
    %383 = math.exp %382 : vector<8x32xf32>
    %cst_98 = arith.constant 1.000000e+00 : f32
    %384 = vector.broadcast %cst_98 : f32 to vector<8x32xf32>
    %385 = arith.addf %384, %383 : vector<8x32xf32>
    %386 = arith.divf %384, %385 : vector<8x32xf32>
    %387 = vector.broadcast %375 : vector<8x1xf32> to vector<8x32xf32>
    %388 = vector.broadcast %22 : vector<1x32xf32> to vector<8x32xf32>
    %389 = arith.mulf %387, %388 : vector<8x32xf32>
    %cst_99 = arith.constant dense<0.000000e+00> : vector<8x32xf32>
    %390 = tpu.matmul %347, %30, %cst_99 {dimension_numbers = #tpu.dot_dimension_numbers<[1], [0], [0], [1], [0, 0, 1, 1], [], []>} : vector<8x32xf32>, vector<32x32xf32>, vector<8x32xf32> -> vector<8x32xf32>
    %391 = arith.addf %389, %390 : vector<8x32xf32>
    %392 = arith.addf %391, %42 : vector<8x32xf32>
    %393 = arith.negf %392 : vector<8x32xf32>
    %394 = math.exp %393 : vector<8x32xf32>
    %cst_100 = arith.constant 1.000000e+00 : f32
    %395 = vector.broadcast %cst_100 : f32 to vector<8x32xf32>
    %396 = arith.addf %395, %394 : vector<8x32xf32>
    %397 = arith.divf %395, %396 : vector<8x32xf32>
    %398 = vector.broadcast %375 : vector<8x1xf32> to vector<8x32xf32>
    %399 = vector.broadcast %24 : vector<1x32xf32> to vector<8x32xf32>
    %400 = arith.mulf %398, %399 : vector<8x32xf32>
    %cst_101 = arith.constant dense<0.000000e+00> : vector<8x32xf32>
    %401 = tpu.matmul %347, %32, %cst_101 {dimension_numbers = #tpu.dot_dimension_numbers<[1], [0], [0], [1], [0, 0, 1, 1], [], []>} : vector<8x32xf32>, vector<32x32xf32>, vector<8x32xf32> -> vector<8x32xf32>
    %402 = arith.addf %400, %401 : vector<8x32xf32>
    %403 = arith.addf %402, %46 : vector<8x32xf32>
    %404 = math.tanh %403 : vector<8x32xf32>
    %405 = vector.broadcast %375 : vector<8x1xf32> to vector<8x32xf32>
    %406 = vector.broadcast %26 : vector<1x32xf32> to vector<8x32xf32>
    %407 = arith.mulf %405, %406 : vector<8x32xf32>
    %cst_102 = arith.constant dense<0.000000e+00> : vector<8x32xf32>
    %408 = tpu.matmul %347, %34, %cst_102 {dimension_numbers = #tpu.dot_dimension_numbers<[1], [0], [0], [1], [0, 0, 1, 1], [], []>} : vector<8x32xf32>, vector<32x32xf32>, vector<8x32xf32> -> vector<8x32xf32>
    %409 = arith.addf %407, %408 : vector<8x32xf32>
    %410 = arith.addf %409, %50 : vector<8x32xf32>
    %411 = arith.negf %410 : vector<8x32xf32>
    %412 = math.exp %411 : vector<8x32xf32>
    %cst_103 = arith.constant 1.000000e+00 : f32
    %413 = vector.broadcast %cst_103 : f32 to vector<8x32xf32>
    %414 = arith.addf %413, %412 : vector<8x32xf32>
    %415 = arith.divf %413, %414 : vector<8x32xf32>
    %416 = arith.mulf %397, %345 : vector<8x32xf32>
    %417 = arith.mulf %386, %404 : vector<8x32xf32>
    %418 = arith.addf %416, %417 : vector<8x32xf32>
    %419 = math.tanh %418 : vector<8x32xf32>
    %420 = arith.mulf %415, %419 : vector<8x32xf32>
    %cst_104 = arith.constant dense<0.000000e+00> : vector<8x32xf32>
    %421 = tpu.matmul %420, %2, %cst_104 {dimension_numbers = #tpu.dot_dimension_numbers<[1], [0], [0], [1], [0, 0, 1, 1], [], []>} : vector<8x32xf32>, vector<32x32xf32>, vector<8x32xf32> -> vector<8x32xf32>
    %cst_105 = arith.constant dense<0.000000e+00> : vector<8x32xf32>
    %422 = tpu.matmul %418, %3, %cst_105 {dimension_numbers = #tpu.dot_dimension_numbers<[1], [0], [0], [1], [0, 0, 1, 1], [], []>} : vector<8x32xf32>, vector<32x32xf32>, vector<8x32xf32> -> vector<8x32xf32>
    %423 = arith.addf %421, %422 : vector<8x32xf32>
    %424 = arith.addf %423, %14 : vector<8x32xf32>
    %425 = vector.shape_cast %424 : vector<8x32xf32> to vector<8x1x32xf32>
    %426 = vector.broadcast %425 : vector<8x1x32xf32> to vector<8x8x32xf32>
    %427 = arith.addf %53, %426 : vector<8x8x32xf32>
    %428 = math.tanh %427 : vector<8x8x32xf32>
    %429 = arith.mulf %428, %18 : vector<8x8x32xf32>
    %cst_106 = arith.constant dense<0.000000e+00> : vector<8x8xf32>
    %430 = vector.multi_reduction <add>, %429, %cst_106 [2] : vector<8x8x32xf32> to vector<8x8xf32>
    %cst_107 = arith.constant dense<0xFF800000> : vector<8xf32>
    %431 = vector.multi_reduction <maximumf>, %430, %cst_107 [1] : vector<8x8xf32> to vector<8xf32>
    %432 = vector.shape_cast %431 : vector<8xf32> to vector<8x1xf32>
    %433 = vector.broadcast %432 : vector<8x1xf32> to vector<8x8xf32>
    %434 = arith.subf %430, %433 : vector<8x8xf32>
    %435 = math.exp %434 : vector<8x8xf32>
    %cst_108 = arith.constant dense<0.000000e+00> : vector<8xf32>
    %436 = vector.multi_reduction <add>, %435, %cst_108 [1] : vector<8x8xf32> to vector<8xf32>
    %437 = vector.shape_cast %436 : vector<8xf32> to vector<8x1xf32>
    %438 = tpu.reciprocal %437 {approx = true} : vector<8x1xf32> -> vector<8x1xf32>
    %439 = vector.broadcast %438 : vector<8x1xf32> to vector<8x8xf32>
    %440 = arith.mulf %435, %439 : vector<8x8xf32>
    %441 = vector.shape_cast %440 : vector<8x8xf32> to vector<8x8x1xf32>
    %442 = vector.broadcast %441 : vector<8x8x1xf32> to vector<8x8x32xf32>
    %443 = arith.mulf %442, %0 : vector<8x8x32xf32>
    %cst_109 = arith.constant dense<0.000000e+00> : vector<8x32xf32>
    %444 = vector.multi_reduction <add>, %443, %cst_109 [1] : vector<8x8x32xf32> to vector<8x32xf32>
    %cst_110 = arith.constant dense<0.000000e+00> : vector<8x1xf32>
    %445 = tpu.matmul %444, %5, %cst_110 {dimension_numbers = #tpu.dot_dimension_numbers<[1], [0], [0], [1], [0, 0, 1, 1], [], []>} : vector<8x32xf32>, vector<32x1xf32>, vector<8x1xf32> -> vector<8x1xf32>
    %446 = vector.extract_strided_slice %1 {offsets = [5, 0, 0], sizes = [1, 8, 1], strides = [1, 1, 1]} : vector<8x8x1xf32> to vector<1x8x1xf32>
    %447 = vector.shape_cast %446 : vector<1x8x1xf32> to vector<8x1xf32>
    %448 = arith.addf %445, %447 : vector<8x1xf32>
    %449 = vector.broadcast %448 : vector<8x1xf32> to vector<8x32xf32>
    %450 = vector.broadcast %20 : vector<1x32xf32> to vector<8x32xf32>
    %451 = arith.mulf %449, %450 : vector<8x32xf32>
    %cst_111 = arith.constant dense<0.000000e+00> : vector<8x32xf32>
    %452 = tpu.matmul %420, %28, %cst_111 {dimension_numbers = #tpu.dot_dimension_numbers<[1], [0], [0], [1], [0, 0, 1, 1], [], []>} : vector<8x32xf32>, vector<32x32xf32>, vector<8x32xf32> -> vector<8x32xf32>
    %453 = arith.addf %451, %452 : vector<8x32xf32>
    %454 = arith.addf %453, %38 : vector<8x32xf32>
    %455 = arith.negf %454 : vector<8x32xf32>
    %456 = math.exp %455 : vector<8x32xf32>
    %cst_112 = arith.constant 1.000000e+00 : f32
    %457 = vector.broadcast %cst_112 : f32 to vector<8x32xf32>
    %458 = arith.addf %457, %456 : vector<8x32xf32>
    %459 = arith.divf %457, %458 : vector<8x32xf32>
    %460 = vector.broadcast %448 : vector<8x1xf32> to vector<8x32xf32>
    %461 = vector.broadcast %22 : vector<1x32xf32> to vector<8x32xf32>
    %462 = arith.mulf %460, %461 : vector<8x32xf32>
    %cst_113 = arith.constant dense<0.000000e+00> : vector<8x32xf32>
    %463 = tpu.matmul %420, %30, %cst_113 {dimension_numbers = #tpu.dot_dimension_numbers<[1], [0], [0], [1], [0, 0, 1, 1], [], []>} : vector<8x32xf32>, vector<32x32xf32>, vector<8x32xf32> -> vector<8x32xf32>
    %464 = arith.addf %462, %463 : vector<8x32xf32>
    %465 = arith.addf %464, %42 : vector<8x32xf32>
    %466 = arith.negf %465 : vector<8x32xf32>
    %467 = math.exp %466 : vector<8x32xf32>
    %cst_114 = arith.constant 1.000000e+00 : f32
    %468 = vector.broadcast %cst_114 : f32 to vector<8x32xf32>
    %469 = arith.addf %468, %467 : vector<8x32xf32>
    %470 = arith.divf %468, %469 : vector<8x32xf32>
    %471 = vector.broadcast %448 : vector<8x1xf32> to vector<8x32xf32>
    %472 = vector.broadcast %24 : vector<1x32xf32> to vector<8x32xf32>
    %473 = arith.mulf %471, %472 : vector<8x32xf32>
    %cst_115 = arith.constant dense<0.000000e+00> : vector<8x32xf32>
    %474 = tpu.matmul %420, %32, %cst_115 {dimension_numbers = #tpu.dot_dimension_numbers<[1], [0], [0], [1], [0, 0, 1, 1], [], []>} : vector<8x32xf32>, vector<32x32xf32>, vector<8x32xf32> -> vector<8x32xf32>
    %475 = arith.addf %473, %474 : vector<8x32xf32>
    %476 = arith.addf %475, %46 : vector<8x32xf32>
    %477 = math.tanh %476 : vector<8x32xf32>
    %478 = vector.broadcast %448 : vector<8x1xf32> to vector<8x32xf32>
    %479 = vector.broadcast %26 : vector<1x32xf32> to vector<8x32xf32>
    %480 = arith.mulf %478, %479 : vector<8x32xf32>
    %cst_116 = arith.constant dense<0.000000e+00> : vector<8x32xf32>
    %481 = tpu.matmul %420, %34, %cst_116 {dimension_numbers = #tpu.dot_dimension_numbers<[1], [0], [0], [1], [0, 0, 1, 1], [], []>} : vector<8x32xf32>, vector<32x32xf32>, vector<8x32xf32> -> vector<8x32xf32>
    %482 = arith.addf %480, %481 : vector<8x32xf32>
    %483 = arith.addf %482, %50 : vector<8x32xf32>
    %484 = arith.negf %483 : vector<8x32xf32>
    %485 = math.exp %484 : vector<8x32xf32>
    %cst_117 = arith.constant 1.000000e+00 : f32
    %486 = vector.broadcast %cst_117 : f32 to vector<8x32xf32>
    %487 = arith.addf %486, %485 : vector<8x32xf32>
    %488 = arith.divf %486, %487 : vector<8x32xf32>
    %489 = arith.mulf %470, %418 : vector<8x32xf32>
    %490 = arith.mulf %459, %477 : vector<8x32xf32>
    %491 = arith.addf %489, %490 : vector<8x32xf32>
    %492 = math.tanh %491 : vector<8x32xf32>
    %493 = arith.mulf %488, %492 : vector<8x32xf32>
    %cst_118 = arith.constant dense<0.000000e+00> : vector<8x32xf32>
    %494 = tpu.matmul %493, %2, %cst_118 {dimension_numbers = #tpu.dot_dimension_numbers<[1], [0], [0], [1], [0, 0, 1, 1], [], []>} : vector<8x32xf32>, vector<32x32xf32>, vector<8x32xf32> -> vector<8x32xf32>
    %cst_119 = arith.constant dense<0.000000e+00> : vector<8x32xf32>
    %495 = tpu.matmul %491, %3, %cst_119 {dimension_numbers = #tpu.dot_dimension_numbers<[1], [0], [0], [1], [0, 0, 1, 1], [], []>} : vector<8x32xf32>, vector<32x32xf32>, vector<8x32xf32> -> vector<8x32xf32>
    %496 = arith.addf %494, %495 : vector<8x32xf32>
    %497 = arith.addf %496, %14 : vector<8x32xf32>
    %498 = vector.shape_cast %497 : vector<8x32xf32> to vector<8x1x32xf32>
    %499 = vector.broadcast %498 : vector<8x1x32xf32> to vector<8x8x32xf32>
    %500 = arith.addf %53, %499 : vector<8x8x32xf32>
    %501 = math.tanh %500 : vector<8x8x32xf32>
    %502 = arith.mulf %501, %18 : vector<8x8x32xf32>
    %cst_120 = arith.constant dense<0.000000e+00> : vector<8x8xf32>
    %503 = vector.multi_reduction <add>, %502, %cst_120 [2] : vector<8x8x32xf32> to vector<8x8xf32>
    %cst_121 = arith.constant dense<0xFF800000> : vector<8xf32>
    %504 = vector.multi_reduction <maximumf>, %503, %cst_121 [1] : vector<8x8xf32> to vector<8xf32>
    %505 = vector.shape_cast %504 : vector<8xf32> to vector<8x1xf32>
    %506 = vector.broadcast %505 : vector<8x1xf32> to vector<8x8xf32>
    %507 = arith.subf %503, %506 : vector<8x8xf32>
    %508 = math.exp %507 : vector<8x8xf32>
    %cst_122 = arith.constant dense<0.000000e+00> : vector<8xf32>
    %509 = vector.multi_reduction <add>, %508, %cst_122 [1] : vector<8x8xf32> to vector<8xf32>
    %510 = vector.shape_cast %509 : vector<8xf32> to vector<8x1xf32>
    %511 = tpu.reciprocal %510 {approx = true} : vector<8x1xf32> -> vector<8x1xf32>
    %512 = vector.broadcast %511 : vector<8x1xf32> to vector<8x8xf32>
    %513 = arith.mulf %508, %512 : vector<8x8xf32>
    %514 = vector.shape_cast %513 : vector<8x8xf32> to vector<8x8x1xf32>
    %515 = vector.broadcast %514 : vector<8x8x1xf32> to vector<8x8x32xf32>
    %516 = arith.mulf %515, %0 : vector<8x8x32xf32>
    %cst_123 = arith.constant dense<0.000000e+00> : vector<8x32xf32>
    %517 = vector.multi_reduction <add>, %516, %cst_123 [1] : vector<8x8x32xf32> to vector<8x32xf32>
    %cst_124 = arith.constant dense<0.000000e+00> : vector<8x1xf32>
    %518 = tpu.matmul %517, %5, %cst_124 {dimension_numbers = #tpu.dot_dimension_numbers<[1], [0], [0], [1], [0, 0, 1, 1], [], []>} : vector<8x32xf32>, vector<32x1xf32>, vector<8x1xf32> -> vector<8x1xf32>
    %519 = vector.extract_strided_slice %1 {offsets = [6, 0, 0], sizes = [1, 8, 1], strides = [1, 1, 1]} : vector<8x8x1xf32> to vector<1x8x1xf32>
    %520 = vector.shape_cast %519 : vector<1x8x1xf32> to vector<8x1xf32>
    %521 = arith.addf %518, %520 : vector<8x1xf32>
    %522 = vector.broadcast %521 : vector<8x1xf32> to vector<8x32xf32>
    %523 = vector.broadcast %20 : vector<1x32xf32> to vector<8x32xf32>
    %524 = arith.mulf %522, %523 : vector<8x32xf32>
    %cst_125 = arith.constant dense<0.000000e+00> : vector<8x32xf32>
    %525 = tpu.matmul %493, %28, %cst_125 {dimension_numbers = #tpu.dot_dimension_numbers<[1], [0], [0], [1], [0, 0, 1, 1], [], []>} : vector<8x32xf32>, vector<32x32xf32>, vector<8x32xf32> -> vector<8x32xf32>
    %526 = arith.addf %524, %525 : vector<8x32xf32>
    %527 = arith.addf %526, %38 : vector<8x32xf32>
    %528 = arith.negf %527 : vector<8x32xf32>
    %529 = math.exp %528 : vector<8x32xf32>
    %cst_126 = arith.constant 1.000000e+00 : f32
    %530 = vector.broadcast %cst_126 : f32 to vector<8x32xf32>
    %531 = arith.addf %530, %529 : vector<8x32xf32>
    %532 = arith.divf %530, %531 : vector<8x32xf32>
    %533 = vector.broadcast %521 : vector<8x1xf32> to vector<8x32xf32>
    %534 = vector.broadcast %22 : vector<1x32xf32> to vector<8x32xf32>
    %535 = arith.mulf %533, %534 : vector<8x32xf32>
    %cst_127 = arith.constant dense<0.000000e+00> : vector<8x32xf32>
    %536 = tpu.matmul %493, %30, %cst_127 {dimension_numbers = #tpu.dot_dimension_numbers<[1], [0], [0], [1], [0, 0, 1, 1], [], []>} : vector<8x32xf32>, vector<32x32xf32>, vector<8x32xf32> -> vector<8x32xf32>
    %537 = arith.addf %535, %536 : vector<8x32xf32>
    %538 = arith.addf %537, %42 : vector<8x32xf32>
    %539 = arith.negf %538 : vector<8x32xf32>
    %540 = math.exp %539 : vector<8x32xf32>
    %cst_128 = arith.constant 1.000000e+00 : f32
    %541 = vector.broadcast %cst_128 : f32 to vector<8x32xf32>
    %542 = arith.addf %541, %540 : vector<8x32xf32>
    %543 = arith.divf %541, %542 : vector<8x32xf32>
    %544 = vector.broadcast %521 : vector<8x1xf32> to vector<8x32xf32>
    %545 = vector.broadcast %24 : vector<1x32xf32> to vector<8x32xf32>
    %546 = arith.mulf %544, %545 : vector<8x32xf32>
    %cst_129 = arith.constant dense<0.000000e+00> : vector<8x32xf32>
    %547 = tpu.matmul %493, %32, %cst_129 {dimension_numbers = #tpu.dot_dimension_numbers<[1], [0], [0], [1], [0, 0, 1, 1], [], []>} : vector<8x32xf32>, vector<32x32xf32>, vector<8x32xf32> -> vector<8x32xf32>
    %548 = arith.addf %546, %547 : vector<8x32xf32>
    %549 = arith.addf %548, %46 : vector<8x32xf32>
    %550 = math.tanh %549 : vector<8x32xf32>
    %551 = vector.broadcast %521 : vector<8x1xf32> to vector<8x32xf32>
    %552 = vector.broadcast %26 : vector<1x32xf32> to vector<8x32xf32>
    %553 = arith.mulf %551, %552 : vector<8x32xf32>
    %cst_130 = arith.constant dense<0.000000e+00> : vector<8x32xf32>
    %554 = tpu.matmul %493, %34, %cst_130 {dimension_numbers = #tpu.dot_dimension_numbers<[1], [0], [0], [1], [0, 0, 1, 1], [], []>} : vector<8x32xf32>, vector<32x32xf32>, vector<8x32xf32> -> vector<8x32xf32>
    %555 = arith.addf %553, %554 : vector<8x32xf32>
    %556 = arith.addf %555, %50 : vector<8x32xf32>
    %557 = arith.negf %556 : vector<8x32xf32>
    %558 = math.exp %557 : vector<8x32xf32>
    %cst_131 = arith.constant 1.000000e+00 : f32
    %559 = vector.broadcast %cst_131 : f32 to vector<8x32xf32>
    %560 = arith.addf %559, %558 : vector<8x32xf32>
    %561 = arith.divf %559, %560 : vector<8x32xf32>
    %562 = arith.mulf %543, %491 : vector<8x32xf32>
    %563 = arith.mulf %532, %550 : vector<8x32xf32>
    %564 = arith.addf %562, %563 : vector<8x32xf32>
    %565 = math.tanh %564 : vector<8x32xf32>
    %566 = arith.mulf %561, %565 : vector<8x32xf32>
    %cst_132 = arith.constant dense<0.000000e+00> : vector<8x32xf32>
    %567 = tpu.matmul %566, %2, %cst_132 {dimension_numbers = #tpu.dot_dimension_numbers<[1], [0], [0], [1], [0, 0, 1, 1], [], []>} : vector<8x32xf32>, vector<32x32xf32>, vector<8x32xf32> -> vector<8x32xf32>
    %cst_133 = arith.constant dense<0.000000e+00> : vector<8x32xf32>
    %568 = tpu.matmul %564, %3, %cst_133 {dimension_numbers = #tpu.dot_dimension_numbers<[1], [0], [0], [1], [0, 0, 1, 1], [], []>} : vector<8x32xf32>, vector<32x32xf32>, vector<8x32xf32> -> vector<8x32xf32>
    %569 = arith.addf %567, %568 : vector<8x32xf32>
    %570 = arith.addf %569, %14 : vector<8x32xf32>
    %571 = vector.shape_cast %570 : vector<8x32xf32> to vector<8x1x32xf32>
    %572 = vector.broadcast %571 : vector<8x1x32xf32> to vector<8x8x32xf32>
    %573 = arith.addf %53, %572 : vector<8x8x32xf32>
    %574 = math.tanh %573 : vector<8x8x32xf32>
    %575 = arith.mulf %574, %18 : vector<8x8x32xf32>
    %cst_134 = arith.constant dense<0.000000e+00> : vector<8x8xf32>
    %576 = vector.multi_reduction <add>, %575, %cst_134 [2] : vector<8x8x32xf32> to vector<8x8xf32>
    %cst_135 = arith.constant dense<0xFF800000> : vector<8xf32>
    %577 = vector.multi_reduction <maximumf>, %576, %cst_135 [1] : vector<8x8xf32> to vector<8xf32>
    %578 = vector.shape_cast %577 : vector<8xf32> to vector<8x1xf32>
    %579 = vector.broadcast %578 : vector<8x1xf32> to vector<8x8xf32>
    %580 = arith.subf %576, %579 : vector<8x8xf32>
    %581 = math.exp %580 : vector<8x8xf32>
    %cst_136 = arith.constant dense<0.000000e+00> : vector<8xf32>
    %582 = vector.multi_reduction <add>, %581, %cst_136 [1] : vector<8x8xf32> to vector<8xf32>
    %583 = vector.shape_cast %582 : vector<8xf32> to vector<8x1xf32>
    %584 = tpu.reciprocal %583 {approx = true} : vector<8x1xf32> -> vector<8x1xf32>
    %585 = vector.broadcast %584 : vector<8x1xf32> to vector<8x8xf32>
    %586 = arith.mulf %581, %585 : vector<8x8xf32>
    %587 = vector.shape_cast %586 : vector<8x8xf32> to vector<8x8x1xf32>
    %588 = vector.broadcast %587 : vector<8x8x1xf32> to vector<8x8x32xf32>
    %589 = arith.mulf %588, %0 : vector<8x8x32xf32>
    %cst_137 = arith.constant dense<0.000000e+00> : vector<8x32xf32>
    %590 = vector.multi_reduction <add>, %589, %cst_137 [1] : vector<8x8x32xf32> to vector<8x32xf32>
    %cst_138 = arith.constant dense<0.000000e+00> : vector<8x1xf32>
    %591 = tpu.matmul %590, %5, %cst_138 {dimension_numbers = #tpu.dot_dimension_numbers<[1], [0], [0], [1], [0, 0, 1, 1], [], []>} : vector<8x32xf32>, vector<32x1xf32>, vector<8x1xf32> -> vector<8x1xf32>
    %592 = vector.extract_strided_slice %1 {offsets = [7, 0, 0], sizes = [1, 8, 1], strides = [1, 1, 1]} : vector<8x8x1xf32> to vector<1x8x1xf32>
    %593 = vector.shape_cast %592 : vector<1x8x1xf32> to vector<8x1xf32>
    %594 = arith.addf %591, %593 : vector<8x1xf32>
    %595 = vector.broadcast %594 : vector<8x1xf32> to vector<8x32xf32>
    %596 = vector.broadcast %20 : vector<1x32xf32> to vector<8x32xf32>
    %597 = arith.mulf %595, %596 : vector<8x32xf32>
    %cst_139 = arith.constant dense<0.000000e+00> : vector<8x32xf32>
    %598 = tpu.matmul %566, %28, %cst_139 {dimension_numbers = #tpu.dot_dimension_numbers<[1], [0], [0], [1], [0, 0, 1, 1], [], []>} : vector<8x32xf32>, vector<32x32xf32>, vector<8x32xf32> -> vector<8x32xf32>
    %599 = arith.addf %597, %598 : vector<8x32xf32>
    %600 = arith.addf %599, %38 : vector<8x32xf32>
    %601 = arith.negf %600 : vector<8x32xf32>
    %602 = math.exp %601 : vector<8x32xf32>
    %cst_140 = arith.constant 1.000000e+00 : f32
    %603 = vector.broadcast %cst_140 : f32 to vector<8x32xf32>
    %604 = arith.addf %603, %602 : vector<8x32xf32>
    %605 = arith.divf %603, %604 : vector<8x32xf32>
    %606 = vector.broadcast %594 : vector<8x1xf32> to vector<8x32xf32>
    %607 = vector.broadcast %22 : vector<1x32xf32> to vector<8x32xf32>
    %608 = arith.mulf %606, %607 : vector<8x32xf32>
    %cst_141 = arith.constant dense<0.000000e+00> : vector<8x32xf32>
    %609 = tpu.matmul %566, %30, %cst_141 {dimension_numbers = #tpu.dot_dimension_numbers<[1], [0], [0], [1], [0, 0, 1, 1], [], []>} : vector<8x32xf32>, vector<32x32xf32>, vector<8x32xf32> -> vector<8x32xf32>
    %610 = arith.addf %608, %609 : vector<8x32xf32>
    %611 = arith.addf %610, %42 : vector<8x32xf32>
    %612 = arith.negf %611 : vector<8x32xf32>
    %613 = math.exp %612 : vector<8x32xf32>
    %cst_142 = arith.constant 1.000000e+00 : f32
    %614 = vector.broadcast %cst_142 : f32 to vector<8x32xf32>
    %615 = arith.addf %614, %613 : vector<8x32xf32>
    %616 = arith.divf %614, %615 : vector<8x32xf32>
    %617 = vector.broadcast %594 : vector<8x1xf32> to vector<8x32xf32>
    %618 = vector.broadcast %24 : vector<1x32xf32> to vector<8x32xf32>
    %619 = arith.mulf %617, %618 : vector<8x32xf32>
    %cst_143 = arith.constant dense<0.000000e+00> : vector<8x32xf32>
    %620 = tpu.matmul %566, %32, %cst_143 {dimension_numbers = #tpu.dot_dimension_numbers<[1], [0], [0], [1], [0, 0, 1, 1], [], []>} : vector<8x32xf32>, vector<32x32xf32>, vector<8x32xf32> -> vector<8x32xf32>
    %621 = arith.addf %619, %620 : vector<8x32xf32>
    %622 = arith.addf %621, %46 : vector<8x32xf32>
    %623 = math.tanh %622 : vector<8x32xf32>
    %624 = vector.broadcast %594 : vector<8x1xf32> to vector<8x32xf32>
    %625 = vector.broadcast %26 : vector<1x32xf32> to vector<8x32xf32>
    %626 = arith.mulf %624, %625 : vector<8x32xf32>
    %cst_144 = arith.constant dense<0.000000e+00> : vector<8x32xf32>
    %627 = tpu.matmul %566, %34, %cst_144 {dimension_numbers = #tpu.dot_dimension_numbers<[1], [0], [0], [1], [0, 0, 1, 1], [], []>} : vector<8x32xf32>, vector<32x32xf32>, vector<8x32xf32> -> vector<8x32xf32>
    %628 = arith.addf %626, %627 : vector<8x32xf32>
    %629 = arith.addf %628, %50 : vector<8x32xf32>
    %630 = arith.negf %629 : vector<8x32xf32>
    %631 = math.exp %630 : vector<8x32xf32>
    %cst_145 = arith.constant 1.000000e+00 : f32
    %632 = vector.broadcast %cst_145 : f32 to vector<8x32xf32>
    %633 = arith.addf %632, %631 : vector<8x32xf32>
    %634 = arith.divf %632, %633 : vector<8x32xf32>
    %635 = arith.mulf %616, %564 : vector<8x32xf32>
    %636 = arith.mulf %605, %623 : vector<8x32xf32>
    %637 = arith.addf %635, %636 : vector<8x32xf32>
    %638 = math.tanh %637 : vector<8x32xf32>
    %639 = arith.mulf %634, %638 : vector<8x32xf32>
    %cst_146 = arith.constant dense<0.000000e+00> : vector<8x1xf32>
    %640 = tpu.matmul %639, %9, %cst_146 {dimension_numbers = #tpu.dot_dimension_numbers<[1], [0], [0], [1], [0, 0, 1, 1], [], []>} : vector<8x32xf32>, vector<32x1xf32>, vector<8x1xf32> -> vector<8x1xf32>
    %cst_147 = arith.constant dense<0.000000e+00> : vector<8x1xf32>
    %641 = tpu.matmul %590, %10, %cst_147 {dimension_numbers = #tpu.dot_dimension_numbers<[1], [0], [0], [1], [0, 0, 1, 1], [], []>} : vector<8x32xf32>, vector<32x1xf32>, vector<8x1xf32> -> vector<8x1xf32>
    %642 = arith.addf %640, %641 : vector<8x1xf32>
    %643 = vector.broadcast %11 : vector<1x1xf32> to vector<8x1xf32>
    %644 = arith.addf %642, %643 : vector<8x1xf32>
    %c0_148 = arith.constant 0 : index
    %c0_149 = arith.constant 0 : index
    %645 = vector.load %arg14[%c0_148, %c0_149] : memref<8x1xf32, #tpu.memory_space<vmem>>, vector<8x1xf32>
    tpu.vector_store %arg14[%c0_148, %c0_149], %644 {strides = array<i32>} : memref<8x1xf32, #tpu.memory_space<vmem>>, vector<8x1xf32>,
    return
  }
}

</mosaic_0001>

<llo_original>
// kernel: tpu_custom_call.1
$region0: #{tpu_custom_call.1}
  #allocation0 [shape = 'u32[]', space=smem, size = 0x4, offset = 0x4, fixed_abs, tag = 'smem constant byte address 0x4 - core index']
  #allocation1 [shape = 'u32[72,128]{1,0:T(1,128)}', space=vmem, size = 0x9000, scoped, tag = 'internal scratch']
  #allocation2 [shape = 'f32[1,1]{1,0:T(1,128)S(1)}', space=vmem, size = 0x200, scoped, tag = 'scoped memory for tpu_custom_call.1']
  %s0 = inlined_call_operand.vmem [shape: f32[8,8,32], index: 0, kind: input, shape index: {}]
  %s1 = inlined_call_operand.vmem [shape: f32[8,8,1], index: 1, kind: input, shape index: {}]
  %s2 = inlined_call_operand.vmem [shape: f32[32,32], index: 2, kind: input, shape index: {}]
  %s3 = inlined_call_operand.vmem [shape: f32[32,32], index: 3, kind: input, shape index: {}]
  %s4 = inlined_call_operand.vmem [shape: f32[32,32], index: 4, kind: input, shape index: {}]
  %s5 = inlined_call_operand.vmem [shape: f32[1,32], index: 5, kind: input, shape index: {}]
  %s6 = inlined_call_operand.hbm [shape: f32[1,32], index: 6, kind: input, shape index: {}]
  %s7 = inlined_call_operand.vmem [shape: f32[32,1], index: 7, kind: input, shape index: {}]
  %s8 = inlined_call_operand.vmem [shape: f32[4,1,32], index: 8, kind: input, shape index: {}]
  %s9 = inlined_call_operand.hbm [shape: f32[4,32,32], index: 9, kind: input, shape index: {}]
  %s10 = inlined_call_operand.vmem [shape: f32[4,1,32], index: 10, kind: input, shape index: {}]
  %s11 = inlined_call_operand.vmem [shape: f32[32,1], index: 11, kind: input, shape index: {}]
  %s12 = inlined_call_operand.vmem [shape: f32[32,1], index: 12, kind: input, shape index: {}]
  %s13 = inlined_call_operand.<no memory space> [shape: f32[1,1], index: 13, kind: input, shape index: {}]
  %s14 = inlined_call_operand.vmem [shape: f32[8,1], index: 14, kind: output, shape index: {}]
  %s15 = sld [smem:[#allocation0]]
  $region74: #{tpu_custom_call.1} parent=0
    _
  %s17 = ssub.s32 1, %s15
  %s18 = scalar_select 0, %s17, %s15
  %v19 = vstv %s13
  %20 = vst [vmem:[#allocation2] sm:$0x1] %v19
  $region1: #{tpu_custom_call.1} parent=0
    #allocation3 [shape = 'u8[512]{0}', space=vmem, size = 0x400, scoped, tag = 'input window, operand 6, single buffered']
    #allocation4 [shape = 's32[1]{0}', space=sflag, size = 0x4, scoped, tag = 'scoped memory for tpu_custom_call.1']
    #allocation5 [shape = 'u8[65536]{0}', space=vmem, size = 0x10000, scoped, tag = 'input window, operand 9, single buffered']
    #allocation6 [shape = 's32[1]{0}', space=sflag, size = 0x4, scoped, tag = 'scoped memory for tpu_custom_call.1']
    %21 = vsyncpa [#allocation4], 0
    %22 = vsyncpa [#allocation6], 0
    // Predicated region
    $region2: #{tpu_custom_call.1} parent=1 // pred_check
      _
    $region3: #{tpu_custom_call.1} parent=1 // pred_check_branch
      %24 = sbr.rel (0) target = $region5
    $region4: #{tpu_custom_call.1} parent=1 // pred_region
      _
    $region5: #{tpu_custom_call.1} parent=1 // pred_fallthru
      _
    // Predicated region
    $region6: #{tpu_custom_call.1} parent=1 // pred_check
      _
    $region7: #{tpu_custom_call.1} parent=1 // pred_check_branch
      %26 = sbr.rel (0) target = $region9
    $region8: #{tpu_custom_call.1} parent=1 // pred_region
      _
    $region9: #{tpu_custom_call.1} parent=1 // pred_fallthru
      _
    // Predicated region
    $region10: #{tpu_custom_call.1} parent=1 // pred_check
      _
    $region11: #{tpu_custom_call.1} parent=1 // pred_check_branch
      %28 = sbr.rel (0) target = $region13
    $region12: #{tpu_custom_call.1} parent=1 // pred_region
      _
    $region13: #{tpu_custom_call.1} parent=1 // pred_fallthru
      _
    // Predicated region
    $region14: #{tpu_custom_call.1} parent=1 // pred_check
      _
    $region15: #{tpu_custom_call.1} parent=1 // pred_check_branch
      %30 = sbr.rel (0) target = $region17
    $region16: #{tpu_custom_call.1} parent=1 // pred_region
      _
    $region17: #{tpu_custom_call.1} parent=1 // pred_fallthru
      _
    // Predicated region
    $region18: #{tpu_custom_call.1} parent=1 // pred_check
      _
    $region19: #{tpu_custom_call.1} parent=1 // pred_check_branch
      %32 = sbr.rel (0) target = $region21
    $region20: #{tpu_custom_call.1} parent=1 // pred_region
      _
    $region21: #{tpu_custom_call.1} parent=1 // pred_fallthru
      _
    // Predicated region
    $region22: #{tpu_custom_call.1} parent=1 // pred_check
      _
    $region23: #{tpu_custom_call.1} parent=1 // pred_check_branch
      %34 = sbr.rel (0) target = $region25
    $region24: #{tpu_custom_call.1} parent=1 // pred_region
      _
    $region25: #{tpu_custom_call.1} parent=1 // pred_fallthru
      _
    // Predicated region
    $region26: #{tpu_custom_call.1} parent=1 // pred_check
      _
    $region27: #{tpu_custom_call.1} parent=1 // pred_check_branch
      %36 = sbr.rel (0) target = $region29
    $region28: #{tpu_custom_call.1} parent=1 // pred_region
      %38 = vsyncadd [#allocation4], 0
      %s40 = sshll.u32 %s6, 4
      %s41 = int_to_ptr.hbm [resolvable:$true] %s40
      %s42 = sshll.u32 [#allocation3], 4
      %s43 = int_to_ptr.vmem [resolvable:$true] %s42
      %45 = dma.hbm_to_vmem [thread:$0]  %s41, 16, %s43, [#allocation4]
    $region29: #{tpu_custom_call.1} parent=1 // pred_fallthru
      _
    // Predicated region
    $region30: #{tpu_custom_call.1} parent=1 // pred_check
      _
    $region31: #{tpu_custom_call.1} parent=1 // pred_check_branch
      %47 = sbr.rel (0) target = $region33
    $region32: #{tpu_custom_call.1} parent=1 // pred_region
      _
    $region33: #{tpu_custom_call.1} parent=1 // pred_fallthru
      _
    // Predicated region
    $region34: #{tpu_custom_call.1} parent=1 // pred_check
      _
    $region35: #{tpu_custom_call.1} parent=1 // pred_check_branch
      %49 = sbr.rel (0) target = $region37
    $region36: #{tpu_custom_call.1} parent=1 // pred_region
      _
    $region37: #{tpu_custom_call.1} parent=1 // pred_fallthru
      _
    // Predicated region
    $region38: #{tpu_custom_call.1} parent=1 // pred_check
      _
    $region39: #{tpu_custom_call.1} parent=1 // pred_check_branch
      %51 = sbr.rel (0) target = $region41
    $region40: #{tpu_custom_call.1} parent=1 // pred_region
      %53 = vsyncadd [#allocation6], 0
      %s54 = sshll.u32 %s9, 4
      %s55 = int_to_ptr.hbm [resolvable:$true] %s54
      %s56 = sshll.u32 [#allocation5], 4
      %s57 = int_to_ptr.vmem [resolvable:$true] %s56
      %62 = dma.hbm_to_vmem [thread:$0]  %s55, 2048, %s57, [#allocation6], 128, 128, 8
    $region41: #{tpu_custom_call.1} parent=1 // pred_fallthru
      _
    // Predicated region
    $region42: #{tpu_custom_call.1} parent=1 // pred_check
      _
    $region43: #{tpu_custom_call.1} parent=1 // pred_check_branch
      %64 = sbr.rel (0) target = $region45
    $region44: #{tpu_custom_call.1} parent=1 // pred_region
      _
    $region45: #{tpu_custom_call.1} parent=1 // pred_fallthru
      _
    // Predicated region
    $region46: #{tpu_custom_call.1} parent=1 // pred_check
      _
    $region47: #{tpu_custom_call.1} parent=1 // pred_check_branch
      %66 = sbr.rel (0) target = $region49
    $region48: #{tpu_custom_call.1} parent=1 // pred_region
      _
    $region49: #{tpu_custom_call.1} parent=1 // pred_fallthru
      _
    // Predicated region
    $region50: #{tpu_custom_call.1} parent=1 // pred_check
      _
    $region51: #{tpu_custom_call.1} parent=1 // pred_check_branch
      %68 = sbr.rel (0) target = $region53
    $region52: #{tpu_custom_call.1} parent=1 // pred_region
      _
    $region53: #{tpu_custom_call.1} parent=1 // pred_fallthru
      _
    // Predicated region
    $region54: #{tpu_custom_call.1} parent=1 // pred_check
      _
    $region55: #{tpu_custom_call.1} parent=1 // pred_check_branch
      %70 = sbr.rel (0) target = $region57
    $region56: #{tpu_custom_call.1} parent=1 // pred_region
      _
    $region57: #{tpu_custom_call.1} parent=1 // pred_fallthru
      _
    // Predicated region
    $region58: #{tpu_custom_call.1} parent=1 // pred_check
      _
    $region59: #{tpu_custom_call.1} parent=1 // pred_check_branch
      %72 = sbr.rel (0) target = $region61
    $region60: #{tpu_custom_call.1} parent=1 // pred_region
      %74 = dma.done [#allocation4], 16
    $region61: #{tpu_custom_call.1} parent=1 // pred_fallthru
      _
    // Predicated region
    $region62: #{tpu_custom_call.1} parent=1 // pred_check
      _
    $region63: #{tpu_custom_call.1} parent=1 // pred_check_branch
      %76 = sbr.rel (0) target = $region65
    $region64: #{tpu_custom_call.1} parent=1 // pred_region
      %78 = dma.done [#allocation6], 2048
    $region65: #{tpu_custom_call.1} parent=1 // pred_fallthru
      _
    %v79 = vld [vmem:[%s0] sm:$0xff]
    %v80 = vld [vmem:[%s0 + $0x8] sm:$0xff]
    %v81 = vld [vmem:[%s0 + $0x10] sm:$0xff]
    %v82 = vld [vmem:[%s0 + $0x18] sm:$0xff]
    %v83 = vld [vmem:[%s0 + $0x20] sm:$0xff]
    %v84 = vld [vmem:[%s0 + $0x28] sm:$0xff]
    %v85 = vld [vmem:[%s0 + $0x30] sm:$0xff]
    %v86 = vld [vmem:[%s0 + $0x38] sm:$0xff]
    %v87 = vld [vmem:[%s1] sm:$0xff]
    %v88 = vld [vmem:[%s1 + $0x8] sm:$0xff]
    %v89 = vld [vmem:[%s1 + $0x10] sm:$0xff]
    %v90 = vld [vmem:[%s1 + $0x18] sm:$0xff]
    %v91 = vld [vmem:[%s1 + $0x20] sm:$0xff]
    %v92 = vld [vmem:[%s1 + $0x28] sm:$0xff]
    %v93 = vld [vmem:[%s1 + $0x30] sm:$0xff]
    %v94 = vld [vmem:[%s1 + $0x38] sm:$0xff]
    %v95 = vld [vmem:[%s2] sm:$0xff]
    %v96 = vld [vmem:[%s2 + $0x8] sm:$0xff]
    %v97 = vld [vmem:[%s2 + $0x10] sm:$0xff]
    %v98 = vld [vmem:[%s2 + $0x18] sm:$0xff]
    %v99 = vld [vmem:[%s3] sm:$0xff]
    %v100 = vld [vmem:[%s3 + $0x8] sm:$0xff]
    %v101 = vld [vmem:[%s3 + $0x10] sm:$0xff]
    %v102 = vld [vmem:[%s3 + $0x18] sm:$0xff]
    %v103 = vld [vmem:[%s4] sm:$0xff]
    %v104 = vld [vmem:[%s4 + $0x8] sm:$0xff]
    %v105 = vld [vmem:[%s4 + $0x10] sm:$0xff]
    %v106 = vld [vmem:[%s4 + $0x18] sm:$0xff]
    %v107 = vld [vmem:[%s7] sm:$0xff]
    %v108 = vld [vmem:[%s7 + $0x8] sm:$0xff]
    %v109 = vld [vmem:[%s7 + $0x10] sm:$0xff]
    %v110 = vld [vmem:[%s7 + $0x18] sm:$0xff]
    %v111 = vld [vmem:[%s8] sm:$0x1]
    %v112 = vld [vmem:[%s8 + $0x1] sm:$0x1]
    %v113 = vld [vmem:[%s8 + $0x2] sm:$0x1]
    %v114 = vld [vmem:[%s8 + $0x3] sm:$0x1]
    %v115 = vld [vmem:[#allocation5] sm:$0xff]
    %v116 = vld [vmem:[#allocation5 + $0x8] sm:$0xff]
    %v117 = vld [vmem:[#allocation5 + $0x10] sm:$0xff]
    %v118 = vld [vmem:[#allocation5 + $0x18] sm:$0xff]
    %v119 = vld [vmem:[#allocation5 + $0x20] sm:$0xff]
    %v120 = vld [vmem:[#allocation5 + $0x28] sm:$0xff]
    %v121 = vld [vmem:[#allocation5 + $0x30] sm:$0xff]
    %v122 = vld [vmem:[#allocation5 + $0x38] sm:$0xff]
    %v123 = vld [vmem:[#allocation5 + $0x40] sm:$0xff]
    %v124 = vld [vmem:[#allocation5 + $0x48] sm:$0xff]
    %v125 = vld [vmem:[#allocation5 + $0x50] sm:$0xff]
    %v126 = vld [vmem:[#allocation5 + $0x58] sm:$0xff]
    %v127 = vld [vmem:[#allocation5 + $0x60] sm:$0xff]
    %v128 = vld [vmem:[#allocation5 + $0x68] sm:$0xff]
    %v129 = vld [vmem:[#allocation5 + $0x70] sm:$0xff]
    %v130 = vld [vmem:[#allocation5 + $0x78] sm:$0xff]
    %v131 = vld [vmem:[%s10] sm:$0x1]
    %v132 = vld [vmem:[%s10 + $0x1] sm:$0x1]
    %v133 = vld [vmem:[%s10 + $0x2] sm:$0x1]
    %v134 = vld [vmem:[%s10 + $0x3] sm:$0x1]
    %v135 = vld [vmem:[%s11] sm:$0xff]
    %v136 = vld [vmem:[%s11 + $0x8] sm:$0xff]
    %v137 = vld [vmem:[%s11 + $0x10] sm:$0xff]
    %v138 = vld [vmem:[%s11 + $0x18] sm:$0xff]
    %v139 = vld [vmem:[%s12] sm:$0xff]
    %v140 = vld [vmem:[%s12 + $0x8] sm:$0xff]
    %v141 = vld [vmem:[%s12 + $0x10] sm:$0xff]
    %v142 = vld [vmem:[%s12 + $0x18] sm:$0xff]
    %v143 = vld [vmem:[#allocation2] sm:$0x1]
    %v144 = vld [vmem:[%s5] sm:$0x1]
    %v146 = vperm.slane %v144, 0
    %v148 = vld [vmem:[#allocation3] sm:$0x1]
    %v150 = vperm.slane %v148, 0
    %v153 = vperm.slane %v131, 0
    %v156 = vperm.slane %v132, 0
    %v159 = vperm.slane %v133, 0
    %v162 = vperm.slane %v134, 0
    %vm164 = vcmask 261120
    %v166 = vsel %vm164, %v79, 0
    %v169 = vsel %vm164, %v80, 0
    %v172 = vsel %vm164, %v81, 0
    %v175 = vsel %vm164, %v82, 0
    %v178 = vsel %vm164, %v83, 0
    %v181 = vsel %vm164, %v84, 0
    %v184 = vsel %vm164, %v85, 0
    %v187 = vsel %vm164, %v86, 0
    %189 = vmatpush.msra.mxu0 0.0
    %190 = vmatpush.msra.mxu0 0.0
    %191 = vmatpush.msra.mxu0 0.0
    %192 = vmatpush.msra.mxu0 0.0
    %193 = vmatpush.msra.mxu0 0.0
    %194 = vmatpush.msra.mxu0 0.0
    %195 = vmatpush.msra.mxu0 0.0
    %196 = vmatpush.msra.mxu0 0.0
    %197 = vmatpush.msra.mxu0 0.0
    %198 = vmatpush.msra.mxu0 0.0
    %199 = vmatpush.msra.mxu0 0.0
    %200 = vmatpush.msra.mxu0 0.0
    %201 = vmatpush.msra.mxu0 %v106
    %202 = vmatpush.msra.mxu0 %v105
    %203 = vmatpush.msra.mxu0 %v104
    %204 = vmatpush.msra.mxu0 %v103
    %205 = vmatmul.f32.gmra.mxu0 %v166
    %v206 = vpop.f32.mrf.mxu0
    %v207 = vadd.f32 0.0, %v206
    %208 = vmatmul.f32.gmra.mxu0 %v169
    %v209 = vpop.f32.mrf.mxu0
    %v210 = vadd.f32 0.0, %v209
    %211 = vmatmul.f32.gmra.mxu0 %v172
    %v212 = vpop.f32.mrf.mxu0
    %v213 = vadd.f32 0.0, %v212
    %214 = vmatmul.f32.gmra.mxu0 %v175
    %v215 = vpop.f32.mrf.mxu0
    %v216 = vadd.f32 0.0, %v215
    %217 = vmatmul.f32.gmra.mxu0 %v178
    %v218 = vpop.f32.mrf.mxu0
    %v219 = vadd.f32 0.0, %v218
    %220 = vmatmul.f32.gmra.mxu0 %v181
    %v221 = vpop.f32.mrf.mxu0
    %v222 = vadd.f32 0.0, %v221
    %223 = vmatmul.f32.gmra.mxu0 %v184
    %v224 = vpop.f32.mrf.mxu0
    %v225 = vadd.f32 0.0, %v224
    %226 = vmatmul.f32.gmra.mxu0 %v187
    %v227 = vpop.f32.mrf.mxu0
    %v228 = vadd.f32 0.0, %v227
    %229 = vdwg.mxu0
    %v231 = vsel %vm164, 0.0, 0
    %233 = vmatpush.msra.mxu0 0.0
    %234 = vmatpush.msra.mxu0 0.0
    %235 = vmatpush.msra.mxu0 0.0
    %236 = vmatpush.msra.mxu0 0.0
    %237 = vmatpush.msra.mxu0 0.0
    %238 = vmatpush.msra.mxu0 0.0
    %239 = vmatpush.msra.mxu0 0.0
    %240 = vmatpush.msra.mxu0 0.0
    %241 = vmatpush.msra.mxu0 0.0
    %242 = vmatpush.msra.mxu0 0.0
    %243 = vmatpush.msra.mxu0 0.0
    %244 = vmatpush.msra.mxu0 0.0
    %245 = vmatpush.msra.mxu0 %v102
    %246 = vmatpush.msra.mxu0 %v101
    %247 = vmatpush.msra.mxu0 %v100
    %248 = vmatpush.msra.mxu0 %v99
    %249 = vmatmul.f32.gmra.mxu0 %v231
    %v250 = vpop.f32.mrf.mxu0
    %v251 = vadd.f32 0.0, %v250
    %252 = vdwg.mxu0
    %253 = vmatpush.msra.mxu0 0.0
    %254 = vmatpush.msra.mxu0 0.0
    %255 = vmatpush.msra.mxu0 0.0
    %256 = vmatpush.msra.mxu0 0.0
    %257 = vmatpush.msra.mxu0 0.0
    %258 = vmatpush.msra.mxu0 0.0
    %259 = vmatpush.msra.mxu0 0.0
    %260 = vmatpush.msra.mxu0 0.0
    %261 = vmatpush.msra.mxu0 0.0
    %262 = vmatpush.msra.mxu0 0.0
    %263 = vmatpush.msra.mxu0 0.0
    %264 = vmatpush.msra.mxu0 0.0
    %265 = vmatpush.msra.mxu0 %v98
    %266 = vmatpush.msra.mxu0 %v97
    %267 = vmatpush.msra.mxu0 %v96
    %268 = vmatpush.msra.mxu0 %v95
    %269 = vmatmul.f32.gmra.mxu0 %v231
    %v270 = vpop.f32.mrf.mxu0
    %v271 = vadd.f32 %v251, %v270
    %272 = vdwg.mxu0
    %v273 = vadd.f32 %v271, %v146
    %v275 = vrot.slane %v273, 1
    %v276 = vrot.slane %v273, 2
    %v277 = vrot.slane %v273, 3
    %v278 = vrot.slane %v273, 4
    %v279 = vrot.slane %v273, 5
    %v280 = vrot.slane %v273, 6
    %v281 = vrot.slane %v273, 7
    %v282 = vperm.slane %v273, 0
    %v283 = vperm.slane %v275, 0
    %v284 = vperm.slane %v276, 0
    %v285 = vperm.slane %v277, 0
    %v286 = vperm.slane %v278, 0
    %v287 = vperm.slane %v279, 0
    %v288 = vperm.slane %v280, 0
    %v289 = vperm.slane %v281, 0
    %v298 = vadd.f32 %v207, %v282
    %v299 = vadd.f32 %v210, %v283
    %v300 = vadd.f32 %v213, %v284
    %v301 = vadd.f32 %v216, %v285
    %v302 = vadd.f32 %v219, %v286
    %v303 = vadd.f32 %v222, %v287
    %v304 = vadd.f32 %v225, %v288
    %v305 = vadd.f32 %v228, %v289
    %v306 = vtanh.pop %v298
    %v307 = vtanh.pop %v299
    %v308 = vtanh.pop %v300
    %v309 = vtanh.pop %v301
    %v310 = vtanh.pop %v302
    %v311 = vtanh.pop %v303
    %v312 = vtanh.pop %v304
    %v313 = vtanh.pop %v305
    %v314 = vmul.f32 %v306, %v150
    %v315 = vmul.f32 %v307, %v150
    %v316 = vmul.f32 %v308, %v150
    %v317 = vmul.f32 %v309, %v150
    %v318 = vmul.f32 %v310, %v150
    %v319 = vmul.f32 %v311, %v150
    %v320 = vmul.f32 %v312, %v150
    %v321 = vmul.f32 %v313, %v150
    %v322 = vsel %vm164, %v314, 0.0
    %323 = vadd.xlane.f32.xlu0 %v322
    %v324 = vpop.xlane.xlu0 %323
    %v325 = vsel %vm164, %v315, 0.0
    %326 = vadd.xlane.f32.xlu0 %v325
    %v327 = vpop.xlane.xlu0 %326
    %v328 = vsel %vm164, %v316, 0.0
    %329 = vadd.xlane.f32.xlu0 %v328
    %v330 = vpop.xlane.xlu0 %329
    %v331 = vsel %vm164, %v317, 0.0
    %332 = vadd.xlane.f32.xlu0 %v331
    %v333 = vpop.xlane.xlu0 %332
    %v334 = vsel %vm164, %v318, 0.0
    %335 = vadd.xlane.f32.xlu0 %v334
    %v336 = vpop.xlane.xlu0 %335
    %v337 = vsel %vm164, %v319, 0.0
    %338 = vadd.xlane.f32.xlu0 %v337
    %v339 = vpop.xlane.xlu0 %338
    %v340 = vsel %vm164, %v320, 0.0
    %341 = vadd.xlane.f32.xlu0 %v340
    %v342 = vpop.xlane.xlu0 %341
    %v343 = vsel %vm164, %v321, 0.0
    %344 = vadd.xlane.f32.xlu0 %v343
    %v345 = vpop.xlane.xlu0 %344
    %v354 = vlaneseq
    %v355 = vand.u32 %v354, 127
    %v356 = vperm.slane %v324, %v355
    %v357 = vperm.slane %v327, %v355
    %v358 = vperm.slane %v330, %v355
    %v359 = vperm.slane %v333, %v355
    %v360 = vperm.slane %v336, %v355
    %v361 = vperm.slane %v339, %v355
    %v362 = vperm.slane %v342, %v355
    %v363 = vperm.slane %v345, %v355
    %vm364 = vcmask 1041409
    %v365 = vsel %vm364, %v357, %v356
    %vm366 = vcmask 1042434
    %v367 = vsel %vm366, %v358, %v365
    %vm368 = vcmask 1043459
    %v369 = vsel %vm368, %v359, %v367
    %vm370 = vcmask 1044484
    %v371 = vsel %vm370, %v360, %v369
    %vm372 = vcmask 1045509
    %v373 = vsel %vm372, %v361, %v371
    %vm374 = vcmask 1046534
    %v375 = vsel %vm374, %v362, %v373
    %vm376 = vcmask 1047559
    %v377 = vsel %vm376, %v363, %v375
    %vm379 = vcmask 64512
    %v380 = vsel %vm379, %v377, -inf
    %381 = vmax.xlane.f32.xlu0 %v380
    %v382 = vpop.xlane.xlu0 %381
    %v384 = vperm.slane %v382, 0
    %v385 = vperm.slane %v382, 1
    %v386 = vperm.slane %v382, 2
    %v387 = vperm.slane %v382, 3
    %v388 = vperm.slane %v382, 4
    %v389 = vperm.slane %v382, 5
    %v390 = vperm.slane %v382, 6
    %v391 = vperm.slane %v382, 7
    %v400 = vsub.f32 %v324, %v384
    %v401 = vsub.f32 %v327, %v385
    %v402 = vsub.f32 %v330, %v386
    %v403 = vsub.f32 %v333, %v387
    %v404 = vsub.f32 %v336, %v388
    %v405 = vsub.f32 %v339, %v389
    %v406 = vsub.f32 %v342, %v390
    %v407 = vsub.f32 %v345, %v391
    %v408 = vmul.f32 %v400, 1.442695
    %v409 = vpow.pop %v408
    %v410 = vmul.f32 %v401, 1.442695
    %v411 = vpow.pop %v410
    %v412 = vmul.f32 %v402, 1.442695
    %v413 = vpow.pop %v412
    %v414 = vmul.f32 %v403, 1.442695
    %v415 = vpow.pop %v414
    %v416 = vmul.f32 %v404, 1.442695
    %v417 = vpow.pop %v416
    %v418 = vmul.f32 %v405, 1.442695
    %v419 = vpow.pop %v418
    %v420 = vmul.f32 %v406, 1.442695
    %v421 = vpow.pop %v420
    %v422 = vmul.f32 %v407, 1.442695
    %v423 = vpow.pop %v422
    %432 = vset.pattern.permute.xlu0 0
    %433 = vperm.xlu0 %432, %v409
    %v434 = vpop.permute.xlu0 %433
    %435 = vset.pattern.permute.xlu0 0
    %436 = vperm.xlu0 %435, %v411
    %v437 = vpop.permute.xlu0 %436
    %438 = vset.pattern.permute.xlu0 0
    %439 = vperm.xlu0 %438, %v413
    %v440 = vpop.permute.xlu0 %439
    %441 = vset.pattern.permute.xlu0 0
    %442 = vperm.xlu0 %441, %v415
    %v443 = vpop.permute.xlu0 %442
    %444 = vset.pattern.permute.xlu0 0
    %445 = vperm.xlu0 %444, %v417
    %v446 = vpop.permute.xlu0 %445
    %447 = vset.pattern.permute.xlu0 0
    %448 = vperm.xlu0 %447, %v419
    %v449 = vpop.permute.xlu0 %448
    %450 = vset.pattern.permute.xlu0 0
    %451 = vperm.xlu0 %450, %v421
    %v452 = vpop.permute.xlu0 %451
    %453 = vset.pattern.permute.xlu0 0
    %454 = vperm.xlu0 %453, %v423
    %v455 = vpop.permute.xlu0 %454
    %v456 = vperm.slane %v434, %v355
    %v457 = vperm.slane %v437, %v355
    %v458 = vperm.slane %v440, %v355
    %v459 = vperm.slane %v443, %v355
    %v460 = vperm.slane %v446, %v355
    %v461 = vperm.slane %v449, %v355
    %v462 = vperm.slane %v452, %v355
    %v463 = vperm.slane %v455, %v355
    %v464 = vsel %vm364, %v457, %v456
    %v465 = vsel %vm366, %v458, %v464
    %v466 = vsel %vm368, %v459, %v465
    %v467 = vsel %vm370, %v460, %v466
    %v468 = vsel %vm372, %v461, %v467
    %v469 = vsel %vm374, %v462, %v468
    %v470 = vsel %vm376, %v463, %v469
    %v472 = vsel %vm379, %v470, 0.0
    %473 = vadd.xlane.f32.xlu0 %v472
    %v474 = vpop.xlane.xlu0 %473
    %v475 = vrcp.pop %v474
    %v477 = vperm.slane %v475, 0
    %v478 = vperm.slane %v475, 1
    %v479 = vperm.slane %v475, 2
    %v480 = vperm.slane %v475, 3
    %v481 = vperm.slane %v475, 4
    %v482 = vperm.slane %v475, 5
    %v483 = vperm.slane %v475, 6
    %v484 = vperm.slane %v475, 7
    %v493 = vmul.f32 %v409, %v477
    %v494 = vmul.f32 %v411, %v478
    %v495 = vmul.f32 %v413, %v479
    %v496 = vmul.f32 %v415, %v480
    %v497 = vmul.f32 %v417, %v481
    %v498 = vmul.f32 %v419, %v482
    %v499 = vmul.f32 %v421, %v483
    %v500 = vmul.f32 %v423, %v484
    %502 = vset.pattern.permute.xlu0 0
    %503 = vperm.xlu0 %502, %v493
    %v504 = vpop.permute.xlu0 %503
    %507 = vset.pattern.permute.xlu0 0
    %508 = vperm.xlu0 %507, %v494
    %v509 = vpop.permute.xlu0 %508
    %512 = vset.pattern.permute.xlu0 0
    %513 = vperm.xlu0 %512, %v495
    %v514 = vpop.permute.xlu0 %513
    %517 = vset.pattern.permute.xlu0 0
    %518 = vperm.xlu0 %517, %v496
    %v519 = vpop.permute.xlu0 %518
    %522 = vset.pattern.permute.xlu0 0
    %523 = vperm.xlu0 %522, %v497
    %v524 = vpop.permute.xlu0 %523
    %527 = vset.pattern.permute.xlu0 0
    %528 = vperm.xlu0 %527, %v498
    %v529 = vpop.permute.xlu0 %528
    %532 = vset.pattern.permute.xlu0 0
    %533 = vperm.xlu0 %532, %v499
    %v534 = vpop.permute.xlu0 %533
    %537 = vset.pattern.permute.xlu0 0
    %538 = vperm.xlu0 %537, %v500
    %v539 = vpop.permute.xlu0 %538
    %v541 = vmul.f32 %v504, %v79
    %v542 = vmul.f32 %v509, %v80
    %v543 = vmul.f32 %v514, %v81
    %v544 = vmul.f32 %v519, %v82
    %v545 = vmul.f32 %v524, %v83
    %v546 = vmul.f32 %v529, %v84
    %v547 = vmul.f32 %v534, %v85
    %v548 = vmul.f32 %v539, %v86
    %v549 = vsel %vm164, %v541, 0.0
    %v550 = vrot.slane %v549, 4
    %v551 = vadd.f32 %v549, %v550
    %v552 = vrot.slane %v551, 2
    %v553 = vadd.f32 %v551, %v552
    %v554 = vrot.slane %v553, 1
    %v555 = vadd.f32 %v553, %v554
    %v556 = vsel %vm164, %v542, 0.0
    %v557 = vrot.slane %v556, 4
    %v558 = vadd.f32 %v556, %v557
    %v559 = vrot.slane %v558, 2
    %v560 = vadd.f32 %v558, %v559
    %v561 = vrot.slane %v560, 1
    %v562 = vadd.f32 %v560, %v561
    %v563 = vsel %vm164, %v543, 0.0
    %v564 = vrot.slane %v563, 4
    %v565 = vadd.f32 %v563, %v564
    %v566 = vrot.slane %v565, 2
    %v567 = vadd.f32 %v565, %v566
    %v568 = vrot.slane %v567, 1
    %v569 = vadd.f32 %v567, %v568
    %v570 = vsel %vm164, %v544, 0.0
    %v571 = vrot.slane %v570, 4
    %v572 = vadd.f32 %v570, %v571
    %v573 = vrot.slane %v572, 2
    %v574 = vadd.f32 %v572, %v573
    %v575 = vrot.slane %v574, 1
    %v576 = vadd.f32 %v574, %v575
    %v577 = vsel %vm164, %v545, 0.0
    %v578 = vrot.slane %v577, 4
    %v579 = vadd.f32 %v577, %v578
    %v580 = vrot.slane %v579, 2
    %v581 = vadd.f32 %v579, %v580
    %v582 = vrot.slane %v581, 1
    %v583 = vadd.f32 %v581, %v582
    %v584 = vsel %vm164, %v546, 0.0
    %v585 = vrot.slane %v584, 4
    %v586 = vadd.f32 %v584, %v585
    %v587 = vrot.slane %v586, 2
    %v588 = vadd.f32 %v586, %v587
    %v589 = vrot.slane %v588, 1
    %v590 = vadd.f32 %v588, %v589
    %v591 = vsel %vm164, %v547, 0.0
    %v592 = vrot.slane %v591, 4
    %v593 = vadd.f32 %v591, %v592
    %v594 = vrot.slane %v593, 2
    %v595 = vadd.f32 %v593, %v594
    %v596 = vrot.slane %v595, 1
    %v597 = vadd.f32 %v595, %v596
    %v598 = vsel %vm164, %v548, 0.0
    %v599 = vrot.slane %v598, 4
    %v600 = vadd.f32 %v598, %v599
    %v601 = vrot.slane %v600, 2
    %v602 = vadd.f32 %v600, %v601
    %v603 = vrot.slane %v602, 1
    %v604 = vadd.f32 %v602, %v603
    %v613 = vsel %vm364, %v562, %v555
    %v614 = vsel %vm366, %v569, %v613
    %v615 = vsel %vm368, %v576, %v614
    %v616 = vsel %vm370, %v583, %v615
    %v617 = vsel %vm372, %v590, %v616
    %v618 = vsel %vm374, %v597, %v617
    %v619 = vsel %vm376, %v604, %v618
    %v620 = vsel %vm164, %v619, 0
    %622 = vmatpush.msra.mxu0 0.0
    %623 = vmatpush.msra.mxu0 0.0
    %624 = vmatpush.msra.mxu0 0.0
    %625 = vmatpush.msra.mxu0 0.0
    %626 = vmatpush.msra.mxu0 0.0
    %627 = vmatpush.msra.mxu0 0.0
    %628 = vmatpush.msra.mxu0 0.0
    %629 = vmatpush.msra.mxu0 0.0
    %630 = vmatpush.msra.mxu0 0.0
    %631 = vmatpush.msra.mxu0 0.0
    %632 = vmatpush.msra.mxu0 0.0
    %633 = vmatpush.msra.mxu0 0.0
    %634 = vmatpush.msra.mxu0 %v110
    %635 = vmatpush.msra.mxu0 %v109
    %636 = vmatpush.msra.mxu0 %v108
    %637 = vmatpush.msra.mxu0 %v107
    %638 = vmatmul.f32.gmra.mxu0 %v620
    %v639 = vpop.f32.mrf.mxu0
    %v640 = vadd.f32 %v87, %v639
    %641 = vdwg.mxu0
    %643 = vset.pattern.permute.xlu0 0
    %644 = vperm.xlu0 %643, %v640
    %v645 = vpop.permute.xlu0 %644
    %v648 = vperm.slane %v111, 0
    %v650 = vmul.f32 %v645, %v648
    %651 = vmatpush.msra.mxu0 0.0
    %652 = vmatpush.msra.mxu0 0.0
    %653 = vmatpush.msra.mxu0 0.0
    %654 = vmatpush.msra.mxu0 0.0
    %655 = vmatpush.msra.mxu0 0.0
    %656 = vmatpush.msra.mxu0 0.0
    %657 = vmatpush.msra.mxu0 0.0
    %658 = vmatpush.msra.mxu0 0.0
    %659 = vmatpush.msra.mxu0 0.0
    %660 = vmatpush.msra.mxu0 0.0
    %661 = vmatpush.msra.mxu0 0.0
    %662 = vmatpush.msra.mxu0 0.0
    %663 = vmatpush.msra.mxu0 %v118
    %664 = vmatpush.msra.mxu0 %v117
    %665 = vmatpush.msra.mxu0 %v116
    %666 = vmatpush.msra.mxu0 %v115
    %667 = vmatmul.f32.gmra.mxu0 %v231
    %v668 = vpop.f32.mrf.mxu0
    %v669 = vadd.f32 0.0, %v668
    %670 = vdwg.mxu0
    %v671 = vadd.f32 %v650, %v669
    %v672 = vadd.f32 %v671, %v153
    %v673 = vxor.u32 %v672, 2147483648
    %v674 = vmul.f32 %v673, 1.442695
    %v675 = vpow.pop %v674
    %v676 = vadd.f32 %v675, 1.0
    %v677 = vrcp.pop %v676
    %v678 = vmul.f32 %v676, %v677
    %v679 = vsub.f32 1.0, %v678
    %v680 = vmul.f32 %v677, %v679
    %v681 = vadd.f32 %v677, %v680
    %vm682 = vweird.f32 %v676
    %vm683 = vweird.f32 %v677
    %vm684 = vmor %vm682, %vm683
    %v685 = vsel %vm684, %v677, %v681
    %v686 = vand.u32 2147483647, %v676
    %vm687 = vcmp.eq.f32.partialorder %v686, 8.507059e+37
    %v688 = vand.u32 %v676, 2147483648
    %v689 = vor.u32 1.1754944e-38, %v688
    %v690 = vsel %vm687, %v689, %v685
    %v691 = vmul.f32 1.0, %v690
    %v693 = vperm.slane %v112, 0
    %v695 = vmul.f32 %v645, %v693
    %696 = vmatpush.msra.mxu0 0.0
    %697 = vmatpush.msra.mxu0 0.0
    %698 = vmatpush.msra.mxu0 0.0
    %699 = vmatpush.msra.mxu0 0.0
    %700 = vmatpush.msra.mxu0 0.0
    %701 = vmatpush.msra.mxu0 0.0
    %702 = vmatpush.msra.mxu0 0.0
    %703 = vmatpush.msra.mxu0 0.0
    %704 = vmatpush.msra.mxu0 0.0
    %705 = vmatpush.msra.mxu0 0.0
    %706 = vmatpush.msra.mxu0 0.0
    %707 = vmatpush.msra.mxu0 0.0
    %708 = vmatpush.msra.mxu0 %v122
    %709 = vmatpush.msra.mxu0 %v121
    %710 = vmatpush.msra.mxu0 %v120
    %711 = vmatpush.msra.mxu0 %v119
    %712 = vmatmul.f32.gmra.mxu0 %v231
    %v713 = vpop.f32.mrf.mxu0
    %v714 = vadd.f32 0.0, %v713
    %715 = vdwg.mxu0
    %v716 = vadd.f32 %v695, %v714
    %v717 = vadd.f32 %v716, %v156
    %v718 = vxor.u32 %v717, 2147483648
    %v719 = vmul.f32 %v718, 1.442695
    %v720 = vpow.pop %v719
    %v721 = vadd.f32 %v720, 1.0
    %v722 = vrcp.pop %v721
    %v723 = vmul.f32 %v721, %v722
    %v724 = vsub.f32 1.0, %v723
    %v725 = vmul.f32 %v722, %v724
    %v726 = vadd.f32 %v722, %v725
    %vm727 = vweird.f32 %v721
    %vm728 = vweird.f32 %v722
    %vm729 = vmor %vm727, %vm728
    %v730 = vsel %vm729, %v722, %v726
    %v731 = vand.u32 2147483647, %v721
    %vm732 = vcmp.eq.f32.partialorder %v731, 8.507059e+37
    %v733 = vand.u32 %v721, 2147483648
    %v734 = vor.u32 1.1754944e-38, %v733
    %v735 = vsel %vm732, %v734, %v730
    %v736 = vmul.f32 1.0, %v735
    %v738 = vperm.slane %v113, 0
    %v740 = vmul.f32 %v645, %v738
    %741 = vmatpush.msra.mxu0 0.0
    %742 = vmatpush.msra.mxu0 0.0
    %743 = vmatpush.msra.mxu0 0.0
    %744 = vmatpush.msra.mxu0 0.0
    %745 = vmatpush.msra.mxu0 0.0
    %746 = vmatpush.msra.mxu0 0.0
    %747 = vmatpush.msra.mxu0 0.0
    %748 = vmatpush.msra.mxu0 0.0
    %749 = vmatpush.msra.mxu0 0.0
    %750 = vmatpush.msra.mxu0 0.0
    %751 = vmatpush.msra.mxu0 0.0
    %752 = vmatpush.msra.mxu0 0.0
    %753 = vmatpush.msra.mxu0 %v126
    %754 = vmatpush.msra.mxu0 %v125
    %755 = vmatpush.msra.mxu0 %v124
    %756 = vmatpush.msra.mxu0 %v123
    %757 = vmatmul.f32.gmra.mxu0 %v231
    %v758 = vpop.f32.mrf.mxu0
    %v759 = vadd.f32 0.0, %v758
    %760 = vdwg.mxu0
    %v761 = vadd.f32 %v740, %v759
    %v762 = vadd.f32 %v761, %v159
    %v763 = vtanh.pop %v762
    %v765 = vperm.slane %v114, 0
    %v767 = vmul.f32 %v645, %v765
    %768 = vmatpush.msra.mxu0 0.0
    %769 = vmatpush.msra.mxu0 0.0
    %770 = vmatpush.msra.mxu0 0.0
    %771 = vmatpush.msra.mxu0 0.0
    %772 = vmatpush.msra.mxu0 0.0
    %773 = vmatpush.msra.mxu0 0.0
    %774 = vmatpush.msra.mxu0 0.0
    %775 = vmatpush.msra.mxu0 0.0
    %776 = vmatpush.msra.mxu0 0.0
    %777 = vmatpush.msra.mxu0 0.0
    %778 = vmatpush.msra.mxu0 0.0
    %779 = vmatpush.msra.mxu0 0.0
    %780 = vmatpush.msra.mxu0 %v130
    %781 = vmatpush.msra.mxu0 %v129
    %782 = vmatpush.msra.mxu0 %v128
    %783 = vmatpush.msra.mxu0 %v127
    %784 = vmatmul.f32.gmra.mxu0 %v231
    %v785 = vpop.f32.mrf.mxu0
    %v786 = vadd.f32 0.0, %v785
    %787 = vdwg.mxu0
    %v788 = vadd.f32 %v767, %v786
    %v789 = vadd.f32 %v788, %v162
    %v790 = vxor.u32 %v789, 2147483648
    %v791 = vmul.f32 %v790, 1.442695
    %v792 = vpow.pop %v791
    %v793 = vadd.f32 %v792, 1.0
    %v794 = vrcp.pop %v793
    %v795 = vmul.f32 %v793, %v794
    %v796 = vsub.f32 1.0, %v795
    %v797 = vmul.f32 %v794, %v796
    %v798 = vadd.f32 %v794, %v797
    %vm799 = vweird.f32 %v793
    %vm800 = vweird.f32 %v794
    %vm801 = vmor %vm799, %vm800
    %v802 = vsel %vm801, %v794, %v798
    %v803 = vand.u32 2147483647, %v793
    %vm804 = vcmp.eq.f32.partialorder %v803, 8.507059e+37
    %v805 = vand.u32 %v793, 2147483648
    %v806 = vor.u32 1.1754944e-38, %v805
    %v807 = vsel %vm804, %v806, %v802
    %v808 = vmul.f32 1.0, %v807
    %v809 = vmul.f32 %v736, 0.0
    %v810 = vmul.f32 %v691, %v763
    %v811 = vadd.f32 %v809, %v810
    %v812 = vtanh.pop %v811
    %v813 = vmul.f32 %v808, %v812
    %v815 = vsel %vm164, %v811, 0
    %817 = vmatpush.msra.mxu0 0.0
    %818 = vmatpush.msra.mxu0 0.0
    %819 = vmatpush.msra.mxu0 0.0
    %820 = vmatpush.msra.mxu0 0.0
    %821 = vmatpush.msra.mxu0 0.0
    %822 = vmatpush.msra.mxu0 0.0
    %823 = vmatpush.msra.mxu0 0.0
    %824 = vmatpush.msra.mxu0 0.0
    %825 = vmatpush.msra.mxu0 0.0
    %826 = vmatpush.msra.mxu0 0.0
    %827 = vmatpush.msra.mxu0 0.0
    %828 = vmatpush.msra.mxu0 0.0
    %829 = vmatpush.msra.mxu0 %v102
    %830 = vmatpush.msra.mxu0 %v101
    %831 = vmatpush.msra.mxu0 %v100
    %832 = vmatpush.msra.mxu0 %v99
    %833 = vmatmul.f32.gmra.mxu0 %v815
    %v834 = vpop.f32.mrf.mxu0
    %v835 = vadd.f32 0.0, %v834
    %836 = vdwg.mxu0
    %v838 = vsel %vm164, %v813, 0
    %840 = vmatpush.msra.mxu0 0.0
    %841 = vmatpush.msra.mxu0 0.0
    %842 = vmatpush.msra.mxu0 0.0
    %843 = vmatpush.msra.mxu0 0.0
    %844 = vmatpush.msra.mxu0 0.0
    %845 = vmatpush.msra.mxu0 0.0
    %846 = vmatpush.msra.mxu0 0.0
    %847 = vmatpush.msra.mxu0 0.0
    %848 = vmatpush.msra.mxu0 0.0
    %849 = vmatpush.msra.mxu0 0.0
    %850 = vmatpush.msra.mxu0 0.0
    %851 = vmatpush.msra.mxu0 0.0
    %852 = vmatpush.msra.mxu0 %v98
    %853 = vmatpush.msra.mxu0 %v97
    %854 = vmatpush.msra.mxu0 %v96
    %855 = vmatpush.msra.mxu0 %v95
    %856 = vmatmul.f32.gmra.mxu0 %v838
    %v857 = vpop.f32.mrf.mxu0
    %v858 = vadd.f32 %v835, %v857
    %859 = vdwg.mxu0
    %v860 = vadd.f32 %v858, %v146
    %v862 = vrot.slane %v860, 1
    %v863 = vrot.slane %v860, 2
    %v864 = vrot.slane %v860, 3
    %v865 = vrot.slane %v860, 4
    %v866 = vrot.slane %v860, 5
    %v867 = vrot.slane %v860, 6
    %v868 = vrot.slane %v860, 7
    %v869 = vperm.slane %v860, 0
    %v870 = vperm.slane %v862, 0
    %v871 = vperm.slane %v863, 0
    %v872 = vperm.slane %v864, 0
    %v873 = vperm.slane %v865, 0
    %v874 = vperm.slane %v866, 0
    %v875 = vperm.slane %v867, 0
    %v876 = vperm.slane %v868, 0
    %v885 = vadd.f32 %v207, %v869
    %v886 = vadd.f32 %v210, %v870
    %v887 = vadd.f32 %v213, %v871
    %v888 = vadd.f32 %v216, %v872
    %v889 = vadd.f32 %v219, %v873
    %v890 = vadd.f32 %v222, %v874
    %v891 = vadd.f32 %v225, %v875
    %v892 = vadd.f32 %v228, %v876
    %v893 = vtanh.pop %v885
    %v894 = vtanh.pop %v886
    %v895 = vtanh.pop %v887
    %v896 = vtanh.pop %v888
    %v897 = vtanh.pop %v889
    %v898 = vtanh.pop %v890
    %v899 = vtanh.pop %v891
    %v900 = vtanh.pop %v892
    %v901 = vmul.f32 %v893, %v150
    %v902 = vmul.f32 %v894, %v150
    %v903 = vmul.f32 %v895, %v150
    %v904 = vmul.f32 %v896, %v150
    %v905 = vmul.f32 %v897, %v150
    %v906 = vmul.f32 %v898, %v150
    %v907 = vmul.f32 %v899, %v150
    %v908 = vmul.f32 %v900, %v150
    %v909 = vsel %vm164, %v901, 0.0
    %910 = vadd.xlane.f32.xlu0 %v909
    %v911 = vpop.xlane.xlu0 %910
    %v912 = vsel %vm164, %v902, 0.0
    %913 = vadd.xlane.f32.xlu0 %v912
    %v914 = vpop.xlane.xlu0 %913
    %v915 = vsel %vm164, %v903, 0.0
    %916 = vadd.xlane.f32.xlu0 %v915
    %v917 = vpop.xlane.xlu0 %916
    %v918 = vsel %vm164, %v904, 0.0
    %919 = vadd.xlane.f32.xlu0 %v918
    %v920 = vpop.xlane.xlu0 %919
    %v921 = vsel %vm164, %v905, 0.0
    %922 = vadd.xlane.f32.xlu0 %v921
    %v923 = vpop.xlane.xlu0 %922
    %v924 = vsel %vm164, %v906, 0.0
    %925 = vadd.xlane.f32.xlu0 %v924
    %v926 = vpop.xlane.xlu0 %925
    %v927 = vsel %vm164, %v907, 0.0
    %928 = vadd.xlane.f32.xlu0 %v927
    %v929 = vpop.xlane.xlu0 %928
    %v930 = vsel %vm164, %v908, 0.0
    %931 = vadd.xlane.f32.xlu0 %v930
    %v932 = vpop.xlane.xlu0 %931
    %v941 = vperm.slane %v911, %v355
    %v942 = vperm.slane %v914, %v355
    %v943 = vperm.slane %v917, %v355
    %v944 = vperm.slane %v920, %v355
    %v945 = vperm.slane %v923, %v355
    %v946 = vperm.slane %v926, %v355
    %v947 = vperm.slane %v929, %v355
    %v948 = vperm.slane %v932, %v355
    %v949 = vsel %vm364, %v942, %v941
    %v950 = vsel %vm366, %v943, %v949
    %v951 = vsel %vm368, %v944, %v950
    %v952 = vsel %vm370, %v945, %v951
    %v953 = vsel %vm372, %v946, %v952
    %v954 = vsel %vm374, %v947, %v953
    %v955 = vsel %vm376, %v948, %v954
    %v957 = vsel %vm379, %v955, -inf
    %958 = vmax.xlane.f32.xlu0 %v957
    %v959 = vpop.xlane.xlu0 %958
    %v961 = vperm.slane %v959, 0
    %v962 = vperm.slane %v959, 1
    %v963 = vperm.slane %v959, 2
    %v964 = vperm.slane %v959, 3
    %v965 = vperm.slane %v959, 4
    %v966 = vperm.slane %v959, 5
    %v967 = vperm.slane %v959, 6
    %v968 = vperm.slane %v959, 7
    %v977 = vsub.f32 %v911, %v961
    %v978 = vsub.f32 %v914, %v962
    %v979 = vsub.f32 %v917, %v963
    %v980 = vsub.f32 %v920, %v964
    %v981 = vsub.f32 %v923, %v965
    %v982 = vsub.f32 %v926, %v966
    %v983 = vsub.f32 %v929, %v967
    %v984 = vsub.f32 %v932, %v968
    %v985 = vmul.f32 %v977, 1.442695
    %v986 = vpow.pop %v985
    %v987 = vmul.f32 %v978, 1.442695
    %v988 = vpow.pop %v987
    %v989 = vmul.f32 %v979, 1.442695
    %v990 = vpow.pop %v989
    %v991 = vmul.f32 %v980, 1.442695
    %v992 = vpow.pop %v991
    %v993 = vmul.f32 %v981, 1.442695
    %v994 = vpow.pop %v993
    %v995 = vmul.f32 %v982, 1.442695
    %v996 = vpow.pop %v995
    %v997 = vmul.f32 %v983, 1.442695
    %v998 = vpow.pop %v997
    %v999 = vmul.f32 %v984, 1.442695
    %v1000 = vpow.pop %v999
    %1009 = vset.pattern.permute.xlu0 0
    %1010 = vperm.xlu0 %1009, %v986
    %v1011 = vpop.permute.xlu0 %1010
    %1012 = vset.pattern.permute.xlu0 0
    %1013 = vperm.xlu0 %1012, %v988
    %v1014 = vpop.permute.xlu0 %1013
    %1015 = vset.pattern.permute.xlu0 0
    %1016 = vperm.xlu0 %1015, %v990
    %v1017 = vpop.permute.xlu0 %1016
    %1018 = vset.pattern.permute.xlu0 0
    %1019 = vperm.xlu0 %1018, %v992
    %v1020 = vpop.permute.xlu0 %1019
    %1021 = vset.pattern.permute.xlu0 0
    %1022 = vperm.xlu0 %1021, %v994
    %v1023 = vpop.permute.xlu0 %1022
    %1024 = vset.pattern.permute.xlu0 0
    %1025 = vperm.xlu0 %1024, %v996
    %v1026 = vpop.permute.xlu0 %1025
    %1027 = vset.pattern.permute.xlu0 0
    %1028 = vperm.xlu0 %1027, %v998
    %v1029 = vpop.permute.xlu0 %1028
    %1030 = vset.pattern.permute.xlu0 0
    %1031 = vperm.xlu0 %1030, %v1000
    %v1032 = vpop.permute.xlu0 %1031
    %v1033 = vperm.slane %v1011, %v355
    %v1034 = vperm.slane %v1014, %v355
    %v1035 = vperm.slane %v1017, %v355
    %v1036 = vperm.slane %v1020, %v355
    %v1037 = vperm.slane %v1023, %v355
    %v1038 = vperm.slane %v1026, %v355
    %v1039 = vperm.slane %v1029, %v355
    %v1040 = vperm.slane %v1032, %v355
    %v1041 = vsel %vm364, %v1034, %v1033
    %v1042 = vsel %vm366, %v1035, %v1041
    %v1043 = vsel %vm368, %v1036, %v1042
    %v1044 = vsel %vm370, %v1037, %v1043
    %v1045 = vsel %vm372, %v1038, %v1044
    %v1046 = vsel %vm374, %v1039, %v1045
    %v1047 = vsel %vm376, %v1040, %v1046
    %v1049 = vsel %vm379, %v1047, 0.0
    %1050 = vadd.xlane.f32.xlu0 %v1049
    %v1051 = vpop.xlane.xlu0 %1050
    %v1052 = vrcp.pop %v1051
    %v1054 = vperm.slane %v1052, 0
    %v1055 = vperm.slane %v1052, 1
    %v1056 = vperm.slane %v1052, 2
    %v1057 = vperm.slane %v1052, 3
    %v1058 = vperm.slane %v1052, 4
    %v1059 = vperm.slane %v1052, 5
    %v1060 = vperm.slane %v1052, 6
    %v1061 = vperm.slane %v1052, 7
    %v1070 = vmul.f32 %v986, %v1054
    %v1071 = vmul.f32 %v988, %v1055
    %v1072 = vmul.f32 %v990, %v1056
    %v1073 = vmul.f32 %v992, %v1057
    %v1074 = vmul.f32 %v994, %v1058
    %v1075 = vmul.f32 %v996, %v1059
    %v1076 = vmul.f32 %v998, %v1060
    %v1077 = vmul.f32 %v1000, %v1061
    %1079 = vset.pattern.permute.xlu0 0
    %1080 = vperm.xlu0 %1079, %v1070
    %v1081 = vpop.permute.xlu0 %1080
    %1084 = vset.pattern.permute.xlu0 0
    %1085 = vperm.xlu0 %1084, %v1071
    %v1086 = vpop.permute.xlu0 %1085
    %1089 = vset.pattern.permute.xlu0 0
    %1090 = vperm.xlu0 %1089, %v1072
    %v1091 = vpop.permute.xlu0 %1090
    %1094 = vset.pattern.permute.xlu0 0
    %1095 = vperm.xlu0 %1094, %v1073
    %v1096 = vpop.permute.xlu0 %1095
    %1099 = vset.pattern.permute.xlu0 0
    %1100 = vperm.xlu0 %1099, %v1074
    %v1101 = vpop.permute.xlu0 %1100
    %1104 = vset.pattern.permute.xlu0 0
    %1105 = vperm.xlu0 %1104, %v1075
    %v1106 = vpop.permute.xlu0 %1105
    %1109 = vset.pattern.permute.xlu0 0
    %1110 = vperm.xlu0 %1109, %v1076
    %v1111 = vpop.permute.xlu0 %1110
    %1114 = vset.pattern.permute.xlu0 0
    %1115 = vperm.xlu0 %1114, %v1077
    %v1116 = vpop.permute.xlu0 %1115
    %v1118 = vmul.f32 %v1081, %v79
    %v1119 = vmul.f32 %v1086, %v80
    %v1120 = vmul.f32 %v1091, %v81
    %v1121 = vmul.f32 %v1096, %v82
    %v1122 = vmul.f32 %v1101, %v83
    %v1123 = vmul.f32 %v1106, %v84
    %v1124 = vmul.f32 %v1111, %v85
    %v1125 = vmul.f32 %v1116, %v86
    %v1126 = vsel %vm164, %v1118, 0.0
    %v1127 = vrot.slane %v1126, 4
    %v1128 = vadd.f32 %v1126, %v1127
    %v1129 = vrot.slane %v1128, 2
    %v1130 = vadd.f32 %v1128, %v1129
    %v1131 = vrot.slane %v1130, 1
    %v1132 = vadd.f32 %v1130, %v1131
    %v1133 = vsel %vm164, %v1119, 0.0
    %v1134 = vrot.slane %v1133, 4
    %v1135 = vadd.f32 %v1133, %v1134
    %v1136 = vrot.slane %v1135, 2
    %v1137 = vadd.f32 %v1135, %v1136
    %v1138 = vrot.slane %v1137, 1
    %v1139 = vadd.f32 %v1137, %v1138
    %v1140 = vsel %vm164, %v1120, 0.0
    %v1141 = vrot.slane %v1140, 4
    %v1142 = vadd.f32 %v1140, %v1141
    %v1143 = vrot.slane %v1142, 2
    %v1144 = vadd.f32 %v1142, %v1143
    %v1145 = vrot.slane %v1144, 1
    %v1146 = vadd.f32 %v1144, %v1145
    %v1147 = vsel %vm164, %v1121, 0.0
    %v1148 = vrot.slane %v1147, 4
    %v1149 = vadd.f32 %v1147, %v1148
    %v1150 = vrot.slane %v1149, 2
    %v1151 = vadd.f32 %v1149, %v1150
    %v1152 = vrot.slane %v1151, 1
    %v1153 = vadd.f32 %v1151, %v1152
    %v1154 = vsel %vm164, %v1122, 0.0
    %v1155 = vrot.slane %v1154, 4
    %v1156 = vadd.f32 %v1154, %v1155
    %v1157 = vrot.slane %v1156, 2
    %v1158 = vadd.f32 %v1156, %v1157
    %v1159 = vrot.slane %v1158, 1
    %v1160 = vadd.f32 %v1158, %v1159
    %v1161 = vsel %vm164, %v1123, 0.0
    %v1162 = vrot.slane %v1161, 4
    %v1163 = vadd.f32 %v1161, %v1162
    %v1164 = vrot.slane %v1163, 2
    %v1165 = vadd.f32 %v1163, %v1164
    %v1166 = vrot.slane %v1165, 1
    %v1167 = vadd.f32 %v1165, %v1166
    %v1168 = vsel %vm164, %v1124, 0.0
    %v1169 = vrot.slane %v1168, 4
    %v1170 = vadd.f32 %v1168, %v1169
    %v1171 = vrot.slane %v1170, 2
    %v1172 = vadd.f32 %v1170, %v1171
    %v1173 = vrot.slane %v1172, 1
    %v1174 = vadd.f32 %v1172, %v1173
    %v1175 = vsel %vm164, %v1125, 0.0
    %v1176 = vrot.slane %v1175, 4
    %v1177 = vadd.f32 %v1175, %v1176
    %v1178 = vrot.slane %v1177, 2
    %v1179 = vadd.f32 %v1177, %v1178
    %v1180 = vrot.slane %v1179, 1
    %v1181 = vadd.f32 %v1179, %v1180
    %v1190 = vsel %vm364, %v1139, %v1132
    %v1191 = vsel %vm366, %v1146, %v1190
    %v1192 = vsel %vm368, %v1153, %v1191
    %v1193 = vsel %vm370, %v1160, %v1192
    %v1194 = vsel %vm372, %v1167, %v1193
    %v1195 = vsel %vm374, %v1174, %v1194
    %v1196 = vsel %vm376, %v1181, %v1195
    %v1197 = vsel %vm164, %v1196, 0
    %1199 = vmatpush.msra.mxu0 0.0
    %1200 = vmatpush.msra.mxu0 0.0
    %1201 = vmatpush.msra.mxu0 0.0
    %1202 = vmatpush.msra.mxu0 0.0
    %1203 = vmatpush.msra.mxu0 0.0
    %1204 = vmatpush.msra.mxu0 0.0
    %1205 = vmatpush.msra.mxu0 0.0
    %1206 = vmatpush.msra.mxu0 0.0
    %1207 = vmatpush.msra.mxu0 0.0
    %1208 = vmatpush.msra.mxu0 0.0
    %1209 = vmatpush.msra.mxu0 0.0
    %1210 = vmatpush.msra.mxu0 0.0
    %1211 = vmatpush.msra.mxu0 %v110
    %1212 = vmatpush.msra.mxu0 %v109
    %1213 = vmatpush.msra.mxu0 %v108
    %1214 = vmatpush.msra.mxu0 %v107
    %1215 = vmatmul.f32.gmra.mxu0 %v1197
    %v1216 = vpop.f32.mrf.mxu0
    %v1217 = vadd.f32 %v88, %v1216
    %1218 = vdwg.mxu0
    %1220 = vset.pattern.permute.xlu0 0
    %1221 = vperm.xlu0 %1220, %v1217
    %v1222 = vpop.permute.xlu0 %1221
    %v1224 = vmul.f32 %v1222, %v648
    %1225 = vmatpush.msra.mxu0 0.0
    %1226 = vmatpush.msra.mxu0 0.0
    %1227 = vmatpush.msra.mxu0 0.0
    %1228 = vmatpush.msra.mxu0 0.0
    %1229 = vmatpush.msra.mxu0 0.0
    %1230 = vmatpush.msra.mxu0 0.0
    %1231 = vmatpush.msra.mxu0 0.0
    %1232 = vmatpush.msra.mxu0 0.0
    %1233 = vmatpush.msra.mxu0 0.0
    %1234 = vmatpush.msra.mxu0 0.0
    %1235 = vmatpush.msra.mxu0 0.0
    %1236 = vmatpush.msra.mxu0 0.0
    %1237 = vmatpush.msra.mxu0 %v118
    %1238 = vmatpush.msra.mxu0 %v117
    %1239 = vmatpush.msra.mxu0 %v116
    %1240 = vmatpush.msra.mxu0 %v115
    %1241 = vmatmul.f32.gmra.mxu0 %v838
    %v1242 = vpop.f32.mrf.mxu0
    %v1243 = vadd.f32 0.0, %v1242
    %1244 = vdwg.mxu0
    %v1245 = vadd.f32 %v1224, %v1243
    %v1246 = vadd.f32 %v1245, %v153
    %v1247 = vxor.u32 %v1246, 2147483648
    %v1248 = vmul.f32 %v1247, 1.442695
    %v1249 = vpow.pop %v1248
    %v1250 = vadd.f32 %v1249, 1.0
    %v1251 = vrcp.pop %v1250
    %v1252 = vmul.f32 %v1250, %v1251
    %v1253 = vsub.f32 1.0, %v1252
    %v1254 = vmul.f32 %v1251, %v1253
    %v1255 = vadd.f32 %v1251, %v1254
    %vm1256 = vweird.f32 %v1250
    %vm1257 = vweird.f32 %v1251
    %vm1258 = vmor %vm1256, %vm1257
    %v1259 = vsel %vm1258, %v1251, %v1255
    %v1260 = vand.u32 2147483647, %v1250
    %vm1261 = vcmp.eq.f32.partialorder %v1260, 8.507059e+37
    %v1262 = vand.u32 %v1250, 2147483648
    %v1263 = vor.u32 1.1754944e-38, %v1262
    %v1264 = vsel %vm1261, %v1263, %v1259
    %v1265 = vmul.f32 1.0, %v1264
    %v1266 = vmul.f32 %v1222, %v693
    %1267 = vmatpush.msra.mxu0 0.0
    %1268 = vmatpush.msra.mxu0 0.0
    %1269 = vmatpush.msra.mxu0 0.0
    %1270 = vmatpush.msra.mxu0 0.0
    %1271 = vmatpush.msra.mxu0 0.0
    %1272 = vmatpush.msra.mxu0 0.0
    %1273 = vmatpush.msra.mxu0 0.0
    %1274 = vmatpush.msra.mxu0 0.0
    %1275 = vmatpush.msra.mxu0 0.0
    %1276 = vmatpush.msra.mxu0 0.0
    %1277 = vmatpush.msra.mxu0 0.0
    %1278 = vmatpush.msra.mxu0 0.0
    %1279 = vmatpush.msra.mxu0 %v122
    %1280 = vmatpush.msra.mxu0 %v121
    %1281 = vmatpush.msra.mxu0 %v120
    %1282 = vmatpush.msra.mxu0 %v119
    %1283 = vmatmul.f32.gmra.mxu0 %v838
    %v1284 = vpop.f32.mrf.mxu0
    %v1285 = vadd.f32 0.0, %v1284
    %1286 = vdwg.mxu0
    %v1287 = vadd.f32 %v1266, %v1285
    %v1288 = vadd.f32 %v1287, %v156
    %v1289 = vxor.u32 %v1288, 2147483648
    %v1290 = vmul.f32 %v1289, 1.442695
    %v1291 = vpow.pop %v1290
    %v1292 = vadd.f32 %v1291, 1.0
    %v1293 = vrcp.pop %v1292
    %v1294 = vmul.f32 %v1292, %v1293
    %v1295 = vsub.f32 1.0, %v1294
    %v1296 = vmul.f32 %v1293, %v1295
    %v1297 = vadd.f32 %v1293, %v1296
    %vm1298 = vweird.f32 %v1292
    %vm1299 = vweird.f32 %v1293
    %vm1300 = vmor %vm1298, %vm1299
    %v1301 = vsel %vm1300, %v1293, %v1297
    %v1302 = vand.u32 2147483647, %v1292
    %vm1303 = vcmp.eq.f32.partialorder %v1302, 8.507059e+37
    %v1304 = vand.u32 %v1292, 2147483648
    %v1305 = vor.u32 1.1754944e-38, %v1304
    %v1306 = vsel %vm1303, %v1305, %v1301
    %v1307 = vmul.f32 1.0, %v1306
    %v1308 = vmul.f32 %v1222, %v738
    %1309 = vmatpush.msra.mxu0 0.0
    %1310 = vmatpush.msra.mxu0 0.0
    %1311 = vmatpush.msra.mxu0 0.0
    %1312 = vmatpush.msra.mxu0 0.0
    %1313 = vmatpush.msra.mxu0 0.0
    %1314 = vmatpush.msra.mxu0 0.0
    %1315 = vmatpush.msra.mxu0 0.0
    %1316 = vmatpush.msra.mxu0 0.0
    %1317 = vmatpush.msra.mxu0 0.0
    %1318 = vmatpush.msra.mxu0 0.0
    %1319 = vmatpush.msra.mxu0 0.0
    %1320 = vmatpush.msra.mxu0 0.0
    %1321 = vmatpush.msra.mxu0 %v126
    %1322 = vmatpush.msra.mxu0 %v125
    %1323 = vmatpush.msra.mxu0 %v124
    %1324 = vmatpush.msra.mxu0 %v123
    %1325 = vmatmul.f32.gmra.mxu0 %v838
    %v1326 = vpop.f32.mrf.mxu0
    %v1327 = vadd.f32 0.0, %v1326
    %1328 = vdwg.mxu0
    %v1329 = vadd.f32 %v1308, %v1327
    %v1330 = vadd.f32 %v1329, %v159
    %v1331 = vtanh.pop %v1330
    %v1332 = vmul.f32 %v1222, %v765
    %1333 = vmatpush.msra.mxu0 0.0
    %1334 = vmatpush.msra.mxu0 0.0
    %1335 = vmatpush.msra.mxu0 0.0
    %1336 = vmatpush.msra.mxu0 0.0
    %1337 = vmatpush.msra.mxu0 0.0
    %1338 = vmatpush.msra.mxu0 0.0
    %1339 = vmatpush.msra.mxu0 0.0
    %1340 = vmatpush.msra.mxu0 0.0
    %1341 = vmatpush.msra.mxu0 0.0
    %1342 = vmatpush.msra.mxu0 0.0
    %1343 = vmatpush.msra.mxu0 0.0
    %1344 = vmatpush.msra.mxu0 0.0
    %1345 = vmatpush.msra.mxu0 %v130
    %1346 = vmatpush.msra.mxu0 %v129
    %1347 = vmatpush.msra.mxu0 %v128
    %1348 = vmatpush.msra.mxu0 %v127
    %1349 = vmatmul.f32.gmra.mxu0 %v838
    %v1350 = vpop.f32.mrf.mxu0
    %v1351 = vadd.f32 0.0, %v1350
    %1352 = vdwg.mxu0
    %v1353 = vadd.f32 %v1332, %v1351
    %v1354 = vadd.f32 %v1353, %v162
    %v1355 = vxor.u32 %v1354, 2147483648
    %v1356 = vmul.f32 %v1355, 1.442695
    %v1357 = vpow.pop %v1356
    %v1358 = vadd.f32 %v1357, 1.0
    %v1359 = vrcp.pop %v1358
    %v1360 = vmul.f32 %v1358, %v1359
    %v1361 = vsub.f32 1.0, %v1360
    %v1362 = vmul.f32 %v1359, %v1361
    %v1363 = vadd.f32 %v1359, %v1362
    %vm1364 = vweird.f32 %v1358
    %vm1365 = vweird.f32 %v1359
    %vm1366 = vmor %vm1364, %vm1365
    %v1367 = vsel %vm1366, %v1359, %v1363
    %v1368 = vand.u32 2147483647, %v1358
    %vm1369 = vcmp.eq.f32.partialorder %v1368, 8.507059e+37
    %v1370 = vand.u32 %v1358, 2147483648
    %v1371 = vor.u32 1.1754944e-38, %v1370
    %v1372 = vsel %vm1369, %v1371, %v1367
    %v1373 = vmul.f32 1.0, %v1372
    %v1374 = vmul.f32 %v1307, %v811
    %v1375 = vmul.f32 %v1265, %v1331
    %v1376 = vadd.f32 %v1374, %v1375
    %v1377 = vtanh.pop %v1376
    %v1378 = vmul.f32 %v1373, %v1377
    %v1380 = vsel %vm164, %v1376, 0
    %1382 = vmatpush.msra.mxu0 0.0
    %1383 = vmatpush.msra.mxu0 0.0
    %1384 = vmatpush.msra.mxu0 0.0
    %1385 = vmatpush.msra.mxu0 0.0
    %1386 = vmatpush.msra.mxu0 0.0
    %1387 = vmatpush.msra.mxu0 0.0
    %1388 = vmatpush.msra.mxu0 0.0
    %1389 = vmatpush.msra.mxu0 0.0
    %1390 = vmatpush.msra.mxu0 0.0
    %1391 = vmatpush.msra.mxu0 0.0
    %1392 = vmatpush.msra.mxu0 0.0
    %1393 = vmatpush.msra.mxu0 0.0
    %1394 = vmatpush.msra.mxu0 %v102
    %1395 = vmatpush.msra.mxu0 %v101
    %1396 = vmatpush.msra.mxu0 %v100
    %1397 = vmatpush.msra.mxu0 %v99
    %1398 = vmatmul.f32.gmra.mxu0 %v1380
    %v1399 = vpop.f32.mrf.mxu0
    %v1400 = vadd.f32 0.0, %v1399
    %1401 = vdwg.mxu0
    %v1403 = vsel %vm164, %v1378, 0
    %1405 = vmatpush.msra.mxu0 0.0
    %1406 = vmatpush.msra.mxu0 0.0
    %1407 = vmatpush.msra.mxu0 0.0
    %1408 = vmatpush.msra.mxu0 0.0
    %1409 = vmatpush.msra.mxu0 0.0
    %1410 = vmatpush.msra.mxu0 0.0
    %1411 = vmatpush.msra.mxu0 0.0
    %1412 = vmatpush.msra.mxu0 0.0
    %1413 = vmatpush.msra.mxu0 0.0
    %1414 = vmatpush.msra.mxu0 0.0
    %1415 = vmatpush.msra.mxu0 0.0
    %1416 = vmatpush.msra.mxu0 0.0
    %1417 = vmatpush.msra.mxu0 %v98
    %1418 = vmatpush.msra.mxu0 %v97
    %1419 = vmatpush.msra.mxu0 %v96
    %1420 = vmatpush.msra.mxu0 %v95
    %1421 = vmatmul.f32.gmra.mxu0 %v1403
    %v1422 = vpop.f32.mrf.mxu0
    %v1423 = vadd.f32 %v1400, %v1422
    %1424 = vdwg.mxu0
    %v1425 = vadd.f32 %v1423, %v146
    %v1427 = vrot.slane %v1425, 1
    %v1428 = vrot.slane %v1425, 2
    %v1429 = vrot.slane %v1425, 3
    %v1430 = vrot.slane %v1425, 4
    %v1431 = vrot.slane %v1425, 5
    %v1432 = vrot.slane %v1425, 6
    %v1433 = vrot.slane %v1425, 7
    %v1434 = vperm.slane %v1425, 0
    %v1435 = vperm.slane %v1427, 0
    %v1436 = vperm.slane %v1428, 0
    %v1437 = vperm.slane %v1429, 0
    %v1438 = vperm.slane %v1430, 0
    %v1439 = vperm.slane %v1431, 0
    %v1440 = vperm.slane %v1432, 0
    %v1441 = vperm.slane %v1433, 0
    %v1450 = vadd.f32 %v207, %v1434
    %v1451 = vadd.f32 %v210, %v1435
    %v1452 = vadd.f32 %v213, %v1436
    %v1453 = vadd.f32 %v216, %v1437
    %v1454 = vadd.f32 %v219, %v1438
    %v1455 = vadd.f32 %v222, %v1439
    %v1456 = vadd.f32 %v225, %v1440
    %v1457 = vadd.f32 %v228, %v1441
    %v1458 = vtanh.pop %v1450
    %v1459 = vtanh.pop %v1451
    %v1460 = vtanh.pop %v1452
    %v1461 = vtanh.pop %v1453
    %v1462 = vtanh.pop %v1454
    %v1463 = vtanh.pop %v1455
    %v1464 = vtanh.pop %v1456
    %v1465 = vtanh.pop %v1457
    %v1466 = vmul.f32 %v1458, %v150
    %v1467 = vmul.f32 %v1459, %v150
    %v1468 = vmul.f32 %v1460, %v150
    %v1469 = vmul.f32 %v1461, %v150
    %v1470 = vmul.f32 %v1462, %v150
    %v1471 = vmul.f32 %v1463, %v150
    %v1472 = vmul.f32 %v1464, %v150
    %v1473 = vmul.f32 %v1465, %v150
    %v1474 = vsel %vm164, %v1466, 0.0
    %1475 = vadd.xlane.f32.xlu0 %v1474
    %v1476 = vpop.xlane.xlu0 %1475
    %v1477 = vsel %vm164, %v1467, 0.0
    %1478 = vadd.xlane.f32.xlu0 %v1477
    %v1479 = vpop.xlane.xlu0 %1478
    %v1480 = vsel %vm164, %v1468, 0.0
    %1481 = vadd.xlane.f32.xlu0 %v1480
    %v1482 = vpop.xlane.xlu0 %1481
    %v1483 = vsel %vm164, %v1469, 0.0
    %1484 = vadd.xlane.f32.xlu0 %v1483
    %v1485 = vpop.xlane.xlu0 %1484
    %v1486 = vsel %vm164, %v1470, 0.0
    %1487 = vadd.xlane.f32.xlu0 %v1486
    %v1488 = vpop.xlane.xlu0 %1487
    %v1489 = vsel %vm164, %v1471, 0.0
    %1490 = vadd.xlane.f32.xlu0 %v1489
    %v1491 = vpop.xlane.xlu0 %1490
    %v1492 = vsel %vm164, %v1472, 0.0
    %1493 = vadd.xlane.f32.xlu0 %v1492
    %v1494 = vpop.xlane.xlu0 %1493
    %v1495 = vsel %vm164, %v1473, 0.0
    %1496 = vadd.xlane.f32.xlu0 %v1495
    %v1497 = vpop.xlane.xlu0 %1496
    %v1506 = vperm.slane %v1476, %v355
    %v1507 = vperm.slane %v1479, %v355
    %v1508 = vperm.slane %v1482, %v355
    %v1509 = vperm.slane %v1485, %v355
    %v1510 = vperm.slane %v1488, %v355
    %v1511 = vperm.slane %v1491, %v355
    %v1512 = vperm.slane %v1494, %v355
    %v1513 = vperm.slane %v1497, %v355
    %v1514 = vsel %vm364, %v1507, %v1506
    %v1515 = vsel %vm366, %v1508, %v1514
    %v1516 = vsel %vm368, %v1509, %v1515
    %v1517 = vsel %vm370, %v1510, %v1516
    %v1518 = vsel %vm372, %v1511, %v1517
    %v1519 = vsel %vm374, %v1512, %v1518
    %v1520 = vsel %vm376, %v1513, %v1519
    %v1522 = vsel %vm379, %v1520, -inf
    %1523 = vmax.xlane.f32.xlu0 %v1522
    %v1524 = vpop.xlane.xlu0 %1523
    %v1526 = vperm.slane %v1524, 0
    %v1527 = vperm.slane %v1524, 1
    %v1528 = vperm.slane %v1524, 2
    %v1529 = vperm.slane %v1524, 3
    %v1530 = vperm.slane %v1524, 4
    %v1531 = vperm.slane %v1524, 5
    %v1532 = vperm.slane %v1524, 6
    %v1533 = vperm.slane %v1524, 7
    %v1542 = vsub.f32 %v1476, %v1526
    %v1543 = vsub.f32 %v1479, %v1527
    %v1544 = vsub.f32 %v1482, %v1528
    %v1545 = vsub.f32 %v1485, %v1529
    %v1546 = vsub.f32 %v1488, %v1530
    %v1547 = vsub.f32 %v1491, %v1531
    %v1548 = vsub.f32 %v1494, %v1532
    %v1549 = vsub.f32 %v1497, %v1533
    %v1550 = vmul.f32 %v1542, 1.442695
    %v1551 = vpow.pop %v1550
    %v1552 = vmul.f32 %v1543, 1.442695
    %v1553 = vpow.pop %v1552
    %v1554 = vmul.f32 %v1544, 1.442695
    %v1555 = vpow.pop %v1554
    %v1556 = vmul.f32 %v1545, 1.442695
    %v1557 = vpow.pop %v1556
    %v1558 = vmul.f32 %v1546, 1.442695
    %v1559 = vpow.pop %v1558
    %v1560 = vmul.f32 %v1547, 1.442695
    %v1561 = vpow.pop %v1560
    %v1562 = vmul.f32 %v1548, 1.442695
    %v1563 = vpow.pop %v1562
    %v1564 = vmul.f32 %v1549, 1.442695
    %v1565 = vpow.pop %v1564
    %1574 = vset.pattern.permute.xlu0 0
    %1575 = vperm.xlu0 %1574, %v1551
    %v1576 = vpop.permute.xlu0 %1575
    %1577 = vset.pattern.permute.xlu0 0
    %1578 = vperm.xlu0 %1577, %v1553
    %v1579 = vpop.permute.xlu0 %1578
    %1580 = vset.pattern.permute.xlu0 0
    %1581 = vperm.xlu0 %1580, %v1555
    %v1582 = vpop.permute.xlu0 %1581
    %1583 = vset.pattern.permute.xlu0 0
    %1584 = vperm.xlu0 %1583, %v1557
    %v1585 = vpop.permute.xlu0 %1584
    %1586 = vset.pattern.permute.xlu0 0
    %1587 = vperm.xlu0 %1586, %v1559
    %v1588 = vpop.permute.xlu0 %1587
    %1589 = vset.pattern.permute.xlu0 0
    %1590 = vperm.xlu0 %1589, %v1561
    %v1591 = vpop.permute.xlu0 %1590
    %1592 = vset.pattern.permute.xlu0 0
    %1593 = vperm.xlu0 %1592, %v1563
    %v1594 = vpop.permute.xlu0 %1593
    %1595 = vset.pattern.permute.xlu0 0
    %1596 = vperm.xlu0 %1595, %v1565
    %v1597 = vpop.permute.xlu0 %1596
    %v1598 = vperm.slane %v1576, %v355
    %v1599 = vperm.slane %v1579, %v355
    %v1600 = vperm.slane %v1582, %v355
    %v1601 = vperm.slane %v1585, %v355
    %v1602 = vperm.slane %v1588, %v355
    %v1603 = vperm.slane %v1591, %v355
    %v1604 = vperm.slane %v1594, %v355
    %v1605 = vperm.slane %v1597, %v355
    %v1606 = vsel %vm364, %v1599, %v1598
    %v1607 = vsel %vm366, %v1600, %v1606
    %v1608 = vsel %vm368, %v1601, %v1607
    %v1609 = vsel %vm370, %v1602, %v1608
    %v1610 = vsel %vm372, %v1603, %v1609
    %v1611 = vsel %vm374, %v1604, %v1610
    %v1612 = vsel %vm376, %v1605, %v1611
    %v1614 = vsel %vm379, %v1612, 0.0
    %1615 = vadd.xlane.f32.xlu0 %v1614
    %v1616 = vpop.xlane.xlu0 %1615
    %v1617 = vrcp.pop %v1616
    %v1619 = vperm.slane %v1617, 0
    %v1620 = vperm.slane %v1617, 1
    %v1621 = vperm.slane %v1617, 2
    %v1622 = vperm.slane %v1617, 3
    %v1623 = vperm.slane %v1617, 4
    %v1624 = vperm.slane %v1617, 5
    %v1625 = vperm.slane %v1617, 6
    %v1626 = vperm.slane %v1617, 7
    %v1635 = vmul.f32 %v1551, %v1619
    %v1636 = vmul.f32 %v1553, %v1620
    %v1637 = vmul.f32 %v1555, %v1621
    %v1638 = vmul.f32 %v1557, %v1622
    %v1639 = vmul.f32 %v1559, %v1623
    %v1640 = vmul.f32 %v1561, %v1624
    %v1641 = vmul.f32 %v1563, %v1625
    %v1642 = vmul.f32 %v1565, %v1626
    %1644 = vset.pattern.permute.xlu0 0
    %1645 = vperm.xlu0 %1644, %v1635
    %v1646 = vpop.permute.xlu0 %1645
    %1649 = vset.pattern.permute.xlu0 0
    %1650 = vperm.xlu0 %1649, %v1636
    %v1651 = vpop.permute.xlu0 %1650
    %1654 = vset.pattern.permute.xlu0 0
    %1655 = vperm.xlu0 %1654, %v1637
    %v1656 = vpop.permute.xlu0 %1655
    %1659 = vset.pattern.permute.xlu0 0
    %1660 = vperm.xlu0 %1659, %v1638
    %v1661 = vpop.permute.xlu0 %1660
    %1664 = vset.pattern.permute.xlu0 0
    %1665 = vperm.xlu0 %1664, %v1639
    %v1666 = vpop.permute.xlu0 %1665
    %1669 = vset.pattern.permute.xlu0 0
    %1670 = vperm.xlu0 %1669, %v1640
    %v1671 = vpop.permute.xlu0 %1670
    %1674 = vset.pattern.permute.xlu0 0
    %1675 = vperm.xlu0 %1674, %v1641
    %v1676 = vpop.permute.xlu0 %1675
    %1679 = vset.pattern.permute.xlu0 0
    %1680 = vperm.xlu0 %1679, %v1642
    %v1681 = vpop.permute.xlu0 %1680
    %v1683 = vmul.f32 %v1646, %v79
    %v1684 = vmul.f32 %v1651, %v80
    %v1685 = vmul.f32 %v1656, %v81
    %v1686 = vmul.f32 %v1661, %v82
    %v1687 = vmul.f32 %v1666, %v83
    %v1688 = vmul.f32 %v1671, %v84
    %v1689 = vmul.f32 %v1676, %v85
    %v1690 = vmul.f32 %v1681, %v86
    %v1691 = vsel %vm164, %v1683, 0.0
    %v1692 = vrot.slane %v1691, 4
    %v1693 = vadd.f32 %v1691, %v1692
    %v1694 = vrot.slane %v1693, 2
    %v1695 = vadd.f32 %v1693, %v1694
    %v1696 = vrot.slane %v1695, 1
    %v1697 = vadd.f32 %v1695, %v1696
    %v1698 = vsel %vm164, %v1684, 0.0
    %v1699 = vrot.slane %v1698, 4
    %v1700 = vadd.f32 %v1698, %v1699
    %v1701 = vrot.slane %v1700, 2
    %v1702 = vadd.f32 %v1700, %v1701
    %v1703 = vrot.slane %v1702, 1
    %v1704 = vadd.f32 %v1702, %v1703
    %v1705 = vsel %vm164, %v1685, 0.0
    %v1706 = vrot.slane %v1705, 4
    %v1707 = vadd.f32 %v1705, %v1706
    %v1708 = vrot.slane %v1707, 2
    %v1709 = vadd.f32 %v1707, %v1708
    %v1710 = vrot.slane %v1709, 1
    %v1711 = vadd.f32 %v1709, %v1710
    %v1712 = vsel %vm164, %v1686, 0.0
    %v1713 = vrot.slane %v1712, 4
    %v1714 = vadd.f32 %v1712, %v1713
    %v1715 = vrot.slane %v1714, 2
    %v1716 = vadd.f32 %v1714, %v1715
    %v1717 = vrot.slane %v1716, 1
    %v1718 = vadd.f32 %v1716, %v1717
    %v1719 = vsel %vm164, %v1687, 0.0
    %v1720 = vrot.slane %v1719, 4
    %v1721 = vadd.f32 %v1719, %v1720
    %v1722 = vrot.slane %v1721, 2
    %v1723 = vadd.f32 %v1721, %v1722
    %v1724 = vrot.slane %v1723, 1
    %v1725 = vadd.f32 %v1723, %v1724
    %v1726 = vsel %vm164, %v1688, 0.0
    %v1727 = vrot.slane %v1726, 4
    %v1728 = vadd.f32 %v1726, %v1727
    %v1729 = vrot.slane %v1728, 2
    %v1730 = vadd.f32 %v1728, %v1729
    %v1731 = vrot.slane %v1730, 1
    %v1732 = vadd.f32 %v1730, %v1731
    %v1733 = vsel %vm164, %v1689, 0.0
    %v1734 = vrot.slane %v1733, 4
    %v1735 = vadd.f32 %v1733, %v1734
    %v1736 = vrot.slane %v1735, 2
    %v1737 = vadd.f32 %v1735, %v1736
    %v1738 = vrot.slane %v1737, 1
    %v1739 = vadd.f32 %v1737, %v1738
    %v1740 = vsel %vm164, %v1690, 0.0
    %v1741 = vrot.slane %v1740, 4
    %v1742 = vadd.f32 %v1740, %v1741
    %v1743 = vrot.slane %v1742, 2
    %v1744 = vadd.f32 %v1742, %v1743
    %v1745 = vrot.slane %v1744, 1
    %v1746 = vadd.f32 %v1744, %v1745
    %v1755 = vsel %vm364, %v1704, %v1697
    %v1756 = vsel %vm366, %v1711, %v1755
    %v1757 = vsel %vm368, %v1718, %v1756
    %v1758 = vsel %vm370, %v1725, %v1757
    %v1759 = vsel %vm372, %v1732, %v1758
    %v1760 = vsel %vm374, %v1739, %v1759
    %v1761 = vsel %vm376, %v1746, %v1760
    %v1762 = vsel %vm164, %v1761, 0
    %1764 = vmatpush.msra.mxu0 0.0
    %1765 = vmatpush.msra.mxu0 0.0
    %1766 = vmatpush.msra.mxu0 0.0
    %1767 = vmatpush.msra.mxu0 0.0
    %1768 = vmatpush.msra.mxu0 0.0
    %1769 = vmatpush.msra.mxu0 0.0
    %1770 = vmatpush.msra.mxu0 0.0
    %1771 = vmatpush.msra.mxu0 0.0
    %1772 = vmatpush.msra.mxu0 0.0
    %1773 = vmatpush.msra.mxu0 0.0
    %1774 = vmatpush.msra.mxu0 0.0
    %1775 = vmatpush.msra.mxu0 0.0
    %1776 = vmatpush.msra.mxu0 %v110
    %1777 = vmatpush.msra.mxu0 %v109
    %1778 = vmatpush.msra.mxu0 %v108
    %1779 = vmatpush.msra.mxu0 %v107
    %1780 = vmatmul.f32.gmra.mxu0 %v1762
    %v1781 = vpop.f32.mrf.mxu0
    %v1782 = vadd.f32 %v89, %v1781
    %1783 = vdwg.mxu0
    %1785 = vset.pattern.permute.xlu0 0
    %1786 = vperm.xlu0 %1785, %v1782
    %v1787 = vpop.permute.xlu0 %1786
    %v1789 = vmul.f32 %v1787, %v648
    %1790 = vmatpush.msra.mxu0 0.0
    %1791 = vmatpush.msra.mxu0 0.0
    %1792 = vmatpush.msra.mxu0 0.0
    %1793 = vmatpush.msra.mxu0 0.0
    %1794 = vmatpush.msra.mxu0 0.0
    %1795 = vmatpush.msra.mxu0 0.0
    %1796 = vmatpush.msra.mxu0 0.0
    %1797 = vmatpush.msra.mxu0 0.0
    %1798 = vmatpush.msra.mxu0 0.0
    %1799 = vmatpush.msra.mxu0 0.0
    %1800 = vmatpush.msra.mxu0 0.0
    %1801 = vmatpush.msra.mxu0 0.0
    %1802 = vmatpush.msra.mxu0 %v118
    %1803 = vmatpush.msra.mxu0 %v117
    %1804 = vmatpush.msra.mxu0 %v116
    %1805 = vmatpush.msra.mxu0 %v115
    %1806 = vmatmul.f32.gmra.mxu0 %v1403
    %v1807 = vpop.f32.mrf.mxu0
    %v1808 = vadd.f32 0.0, %v1807
    %1809 = vdwg.mxu0
    %v1810 = vadd.f32 %v1789, %v1808
    %v1811 = vadd.f32 %v1810, %v153
    %v1812 = vxor.u32 %v1811, 2147483648
    %v1813 = vmul.f32 %v1812, 1.442695
    %v1814 = vpow.pop %v1813
    %v1815 = vadd.f32 %v1814, 1.0
    %v1816 = vrcp.pop %v1815
    %v1817 = vmul.f32 %v1815, %v1816
    %v1818 = vsub.f32 1.0, %v1817
    %v1819 = vmul.f32 %v1816, %v1818
    %v1820 = vadd.f32 %v1816, %v1819
    %vm1821 = vweird.f32 %v1815
    %vm1822 = vweird.f32 %v1816
    %vm1823 = vmor %vm1821, %vm1822
    %v1824 = vsel %vm1823, %v1816, %v1820
    %v1825 = vand.u32 2147483647, %v1815
    %vm1826 = vcmp.eq.f32.partialorder %v1825, 8.507059e+37
    %v1827 = vand.u32 %v1815, 2147483648
    %v1828 = vor.u32 1.1754944e-38, %v1827
    %v1829 = vsel %vm1826, %v1828, %v1824
    %v1830 = vmul.f32 1.0, %v1829
    %v1831 = vmul.f32 %v1787, %v693
    %1832 = vmatpush.msra.mxu0 0.0
    %1833 = vmatpush.msra.mxu0 0.0
    %1834 = vmatpush.msra.mxu0 0.0
    %1835 = vmatpush.msra.mxu0 0.0
    %1836 = vmatpush.msra.mxu0 0.0
    %1837 = vmatpush.msra.mxu0 0.0
    %1838 = vmatpush.msra.mxu0 0.0
    %1839 = vmatpush.msra.mxu0 0.0
    %1840 = vmatpush.msra.mxu0 0.0
    %1841 = vmatpush.msra.mxu0 0.0
    %1842 = vmatpush.msra.mxu0 0.0
    %1843 = vmatpush.msra.mxu0 0.0
    %1844 = vmatpush.msra.mxu0 %v122
    %1845 = vmatpush.msra.mxu0 %v121
    %1846 = vmatpush.msra.mxu0 %v120
    %1847 = vmatpush.msra.mxu0 %v119
    %1848 = vmatmul.f32.gmra.mxu0 %v1403
    %v1849 = vpop.f32.mrf.mxu0
    %v1850 = vadd.f32 0.0, %v1849
    %1851 = vdwg.mxu0
    %v1852 = vadd.f32 %v1831, %v1850
    %v1853 = vadd.f32 %v1852, %v156
    %v1854 = vxor.u32 %v1853, 2147483648
    %v1855 = vmul.f32 %v1854, 1.442695
    %v1856 = vpow.pop %v1855
    %v1857 = vadd.f32 %v1856, 1.0
    %v1858 = vrcp.pop %v1857
    %v1859 = vmul.f32 %v1857, %v1858
    %v1860 = vsub.f32 1.0, %v1859
    %v1861 = vmul.f32 %v1858, %v1860
    %v1862 = vadd.f32 %v1858, %v1861
    %vm1863 = vweird.f32 %v1857
    %vm1864 = vweird.f32 %v1858
    %vm1865 = vmor %vm1863, %vm1864
    %v1866 = vsel %vm1865, %v1858, %v1862
    %v1867 = vand.u32 2147483647, %v1857
    %vm1868 = vcmp.eq.f32.partialorder %v1867, 8.507059e+37
    %v1869 = vand.u32 %v1857, 2147483648
    %v1870 = vor.u32 1.1754944e-38, %v1869
    %v1871 = vsel %vm1868, %v1870, %v1866
    %v1872 = vmul.f32 1.0, %v1871
    %v1873 = vmul.f32 %v1787, %v738
    %1874 = vmatpush.msra.mxu0 0.0
    %1875 = vmatpush.msra.mxu0 0.0
    %1876 = vmatpush.msra.mxu0 0.0
    %1877 = vmatpush.msra.mxu0 0.0
    %1878 = vmatpush.msra.mxu0 0.0
    %1879 = vmatpush.msra.mxu0 0.0
    %1880 = vmatpush.msra.mxu0 0.0
    %1881 = vmatpush.msra.mxu0 0.0
    %1882 = vmatpush.msra.mxu0 0.0
    %1883 = vmatpush.msra.mxu0 0.0
    %1884 = vmatpush.msra.mxu0 0.0
    %1885 = vmatpush.msra.mxu0 0.0
    %1886 = vmatpush.msra.mxu0 %v126
    %1887 = vmatpush.msra.mxu0 %v125
    %1888 = vmatpush.msra.mxu0 %v124
    %1889 = vmatpush.msra.mxu0 %v123
    %1890 = vmatmul.f32.gmra.mxu0 %v1403
    %v1891 = vpop.f32.mrf.mxu0
    %v1892 = vadd.f32 0.0, %v1891
    %1893 = vdwg.mxu0
    %v1894 = vadd.f32 %v1873, %v1892
    %v1895 = vadd.f32 %v1894, %v159
    %v1896 = vtanh.pop %v1895
    %v1897 = vmul.f32 %v1787, %v765
    %1898 = vmatpush.msra.mxu0 0.0
    %1899 = vmatpush.msra.mxu0 0.0
    %1900 = vmatpush.msra.mxu0 0.0
    %1901 = vmatpush.msra.mxu0 0.0
    %1902 = vmatpush.msra.mxu0 0.0
    %1903 = vmatpush.msra.mxu0 0.0
    %1904 = vmatpush.msra.mxu0 0.0
    %1905 = vmatpush.msra.mxu0 0.0
    %1906 = vmatpush.msra.mxu0 0.0
    %1907 = vmatpush.msra.mxu0 0.0
    %1908 = vmatpush.msra.mxu0 0.0
    %1909 = vmatpush.msra.mxu0 0.0
    %1910 = vmatpush.msra.mxu0 %v130
    %1911 = vmatpush.msra.mxu0 %v129
    %1912 = vmatpush.msra.mxu0 %v128
    %1913 = vmatpush.msra.mxu0 %v127
    %1914 = vmatmul.f32.gmra.mxu0 %v1403
    %v1915 = vpop.f32.mrf.mxu0
    %v1916 = vadd.f32 0.0, %v1915
    %1917 = vdwg.mxu0
    %v1918 = vadd.f32 %v1897, %v1916
    %v1919 = vadd.f32 %v1918, %v162
    %v1920 = vxor.u32 %v1919, 2147483648
    %v1921 = vmul.f32 %v1920, 1.442695
    %v1922 = vpow.pop %v1921
    %v1923 = vadd.f32 %v1922, 1.0
    %v1924 = vrcp.pop %v1923
    %v1925 = vmul.f32 %v1923, %v1924
    %v1926 = vsub.f32 1.0, %v1925
    %v1927 = vmul.f32 %v1924, %v1926
    %v1928 = vadd.f32 %v1924, %v1927
    %vm1929 = vweird.f32 %v1923
    %vm1930 = vweird.f32 %v1924
    %vm1931 = vmor %vm1929, %vm1930
    %v1932 = vsel %vm1931, %v1924, %v1928
    %v1933 = vand.u32 2147483647, %v1923
    %vm1934 = vcmp.eq.f32.partialorder %v1933, 8.507059e+37
    %v1935 = vand.u32 %v1923, 2147483648
    %v1936 = vor.u32 1.1754944e-38, %v1935
    %v1937 = vsel %vm1934, %v1936, %v1932
    %v1938 = vmul.f32 1.0, %v1937
    %v1939 = vmul.f32 %v1872, %v1376
    %v1940 = vmul.f32 %v1830, %v1896
    %v1941 = vadd.f32 %v1939, %v1940
    %v1942 = vtanh.pop %v1941
    %v1943 = vmul.f32 %v1938, %v1942
    %v1945 = vsel %vm164, %v1941, 0
    %1947 = vmatpush.msra.mxu0 0.0
    %1948 = vmatpush.msra.mxu0 0.0
    %1949 = vmatpush.msra.mxu0 0.0
    %1950 = vmatpush.msra.mxu0 0.0
    %1951 = vmatpush.msra.mxu0 0.0
    %1952 = vmatpush.msra.mxu0 0.0
    %1953 = vmatpush.msra.mxu0 0.0
    %1954 = vmatpush.msra.mxu0 0.0
    %1955 = vmatpush.msra.mxu0 0.0
    %1956 = vmatpush.msra.mxu0 0.0
    %1957 = vmatpush.msra.mxu0 0.0
    %1958 = vmatpush.msra.mxu0 0.0
    %1959 = vmatpush.msra.mxu0 %v102
    %1960 = vmatpush.msra.mxu0 %v101
    %1961 = vmatpush.msra.mxu0 %v100
    %1962 = vmatpush.msra.mxu0 %v99
    %1963 = vmatmul.f32.gmra.mxu0 %v1945
    %v1964 = vpop.f32.mrf.mxu0
    %v1965 = vadd.f32 0.0, %v1964
    %1966 = vdwg.mxu0
    %v1968 = vsel %vm164, %v1943, 0
    %1970 = vmatpush.msra.mxu0 0.0
    %1971 = vmatpush.msra.mxu0 0.0
    %1972 = vmatpush.msra.mxu0 0.0
    %1973 = vmatpush.msra.mxu0 0.0
    %1974 = vmatpush.msra.mxu0 0.0
    %1975 = vmatpush.msra.mxu0 0.0
    %1976 = vmatpush.msra.mxu0 0.0
    %1977 = vmatpush.msra.mxu0 0.0
    %1978 = vmatpush.msra.mxu0 0.0
    %1979 = vmatpush.msra.mxu0 0.0
    %1980 = vmatpush.msra.mxu0 0.0
    %1981 = vmatpush.msra.mxu0 0.0
    %1982 = vmatpush.msra.mxu0 %v98
    %1983 = vmatpush.msra.mxu0 %v97
    %1984 = vmatpush.msra.mxu0 %v96
    %1985 = vmatpush.msra.mxu0 %v95
    %1986 = vmatmul.f32.gmra.mxu0 %v1968
    %v1987 = vpop.f32.mrf.mxu0
    %v1988 = vadd.f32 %v1965, %v1987
    %1989 = vdwg.mxu0
    %v1990 = vadd.f32 %v1988, %v146
    %v1992 = vrot.slane %v1990, 1
    %v1993 = vrot.slane %v1990, 2
    %v1994 = vrot.slane %v1990, 3
    %v1995 = vrot.slane %v1990, 4
    %v1996 = vrot.slane %v1990, 5
    %v1997 = vrot.slane %v1990, 6
    %v1998 = vrot.slane %v1990, 7
    %v1999 = vperm.slane %v1990, 0
    %v2000 = vperm.slane %v1992, 0
    %v2001 = vperm.slane %v1993, 0
    %v2002 = vperm.slane %v1994, 0
    %v2003 = vperm.slane %v1995, 0
    %v2004 = vperm.slane %v1996, 0
    %v2005 = vperm.slane %v1997, 0
    %v2006 = vperm.slane %v1998, 0
    %v2015 = vadd.f32 %v207, %v1999
    %v2016 = vadd.f32 %v210, %v2000
    %v2017 = vadd.f32 %v213, %v2001
    %v2018 = vadd.f32 %v216, %v2002
    %v2019 = vadd.f32 %v219, %v2003
    %v2020 = vadd.f32 %v222, %v2004
    %v2021 = vadd.f32 %v225, %v2005
    %v2022 = vadd.f32 %v228, %v2006
    %v2023 = vtanh.pop %v2015
    %v2024 = vtanh.pop %v2016
    %v2025 = vtanh.pop %v2017
    %v2026 = vtanh.pop %v2018
    %v2027 = vtanh.pop %v2019
    %v2028 = vtanh.pop %v2020
    %v2029 = vtanh.pop %v2021
    %v2030 = vtanh.pop %v2022
    %v2031 = vmul.f32 %v2023, %v150
    %v2032 = vmul.f32 %v2024, %v150
    %v2033 = vmul.f32 %v2025, %v150
    %v2034 = vmul.f32 %v2026, %v150
    %v2035 = vmul.f32 %v2027, %v150
    %v2036 = vmul.f32 %v2028, %v150
    %v2037 = vmul.f32 %v2029, %v150
    %v2038 = vmul.f32 %v2030, %v150
    %v2039 = vsel %vm164, %v2031, 0.0
    %2040 = vadd.xlane.f32.xlu0 %v2039
    %v2041 = vpop.xlane.xlu0 %2040
    %v2042 = vsel %vm164, %v2032, 0.0
    %2043 = vadd.xlane.f32.xlu0 %v2042
    %v2044 = vpop.xlane.xlu0 %2043
    %v2045 = vsel %vm164, %v2033, 0.0
    %2046 = vadd.xlane.f32.xlu0 %v2045
    %v2047 = vpop.xlane.xlu0 %2046
    %v2048 = vsel %vm164, %v2034, 0.0
    %2049 = vadd.xlane.f32.xlu0 %v2048
    %v2050 = vpop.xlane.xlu0 %2049
    %v2051 = vsel %vm164, %v2035, 0.0
    %2052 = vadd.xlane.f32.xlu0 %v2051
    %v2053 = vpop.xlane.xlu0 %2052
    %v2054 = vsel %vm164, %v2036, 0.0
    %2055 = vadd.xlane.f32.xlu0 %v2054
    %v2056 = vpop.xlane.xlu0 %2055
    %v2057 = vsel %vm164, %v2037, 0.0
    %2058 = vadd.xlane.f32.xlu0 %v2057
    %v2059 = vpop.xlane.xlu0 %2058
    %v2060 = vsel %vm164, %v2038, 0.0
    %2061 = vadd.xlane.f32.xlu0 %v2060
    %v2062 = vpop.xlane.xlu0 %2061
    %v2071 = vperm.slane %v2041, %v355
    %v2072 = vperm.slane %v2044, %v355
    %v2073 = vperm.slane %v2047, %v355
    %v2074 = vperm.slane %v2050, %v355
    %v2075 = vperm.slane %v2053, %v355
    %v2076 = vperm.slane %v2056, %v355
    %v2077 = vperm.slane %v2059, %v355
    %v2078 = vperm.slane %v2062, %v355
    %v2079 = vsel %vm364, %v2072, %v2071
    %v2080 = vsel %vm366, %v2073, %v2079
    %v2081 = vsel %vm368, %v2074, %v2080
    %v2082 = vsel %vm370, %v2075, %v2081
    %v2083 = vsel %vm372, %v2076, %v2082
    %v2084 = vsel %vm374, %v2077, %v2083
    %v2085 = vsel %vm376, %v2078, %v2084
    %v2087 = vsel %vm379, %v2085, -inf
    %2088 = vmax.xlane.f32.xlu0 %v2087
    %v2089 = vpop.xlane.xlu0 %2088
    %v2091 = vperm.slane %v2089, 0
    %v2092 = vperm.slane %v2089, 1
    %v2093 = vperm.slane %v2089, 2
    %v2094 = vperm.slane %v2089, 3
    %v2095 = vperm.slane %v2089, 4
    %v2096 = vperm.slane %v2089, 5
    %v2097 = vperm.slane %v2089, 6
    %v2098 = vperm.slane %v2089, 7
    %v2107 = vsub.f32 %v2041, %v2091
    %v2108 = vsub.f32 %v2044, %v2092
    %v2109 = vsub.f32 %v2047, %v2093
    %v2110 = vsub.f32 %v2050, %v2094
    %v2111 = vsub.f32 %v2053, %v2095
    %v2112 = vsub.f32 %v2056, %v2096
    %v2113 = vsub.f32 %v2059, %v2097
    %v2114 = vsub.f32 %v2062, %v2098
    %v2115 = vmul.f32 %v2107, 1.442695
    %v2116 = vpow.pop %v2115
    %v2117 = vmul.f32 %v2108, 1.442695
    %v2118 = vpow.pop %v2117
    %v2119 = vmul.f32 %v2109, 1.442695
    %v2120 = vpow.pop %v2119
    %v2121 = vmul.f32 %v2110, 1.442695
    %v2122 = vpow.pop %v2121
    %v2123 = vmul.f32 %v2111, 1.442695
    %v2124 = vpow.pop %v2123
    %v2125 = vmul.f32 %v2112, 1.442695
    %v2126 = vpow.pop %v2125
    %v2127 = vmul.f32 %v2113, 1.442695
    %v2128 = vpow.pop %v2127
    %v2129 = vmul.f32 %v2114, 1.442695
    %v2130 = vpow.pop %v2129
    %2139 = vset.pattern.permute.xlu0 0
    %2140 = vperm.xlu0 %2139, %v2116
    %v2141 = vpop.permute.xlu0 %2140
    %2142 = vset.pattern.permute.xlu0 0
    %2143 = vperm.xlu0 %2142, %v2118
    %v2144 = vpop.permute.xlu0 %2143
    %2145 = vset.pattern.permute.xlu0 0
    %2146 = vperm.xlu0 %2145, %v2120
    %v2147 = vpop.permute.xlu0 %2146
    %2148 = vset.pattern.permute.xlu0 0
    %2149 = vperm.xlu0 %2148, %v2122
    %v2150 = vpop.permute.xlu0 %2149
    %2151 = vset.pattern.permute.xlu0 0
    %2152 = vperm.xlu0 %2151, %v2124
    %v2153 = vpop.permute.xlu0 %2152
    %2154 = vset.pattern.permute.xlu0 0
    %2155 = vperm.xlu0 %2154, %v2126
    %v2156 = vpop.permute.xlu0 %2155
    %2157 = vset.pattern.permute.xlu0 0
    %2158 = vperm.xlu0 %2157, %v2128
    %v2159 = vpop.permute.xlu0 %2158
    %2160 = vset.pattern.permute.xlu0 0
    %2161 = vperm.xlu0 %2160, %v2130
    %v2162 = vpop.permute.xlu0 %2161
    %v2163 = vperm.slane %v2141, %v355
    %v2164 = vperm.slane %v2144, %v355
    %v2165 = vperm.slane %v2147, %v355
    %v2166 = vperm.slane %v2150, %v355
    %v2167 = vperm.slane %v2153, %v355
    %v2168 = vperm.slane %v2156, %v355
    %v2169 = vperm.slane %v2159, %v355
    %v2170 = vperm.slane %v2162, %v355
    %v2171 = vsel %vm364, %v2164, %v2163
    %v2172 = vsel %vm366, %v2165, %v2171
    %v2173 = vsel %vm368, %v2166, %v2172
    %v2174 = vsel %vm370, %v2167, %v2173
    %v2175 = vsel %vm372, %v2168, %v2174
    %v2176 = vsel %vm374, %v2169, %v2175
    %v2177 = vsel %vm376, %v2170, %v2176
    %v2179 = vsel %vm379, %v2177, 0.0
    %2180 = vadd.xlane.f32.xlu0 %v2179
    %v2181 = vpop.xlane.xlu0 %2180
    %v2182 = vrcp.pop %v2181
    %v2184 = vperm.slane %v2182, 0
    %v2185 = vperm.slane %v2182, 1
    %v2186 = vperm.slane %v2182, 2
    %v2187 = vperm.slane %v2182, 3
    %v2188 = vperm.slane %v2182, 4
    %v2189 = vperm.slane %v2182, 5
    %v2190 = vperm.slane %v2182, 6
    %v2191 = vperm.slane %v2182, 7
    %v2200 = vmul.f32 %v2116, %v2184
    %v2201 = vmul.f32 %v2118, %v2185
    %v2202 = vmul.f32 %v2120, %v2186
    %v2203 = vmul.f32 %v2122, %v2187
    %v2204 = vmul.f32 %v2124, %v2188
    %v2205 = vmul.f32 %v2126, %v2189
    %v2206 = vmul.f32 %v2128, %v2190
    %v2207 = vmul.f32 %v2130, %v2191
    %2209 = vset.pattern.permute.xlu0 0
    %2210 = vperm.xlu0 %2209, %v2200
    %v2211 = vpop.permute.xlu0 %2210
    %2214 = vset.pattern.permute.xlu0 0
    %2215 = vperm.xlu0 %2214, %v2201
    %v2216 = vpop.permute.xlu0 %2215
    %2219 = vset.pattern.permute.xlu0 0
    %2220 = vperm.xlu0 %2219, %v2202
    %v2221 = vpop.permute.xlu0 %2220
    %2224 = vset.pattern.permute.xlu0 0
    %2225 = vperm.xlu0 %2224, %v2203
    %v2226 = vpop.permute.xlu0 %2225
    %2229 = vset.pattern.permute.xlu0 0
    %2230 = vperm.xlu0 %2229, %v2204
    %v2231 = vpop.permute.xlu0 %2230
    %2234 = vset.pattern.permute.xlu0 0
    %2235 = vperm.xlu0 %2234, %v2205
    %v2236 = vpop.permute.xlu0 %2235
    %2239 = vset.pattern.permute.xlu0 0
    %2240 = vperm.xlu0 %2239, %v2206
    %v2241 = vpop.permute.xlu0 %2240
    %2244 = vset.pattern.permute.xlu0 0
    %2245 = vperm.xlu0 %2244, %v2207
    %v2246 = vpop.permute.xlu0 %2245
    %v2248 = vmul.f32 %v2211, %v79
    %v2249 = vmul.f32 %v2216, %v80
    %v2250 = vmul.f32 %v2221, %v81
    %v2251 = vmul.f32 %v2226, %v82
    %v2252 = vmul.f32 %v2231, %v83
    %v2253 = vmul.f32 %v2236, %v84
    %v2254 = vmul.f32 %v2241, %v85
    %v2255 = vmul.f32 %v2246, %v86
    %v2256 = vsel %vm164, %v2248, 0.0
    %v2257 = vrot.slane %v2256, 4
    %v2258 = vadd.f32 %v2256, %v2257
    %v2259 = vrot.slane %v2258, 2
    %v2260 = vadd.f32 %v2258, %v2259
    %v2261 = vrot.slane %v2260, 1
    %v2262 = vadd.f32 %v2260, %v2261
    %v2263 = vsel %vm164, %v2249, 0.0
    %v2264 = vrot.slane %v2263, 4
    %v2265 = vadd.f32 %v2263, %v2264
    %v2266 = vrot.slane %v2265, 2
    %v2267 = vadd.f32 %v2265, %v2266
    %v2268 = vrot.slane %v2267, 1
    %v2269 = vadd.f32 %v2267, %v2268
    %v2270 = vsel %vm164, %v2250, 0.0
    %v2271 = vrot.slane %v2270, 4
    %v2272 = vadd.f32 %v2270, %v2271
    %v2273 = vrot.slane %v2272, 2
    %v2274 = vadd.f32 %v2272, %v2273
    %v2275 = vrot.slane %v2274, 1
    %v2276 = vadd.f32 %v2274, %v2275
    %v2277 = vsel %vm164, %v2251, 0.0
    %v2278 = vrot.slane %v2277, 4
    %v2279 = vadd.f32 %v2277, %v2278
    %v2280 = vrot.slane %v2279, 2
    %v2281 = vadd.f32 %v2279, %v2280
    %v2282 = vrot.slane %v2281, 1
    %v2283 = vadd.f32 %v2281, %v2282
    %v2284 = vsel %vm164, %v2252, 0.0
    %v2285 = vrot.slane %v2284, 4
    %v2286 = vadd.f32 %v2284, %v2285
    %v2287 = vrot.slane %v2286, 2
    %v2288 = vadd.f32 %v2286, %v2287
    %v2289 = vrot.slane %v2288, 1
    %v2290 = vadd.f32 %v2288, %v2289
    %v2291 = vsel %vm164, %v2253, 0.0
    %v2292 = vrot.slane %v2291, 4
    %v2293 = vadd.f32 %v2291, %v2292
    %v2294 = vrot.slane %v2293, 2
    %v2295 = vadd.f32 %v2293, %v2294
    %v2296 = vrot.slane %v2295, 1
    %v2297 = vadd.f32 %v2295, %v2296
    %v2298 = vsel %vm164, %v2254, 0.0
    %v2299 = vrot.slane %v2298, 4
    %v2300 = vadd.f32 %v2298, %v2299
    %v2301 = vrot.slane %v2300, 2
    %v2302 = vadd.f32 %v2300, %v2301
    %v2303 = vrot.slane %v2302, 1
    %v2304 = vadd.f32 %v2302, %v2303
    %v2305 = vsel %vm164, %v2255, 0.0
    %v2306 = vrot.slane %v2305, 4
    %v2307 = vadd.f32 %v2305, %v2306
    %v2308 = vrot.slane %v2307, 2
    %v2309 = vadd.f32 %v2307, %v2308
    %v2310 = vrot.slane %v2309, 1
    %v2311 = vadd.f32 %v2309, %v2310
    %v2320 = vsel %vm364, %v2269, %v2262
    %v2321 = vsel %vm366, %v2276, %v2320
    %v2322 = vsel %vm368, %v2283, %v2321
    %v2323 = vsel %vm370, %v2290, %v2322
    %v2324 = vsel %vm372, %v2297, %v2323
    %v2325 = vsel %vm374, %v2304, %v2324
    %v2326 = vsel %vm376, %v2311, %v2325
    %v2327 = vsel %vm164, %v2326, 0
    %2329 = vmatpush.msra.mxu0 0.0
    %2330 = vmatpush.msra.mxu0 0.0
    %2331 = vmatpush.msra.mxu0 0.0
    %2332 = vmatpush.msra.mxu0 0.0
    %2333 = vmatpush.msra.mxu0 0.0
    %2334 = vmatpush.msra.mxu0 0.0
    %2335 = vmatpush.msra.mxu0 0.0
    %2336 = vmatpush.msra.mxu0 0.0
    %2337 = vmatpush.msra.mxu0 0.0
    %2338 = vmatpush.msra.mxu0 0.0
    %2339 = vmatpush.msra.mxu0 0.0
    %2340 = vmatpush.msra.mxu0 0.0
    %2341 = vmatpush.msra.mxu0 %v110
    %2342 = vmatpush.msra.mxu0 %v109
    %2343 = vmatpush.msra.mxu0 %v108
    %2344 = vmatpush.msra.mxu0 %v107
    %2345 = vmatmul.f32.gmra.mxu0 %v2327
    %v2346 = vpop.f32.mrf.mxu0
    %v2347 = vadd.f32 %v90, %v2346
    %2348 = vdwg.mxu0
    %2350 = vset.pattern.permute.xlu0 0
    %2351 = vperm.xlu0 %2350, %v2347
    %v2352 = vpop.permute.xlu0 %2351
    %v2354 = vmul.f32 %v2352, %v648
    %2355 = vmatpush.msra.mxu0 0.0
    %2356 = vmatpush.msra.mxu0 0.0
    %2357 = vmatpush.msra.mxu0 0.0
    %2358 = vmatpush.msra.mxu0 0.0
    %2359 = vmatpush.msra.mxu0 0.0
    %2360 = vmatpush.msra.mxu0 0.0
    %2361 = vmatpush.msra.mxu0 0.0
    %2362 = vmatpush.msra.mxu0 0.0
    %2363 = vmatpush.msra.mxu0 0.0
    %2364 = vmatpush.msra.mxu0 0.0
    %2365 = vmatpush.msra.mxu0 0.0
    %2366 = vmatpush.msra.mxu0 0.0
    %2367 = vmatpush.msra.mxu0 %v118
    %2368 = vmatpush.msra.mxu0 %v117
    %2369 = vmatpush.msra.mxu0 %v116
    %2370 = vmatpush.msra.mxu0 %v115
    %2371 = vmatmul.f32.gmra.mxu0 %v1968
    %v2372 = vpop.f32.mrf.mxu0
    %v2373 = vadd.f32 0.0, %v2372
    %2374 = vdwg.mxu0
    %v2375 = vadd.f32 %v2354, %v2373
    %v2376 = vadd.f32 %v2375, %v153
    %v2377 = vxor.u32 %v2376, 2147483648
    %v2378 = vmul.f32 %v2377, 1.442695
    %v2379 = vpow.pop %v2378
    %v2380 = vadd.f32 %v2379, 1.0
    %v2381 = vrcp.pop %v2380
    %v2382 = vmul.f32 %v2380, %v2381
    %v2383 = vsub.f32 1.0, %v2382
    %v2384 = vmul.f32 %v2381, %v2383
    %v2385 = vadd.f32 %v2381, %v2384
    %vm2386 = vweird.f32 %v2380
    %vm2387 = vweird.f32 %v2381
    %vm2388 = vmor %vm2386, %vm2387
    %v2389 = vsel %vm2388, %v2381, %v2385
    %v2390 = vand.u32 2147483647, %v2380
    %vm2391 = vcmp.eq.f32.partialorder %v2390, 8.507059e+37
    %v2392 = vand.u32 %v2380, 2147483648
    %v2393 = vor.u32 1.1754944e-38, %v2392
    %v2394 = vsel %vm2391, %v2393, %v2389
    %v2395 = vmul.f32 1.0, %v2394
    %v2396 = vmul.f32 %v2352, %v693
    %2397 = vmatpush.msra.mxu0 0.0
    %2398 = vmatpush.msra.mxu0 0.0
    %2399 = vmatpush.msra.mxu0 0.0
    %2400 = vmatpush.msra.mxu0 0.0
    %2401 = vmatpush.msra.mxu0 0.0
    %2402 = vmatpush.msra.mxu0 0.0
    %2403 = vmatpush.msra.mxu0 0.0
    %2404 = vmatpush.msra.mxu0 0.0
    %2405 = vmatpush.msra.mxu0 0.0
    %2406 = vmatpush.msra.mxu0 0.0
    %2407 = vmatpush.msra.mxu0 0.0
    %2408 = vmatpush.msra.mxu0 0.0
    %2409 = vmatpush.msra.mxu0 %v122
    %2410 = vmatpush.msra.mxu0 %v121
    %2411 = vmatpush.msra.mxu0 %v120
    %2412 = vmatpush.msra.mxu0 %v119
    %2413 = vmatmul.f32.gmra.mxu0 %v1968
    %v2414 = vpop.f32.mrf.mxu0
    %v2415 = vadd.f32 0.0, %v2414
    %2416 = vdwg.mxu0
    %v2417 = vadd.f32 %v2396, %v2415
    %v2418 = vadd.f32 %v2417, %v156
    %v2419 = vxor.u32 %v2418, 2147483648
    %v2420 = vmul.f32 %v2419, 1.442695
    %v2421 = vpow.pop %v2420
    %v2422 = vadd.f32 %v2421, 1.0
    %v2423 = vrcp.pop %v2422
    %v2424 = vmul.f32 %v2422, %v2423
    %v2425 = vsub.f32 1.0, %v2424
    %v2426 = vmul.f32 %v2423, %v2425
    %v2427 = vadd.f32 %v2423, %v2426
    %vm2428 = vweird.f32 %v2422
    %vm2429 = vweird.f32 %v2423
    %vm2430 = vmor %vm2428, %vm2429
    %v2431 = vsel %vm2430, %v2423, %v2427
    %v2432 = vand.u32 2147483647, %v2422
    %vm2433 = vcmp.eq.f32.partialorder %v2432, 8.507059e+37
    %v2434 = vand.u32 %v2422, 2147483648
    %v2435 = vor.u32 1.1754944e-38, %v2434
    %v2436 = vsel %vm2433, %v2435, %v2431
    %v2437 = vmul.f32 1.0, %v2436
    %v2438 = vmul.f32 %v2352, %v738
    %2439 = vmatpush.msra.mxu0 0.0
    %2440 = vmatpush.msra.mxu0 0.0
    %2441 = vmatpush.msra.mxu0 0.0
    %2442 = vmatpush.msra.mxu0 0.0
    %2443 = vmatpush.msra.mxu0 0.0
    %2444 = vmatpush.msra.mxu0 0.0
    %2445 = vmatpush.msra.mxu0 0.0
    %2446 = vmatpush.msra.mxu0 0.0
    %2447 = vmatpush.msra.mxu0 0.0
    %2448 = vmatpush.msra.mxu0 0.0
    %2449 = vmatpush.msra.mxu0 0.0
    %2450 = vmatpush.msra.mxu0 0.0
    %2451 = vmatpush.msra.mxu0 %v126
    %2452 = vmatpush.msra.mxu0 %v125
    %2453 = vmatpush.msra.mxu0 %v124
    %2454 = vmatpush.msra.mxu0 %v123
    %2455 = vmatmul.f32.gmra.mxu0 %v1968
    %v2456 = vpop.f32.mrf.mxu0
    %v2457 = vadd.f32 0.0, %v2456
    %2458 = vdwg.mxu0
    %v2459 = vadd.f32 %v2438, %v2457
    %v2460 = vadd.f32 %v2459, %v159
    %v2461 = vtanh.pop %v2460
    %v2462 = vmul.f32 %v2352, %v765
    %2463 = vmatpush.msra.mxu0 0.0
    %2464 = vmatpush.msra.mxu0 0.0
    %2465 = vmatpush.msra.mxu0 0.0
    %2466 = vmatpush.msra.mxu0 0.0
    %2467 = vmatpush.msra.mxu0 0.0
    %2468 = vmatpush.msra.mxu0 0.0
    %2469 = vmatpush.msra.mxu0 0.0
    %2470 = vmatpush.msra.mxu0 0.0
    %2471 = vmatpush.msra.mxu0 0.0
    %2472 = vmatpush.msra.mxu0 0.0
    %2473 = vmatpush.msra.mxu0 0.0
    %2474 = vmatpush.msra.mxu0 0.0
    %2475 = vmatpush.msra.mxu0 %v130
    %2476 = vmatpush.msra.mxu0 %v129
    %2477 = vmatpush.msra.mxu0 %v128
    %2478 = vmatpush.msra.mxu0 %v127
    %2479 = vmatmul.f32.gmra.mxu0 %v1968
    %v2480 = vpop.f32.mrf.mxu0
    %v2481 = vadd.f32 0.0, %v2480
    %2482 = vdwg.mxu0
    %v2483 = vadd.f32 %v2462, %v2481
    %v2484 = vadd.f32 %v2483, %v162
    %v2485 = vxor.u32 %v2484, 2147483648
    %v2486 = vmul.f32 %v2485, 1.442695
    %v2487 = vpow.pop %v2486
    %v2488 = vadd.f32 %v2487, 1.0
    %v2489 = vrcp.pop %v2488
    %v2490 = vmul.f32 %v2488, %v2489
    %v2491 = vsub.f32 1.0, %v2490
    %v2492 = vmul.f32 %v2489, %v2491
    %v2493 = vadd.f32 %v2489, %v2492
    %vm2494 = vweird.f32 %v2488
    %vm2495 = vweird.f32 %v2489
    %vm2496 = vmor %vm2494, %vm2495
    %v2497 = vsel %vm2496, %v2489, %v2493
    %v2498 = vand.u32 2147483647, %v2488
    %vm2499 = vcmp.eq.f32.partialorder %v2498, 8.507059e+37
    %v2500 = vand.u32 %v2488, 2147483648
    %v2501 = vor.u32 1.1754944e-38, %v2500
    %v2502 = vsel %vm2499, %v2501, %v2497
    %v2503 = vmul.f32 1.0, %v2502
    %v2504 = vmul.f32 %v2437, %v1941
    %v2505 = vmul.f32 %v2395, %v2461
    %v2506 = vadd.f32 %v2504, %v2505
    %v2507 = vtanh.pop %v2506
    %v2508 = vmul.f32 %v2503, %v2507
    %v2510 = vsel %vm164, %v2506, 0
    %2512 = vmatpush.msra.mxu0 0.0
    %2513 = vmatpush.msra.mxu0 0.0
    %2514 = vmatpush.msra.mxu0 0.0
    %2515 = vmatpush.msra.mxu0 0.0
    %2516 = vmatpush.msra.mxu0 0.0
    %2517 = vmatpush.msra.mxu0 0.0
    %2518 = vmatpush.msra.mxu0 0.0
    %2519 = vmatpush.msra.mxu0 0.0
    %2520 = vmatpush.msra.mxu0 0.0
    %2521 = vmatpush.msra.mxu0 0.0
    %2522 = vmatpush.msra.mxu0 0.0
    %2523 = vmatpush.msra.mxu0 0.0
    %2524 = vmatpush.msra.mxu0 %v102
    %2525 = vmatpush.msra.mxu0 %v101
    %2526 = vmatpush.msra.mxu0 %v100
    %2527 = vmatpush.msra.mxu0 %v99
    %2528 = vmatmul.f32.gmra.mxu0 %v2510
    %v2529 = vpop.f32.mrf.mxu0
    %v2530 = vadd.f32 0.0, %v2529
    %2531 = vdwg.mxu0
    %v2533 = vsel %vm164, %v2508, 0
    %2535 = vmatpush.msra.mxu0 0.0
    %2536 = vmatpush.msra.mxu0 0.0
    %2537 = vmatpush.msra.mxu0 0.0
    %2538 = vmatpush.msra.mxu0 0.0
    %2539 = vmatpush.msra.mxu0 0.0
    %2540 = vmatpush.msra.mxu0 0.0
    %2541 = vmatpush.msra.mxu0 0.0
    %2542 = vmatpush.msra.mxu0 0.0
    %2543 = vmatpush.msra.mxu0 0.0
    %2544 = vmatpush.msra.mxu0 0.0
    %2545 = vmatpush.msra.mxu0 0.0
    %2546 = vmatpush.msra.mxu0 0.0
    %2547 = vmatpush.msra.mxu0 %v98
    %2548 = vmatpush.msra.mxu0 %v97
    %2549 = vmatpush.msra.mxu0 %v96
    %2550 = vmatpush.msra.mxu0 %v95
    %2551 = vmatmul.f32.gmra.mxu0 %v2533
    %v2552 = vpop.f32.mrf.mxu0
    %v2553 = vadd.f32 %v2530, %v2552
    %2554 = vdwg.mxu0
    %v2555 = vadd.f32 %v2553, %v146
    %v2557 = vrot.slane %v2555, 1
    %v2558 = vrot.slane %v2555, 2
    %v2559 = vrot.slane %v2555, 3
    %v2560 = vrot.slane %v2555, 4
    %v2561 = vrot.slane %v2555, 5
    %v2562 = vrot.slane %v2555, 6
    %v2563 = vrot.slane %v2555, 7
    %v2564 = vperm.slane %v2555, 0
    %v2565 = vperm.slane %v2557, 0
    %v2566 = vperm.slane %v2558, 0
    %v2567 = vperm.slane %v2559, 0
    %v2568 = vperm.slane %v2560, 0
    %v2569 = vperm.slane %v2561, 0
    %v2570 = vperm.slane %v2562, 0
    %v2571 = vperm.slane %v2563, 0
    %v2580 = vadd.f32 %v207, %v2564
    %v2581 = vadd.f32 %v210, %v2565
    %v2582 = vadd.f32 %v213, %v2566
    %v2583 = vadd.f32 %v216, %v2567
    %v2584 = vadd.f32 %v219, %v2568
    %v2585 = vadd.f32 %v222, %v2569
    %v2586 = vadd.f32 %v225, %v2570
    %v2587 = vadd.f32 %v228, %v2571
    %v2588 = vtanh.pop %v2580
    %v2589 = vtanh.pop %v2581
    %v2590 = vtanh.pop %v2582
    %v2591 = vtanh.pop %v2583
    %v2592 = vtanh.pop %v2584
    %v2593 = vtanh.pop %v2585
    %v2594 = vtanh.pop %v2586
    %v2595 = vtanh.pop %v2587
    %v2596 = vmul.f32 %v2588, %v150
    %v2597 = vmul.f32 %v2589, %v150
    %v2598 = vmul.f32 %v2590, %v150
    %v2599 = vmul.f32 %v2591, %v150
    %v2600 = vmul.f32 %v2592, %v150
    %v2601 = vmul.f32 %v2593, %v150
    %v2602 = vmul.f32 %v2594, %v150
    %v2603 = vmul.f32 %v2595, %v150
    %v2604 = vsel %vm164, %v2596, 0.0
    %2605 = vadd.xlane.f32.xlu0 %v2604
    %v2606 = vpop.xlane.xlu0 %2605
    %v2607 = vsel %vm164, %v2597, 0.0
    %2608 = vadd.xlane.f32.xlu0 %v2607
    %v2609 = vpop.xlane.xlu0 %2608
    %v2610 = vsel %vm164, %v2598, 0.0
    %2611 = vadd.xlane.f32.xlu0 %v2610
    %v2612 = vpop.xlane.xlu0 %2611
    %v2613 = vsel %vm164, %v2599, 0.0
    %2614 = vadd.xlane.f32.xlu0 %v2613
    %v2615 = vpop.xlane.xlu0 %2614
    %v2616 = vsel %vm164, %v2600, 0.0
    %2617 = vadd.xlane.f32.xlu0 %v2616
    %v2618 = vpop.xlane.xlu0 %2617
    %v2619 = vsel %vm164, %v2601, 0.0
    %2620 = vadd.xlane.f32.xlu0 %v2619
    %v2621 = vpop.xlane.xlu0 %2620
    %v2622 = vsel %vm164, %v2602, 0.0
    %2623 = vadd.xlane.f32.xlu0 %v2622
    %v2624 = vpop.xlane.xlu0 %2623
    %v2625 = vsel %vm164, %v2603, 0.0
    %2626 = vadd.xlane.f32.xlu0 %v2625
    %v2627 = vpop.xlane.xlu0 %2626
    %v2636 = vperm.slane %v2606, %v355
    %v2637 = vperm.slane %v2609, %v355
    %v2638 = vperm.slane %v2612, %v355
    %v2639 = vperm.slane %v2615, %v355
    %v2640 = vperm.slane %v2618, %v355
    %v2641 = vperm.slane %v2621, %v355
    %v2642 = vperm.slane %v2624, %v355
    %v2643 = vperm.slane %v2627, %v355
    %v2644 = vsel %vm364, %v2637, %v2636
    %v2645 = vsel %vm366, %v2638, %v2644
    %v2646 = vsel %vm368, %v2639, %v2645
    %v2647 = vsel %vm370, %v2640, %v2646
    %v2648 = vsel %vm372, %v2641, %v2647
    %v2649 = vsel %vm374, %v2642, %v2648
    %v2650 = vsel %vm376, %v2643, %v2649
    %v2652 = vsel %vm379, %v2650, -inf
    %2653 = vmax.xlane.f32.xlu0 %v2652
    %v2654 = vpop.xlane.xlu0 %2653
    %v2656 = vperm.slane %v2654, 0
    %v2657 = vperm.slane %v2654, 1
    %v2658 = vperm.slane %v2654, 2
    %v2659 = vperm.slane %v2654, 3
    %v2660 = vperm.slane %v2654, 4
    %v2661 = vperm.slane %v2654, 5
    %v2662 = vperm.slane %v2654, 6
    %v2663 = vperm.slane %v2654, 7
    %v2672 = vsub.f32 %v2606, %v2656
    %v2673 = vsub.f32 %v2609, %v2657
    %v2674 = vsub.f32 %v2612, %v2658
    %v2675 = vsub.f32 %v2615, %v2659
    %v2676 = vsub.f32 %v2618, %v2660
    %v2677 = vsub.f32 %v2621, %v2661
    %v2678 = vsub.f32 %v2624, %v2662
    %v2679 = vsub.f32 %v2627, %v2663
    %v2680 = vmul.f32 %v2672, 1.442695
    %v2681 = vpow.pop %v2680
    %v2682 = vmul.f32 %v2673, 1.442695
    %v2683 = vpow.pop %v2682
    %v2684 = vmul.f32 %v2674, 1.442695
    %v2685 = vpow.pop %v2684
    %v2686 = vmul.f32 %v2675, 1.442695
    %v2687 = vpow.pop %v2686
    %v2688 = vmul.f32 %v2676, 1.442695
    %v2689 = vpow.pop %v2688
    %v2690 = vmul.f32 %v2677, 1.442695
    %v2691 = vpow.pop %v2690
    %v2692 = vmul.f32 %v2678, 1.442695
    %v2693 = vpow.pop %v2692
    %v2694 = vmul.f32 %v2679, 1.442695
    %v2695 = vpow.pop %v2694
    %2704 = vset.pattern.permute.xlu0 0
    %2705 = vperm.xlu0 %2704, %v2681
    %v2706 = vpop.permute.xlu0 %2705
    %2707 = vset.pattern.permute.xlu0 0
    %2708 = vperm.xlu0 %2707, %v2683
    %v2709 = vpop.permute.xlu0 %2708
    %2710 = vset.pattern.permute.xlu0 0
    %2711 = vperm.xlu0 %2710, %v2685
    %v2712 = vpop.permute.xlu0 %2711
    %2713 = vset.pattern.permute.xlu0 0
    %2714 = vperm.xlu0 %2713, %v2687
    %v2715 = vpop.permute.xlu0 %2714
    %2716 = vset.pattern.permute.xlu0 0
    %2717 = vperm.xlu0 %2716, %v2689
    %v2718 = vpop.permute.xlu0 %2717
    %2719 = vset.pattern.permute.xlu0 0
    %2720 = vperm.xlu0 %2719, %v2691
    %v2721 = vpop.permute.xlu0 %2720
    %2722 = vset.pattern.permute.xlu0 0
    %2723 = vperm.xlu0 %2722, %v2693
    %v2724 = vpop.permute.xlu0 %2723
    %2725 = vset.pattern.permute.xlu0 0
    %2726 = vperm.xlu0 %2725, %v2695
    %v2727 = vpop.permute.xlu0 %2726
    %v2728 = vperm.slane %v2706, %v355
    %v2729 = vperm.slane %v2709, %v355
    %v2730 = vperm.slane %v2712, %v355
    %v2731 = vperm.slane %v2715, %v355
    %v2732 = vperm.slane %v2718, %v355
    %v2733 = vperm.slane %v2721, %v355
    %v2734 = vperm.slane %v2724, %v355
    %v2735 = vperm.slane %v2727, %v355
    %v2736 = vsel %vm364, %v2729, %v2728
    %v2737 = vsel %vm366, %v2730, %v2736
    %v2738 = vsel %vm368, %v2731, %v2737
    %v2739 = vsel %vm370, %v2732, %v2738
    %v2740 = vsel %vm372, %v2733, %v2739
    %v2741 = vsel %vm374, %v2734, %v2740
    %v2742 = vsel %vm376, %v2735, %v2741
    %v2744 = vsel %vm379, %v2742, 0.0
    %2745 = vadd.xlane.f32.xlu0 %v2744
    %v2746 = vpop.xlane.xlu0 %2745
    %v2747 = vrcp.pop %v2746
    %v2749 = vperm.slane %v2747, 0
    %v2750 = vperm.slane %v2747, 1
    %v2751 = vperm.slane %v2747, 2
    %v2752 = vperm.slane %v2747, 3
    %v2753 = vperm.slane %v2747, 4
    %v2754 = vperm.slane %v2747, 5
    %v2755 = vperm.slane %v2747, 6
    %v2756 = vperm.slane %v2747, 7
    %v2765 = vmul.f32 %v2681, %v2749
    %v2766 = vmul.f32 %v2683, %v2750
    %v2767 = vmul.f32 %v2685, %v2751
    %v2768 = vmul.f32 %v2687, %v2752
    %v2769 = vmul.f32 %v2689, %v2753
    %v2770 = vmul.f32 %v2691, %v2754
    %v2771 = vmul.f32 %v2693, %v2755
    %v2772 = vmul.f32 %v2695, %v2756
    %2774 = vset.pattern.permute.xlu0 0
    %2775 = vperm.xlu0 %2774, %v2765
    %v2776 = vpop.permute.xlu0 %2775
    %2779 = vset.pattern.permute.xlu0 0
    %2780 = vperm.xlu0 %2779, %v2766
    %v2781 = vpop.permute.xlu0 %2780
    %2784 = vset.pattern.permute.xlu0 0
    %2785 = vperm.xlu0 %2784, %v2767
    %v2786 = vpop.permute.xlu0 %2785
    %2789 = vset.pattern.permute.xlu0 0
    %2790 = vperm.xlu0 %2789, %v2768
    %v2791 = vpop.permute.xlu0 %2790
    %2794 = vset.pattern.permute.xlu0 0
    %2795 = vperm.xlu0 %2794, %v2769
    %v2796 = vpop.permute.xlu0 %2795
    %2799 = vset.pattern.permute.xlu0 0
    %2800 = vperm.xlu0 %2799, %v2770
    %v2801 = vpop.permute.xlu0 %2800
    %2804 = vset.pattern.permute.xlu0 0
    %2805 = vperm.xlu0 %2804, %v2771
    %v2806 = vpop.permute.xlu0 %2805
    %2809 = vset.pattern.permute.xlu0 0
    %2810 = vperm.xlu0 %2809, %v2772
    %v2811 = vpop.permute.xlu0 %2810
    %v2813 = vmul.f32 %v2776, %v79
    %v2814 = vmul.f32 %v2781, %v80
    %v2815 = vmul.f32 %v2786, %v81
    %v2816 = vmul.f32 %v2791, %v82
    %v2817 = vmul.f32 %v2796, %v83
    %v2818 = vmul.f32 %v2801, %v84
    %v2819 = vmul.f32 %v2806, %v85
    %v2820 = vmul.f32 %v2811, %v86
    %v2821 = vsel %vm164, %v2813, 0.0
    %v2822 = vrot.slane %v2821, 4
    %v2823 = vadd.f32 %v2821, %v2822
    %v2824 = vrot.slane %v2823, 2
    %v2825 = vadd.f32 %v2823, %v2824
    %v2826 = vrot.slane %v2825, 1
    %v2827 = vadd.f32 %v2825, %v2826
    %v2828 = vsel %vm164, %v2814, 0.0
    %v2829 = vrot.slane %v2828, 4
    %v2830 = vadd.f32 %v2828, %v2829
    %v2831 = vrot.slane %v2830, 2
    %v2832 = vadd.f32 %v2830, %v2831
    %v2833 = vrot.slane %v2832, 1
    %v2834 = vadd.f32 %v2832, %v2833
    %v2835 = vsel %vm164, %v2815, 0.0
    %v2836 = vrot.slane %v2835, 4
    %v2837 = vadd.f32 %v2835, %v2836
    %v2838 = vrot.slane %v2837, 2
    %v2839 = vadd.f32 %v2837, %v2838
    %v2840 = vrot.slane %v2839, 1
    %v2841 = vadd.f32 %v2839, %v2840
    %v2842 = vsel %vm164, %v2816, 0.0
    %v2843 = vrot.slane %v2842, 4
    %v2844 = vadd.f32 %v2842, %v2843
    %v2845 = vrot.slane %v2844, 2
    %v2846 = vadd.f32 %v2844, %v2845
    %v2847 = vrot.slane %v2846, 1
    %v2848 = vadd.f32 %v2846, %v2847
    %v2849 = vsel %vm164, %v2817, 0.0
    %v2850 = vrot.slane %v2849, 4
    %v2851 = vadd.f32 %v2849, %v2850
    %v2852 = vrot.slane %v2851, 2
    %v2853 = vadd.f32 %v2851, %v2852
    %v2854 = vrot.slane %v2853, 1
    %v2855 = vadd.f32 %v2853, %v2854
    %v2856 = vsel %vm164, %v2818, 0.0
    %v2857 = vrot.slane %v2856, 4
    %v2858 = vadd.f32 %v2856, %v2857
    %v2859 = vrot.slane %v2858, 2
    %v2860 = vadd.f32 %v2858, %v2859
    %v2861 = vrot.slane %v2860, 1
    %v2862 = vadd.f32 %v2860, %v2861
    %v2863 = vsel %vm164, %v2819, 0.0
    %v2864 = vrot.slane %v2863, 4
    %v2865 = vadd.f32 %v2863, %v2864
    %v2866 = vrot.slane %v2865, 2
    %v2867 = vadd.f32 %v2865, %v2866
    %v2868 = vrot.slane %v2867, 1
    %v2869 = vadd.f32 %v2867, %v2868
    %v2870 = vsel %vm164, %v2820, 0.0
    %v2871 = vrot.slane %v2870, 4
    %v2872 = vadd.f32 %v2870, %v2871
    %v2873 = vrot.slane %v2872, 2
    %v2874 = vadd.f32 %v2872, %v2873
    %v2875 = vrot.slane %v2874, 1
    %v2876 = vadd.f32 %v2874, %v2875
    %v2885 = vsel %vm364, %v2834, %v2827
    %v2886 = vsel %vm366, %v2841, %v2885
    %v2887 = vsel %vm368, %v2848, %v2886
    %v2888 = vsel %vm370, %v2855, %v2887
    %v2889 = vsel %vm372, %v2862, %v2888
    %v2890 = vsel %vm374, %v2869, %v2889
    %v2891 = vsel %vm376, %v2876, %v2890
    %v2892 = vsel %vm164, %v2891, 0
    %2894 = vmatpush.msra.mxu0 0.0
    %2895 = vmatpush.msra.mxu0 0.0
    %2896 = vmatpush.msra.mxu0 0.0
    %2897 = vmatpush.msra.mxu0 0.0
    %2898 = vmatpush.msra.mxu0 0.0
    %2899 = vmatpush.msra.mxu0 0.0
    %2900 = vmatpush.msra.mxu0 0.0
    %2901 = vmatpush.msra.mxu0 0.0
    %2902 = vmatpush.msra.mxu0 0.0
    %2903 = vmatpush.msra.mxu0 0.0
    %2904 = vmatpush.msra.mxu0 0.0
    %2905 = vmatpush.msra.mxu0 0.0
    %2906 = vmatpush.msra.mxu0 %v110
    %2907 = vmatpush.msra.mxu0 %v109
    %2908 = vmatpush.msra.mxu0 %v108
    %2909 = vmatpush.msra.mxu0 %v107
    %2910 = vmatmul.f32.gmra.mxu0 %v2892
    %v2911 = vpop.f32.mrf.mxu0
    %v2912 = vadd.f32 %v91, %v2911
    %2913 = vdwg.mxu0
    %2915 = vset.pattern.permute.xlu0 0
    %2916 = vperm.xlu0 %2915, %v2912
    %v2917 = vpop.permute.xlu0 %2916
    %v2919 = vmul.f32 %v2917, %v648
    %2920 = vmatpush.msra.mxu0 0.0
    %2921 = vmatpush.msra.mxu0 0.0
    %2922 = vmatpush.msra.mxu0 0.0
    %2923 = vmatpush.msra.mxu0 0.0
    %2924 = vmatpush.msra.mxu0 0.0
    %2925 = vmatpush.msra.mxu0 0.0
    %2926 = vmatpush.msra.mxu0 0.0
    %2927 = vmatpush.msra.mxu0 0.0
    %2928 = vmatpush.msra.mxu0 0.0
    %2929 = vmatpush.msra.mxu0 0.0
    %2930 = vmatpush.msra.mxu0 0.0
    %2931 = vmatpush.msra.mxu0 0.0
    %2932 = vmatpush.msra.mxu0 %v118
    %2933 = vmatpush.msra.mxu0 %v117
    %2934 = vmatpush.msra.mxu0 %v116
    %2935 = vmatpush.msra.mxu0 %v115
    %2936 = vmatmul.f32.gmra.mxu0 %v2533
    %v2937 = vpop.f32.mrf.mxu0
    %v2938 = vadd.f32 0.0, %v2937
    %2939 = vdwg.mxu0
    %v2940 = vadd.f32 %v2919, %v2938
    %v2941 = vadd.f32 %v2940, %v153
    %v2942 = vxor.u32 %v2941, 2147483648
    %v2943 = vmul.f32 %v2942, 1.442695
    %v2944 = vpow.pop %v2943
    %v2945 = vadd.f32 %v2944, 1.0
    %v2946 = vrcp.pop %v2945
    %v2947 = vmul.f32 %v2945, %v2946
    %v2948 = vsub.f32 1.0, %v2947
    %v2949 = vmul.f32 %v2946, %v2948
    %v2950 = vadd.f32 %v2946, %v2949
    %vm2951 = vweird.f32 %v2945
    %vm2952 = vweird.f32 %v2946
    %vm2953 = vmor %vm2951, %vm2952
    %v2954 = vsel %vm2953, %v2946, %v2950
    %v2955 = vand.u32 2147483647, %v2945
    %vm2956 = vcmp.eq.f32.partialorder %v2955, 8.507059e+37
    %v2957 = vand.u32 %v2945, 2147483648
    %v2958 = vor.u32 1.1754944e-38, %v2957
    %v2959 = vsel %vm2956, %v2958, %v2954
    %v2960 = vmul.f32 1.0, %v2959
    %v2961 = vmul.f32 %v2917, %v693
    %2962 = vmatpush.msra.mxu0 0.0
    %2963 = vmatpush.msra.mxu0 0.0
    %2964 = vmatpush.msra.mxu0 0.0
    %2965 = vmatpush.msra.mxu0 0.0
    %2966 = vmatpush.msra.mxu0 0.0
    %2967 = vmatpush.msra.mxu0 0.0
    %2968 = vmatpush.msra.mxu0 0.0
    %2969 = vmatpush.msra.mxu0 0.0
    %2970 = vmatpush.msra.mxu0 0.0
    %2971 = vmatpush.msra.mxu0 0.0
    %2972 = vmatpush.msra.mxu0 0.0
    %2973 = vmatpush.msra.mxu0 0.0
    %2974 = vmatpush.msra.mxu0 %v122
    %2975 = vmatpush.msra.mxu0 %v121
    %2976 = vmatpush.msra.mxu0 %v120
    %2977 = vmatpush.msra.mxu0 %v119
    %2978 = vmatmul.f32.gmra.mxu0 %v2533
    %v2979 = vpop.f32.mrf.mxu0
    %v2980 = vadd.f32 0.0, %v2979
    %2981 = vdwg.mxu0
    %v2982 = vadd.f32 %v2961, %v2980
    %v2983 = vadd.f32 %v2982, %v156
    %v2984 = vxor.u32 %v2983, 2147483648
    %v2985 = vmul.f32 %v2984, 1.442695
    %v2986 = vpow.pop %v2985
    %v2987 = vadd.f32 %v2986, 1.0
    %v2988 = vrcp.pop %v2987
    %v2989 = vmul.f32 %v2987, %v2988
    %v2990 = vsub.f32 1.0, %v2989
    %v2991 = vmul.f32 %v2988, %v2990
    %v2992 = vadd.f32 %v2988, %v2991
    %vm2993 = vweird.f32 %v2987
    %vm2994 = vweird.f32 %v2988
    %vm2995 = vmor %vm2993, %vm2994
    %v2996 = vsel %vm2995, %v2988, %v2992
    %v2997 = vand.u32 2147483647, %v2987
    %vm2998 = vcmp.eq.f32.partialorder %v2997, 8.507059e+37
    %v2999 = vand.u32 %v2987, 2147483648
    %v3000 = vor.u32 1.1754944e-38, %v2999
    %v3001 = vsel %vm2998, %v3000, %v2996
    %v3002 = vmul.f32 1.0, %v3001
    %v3003 = vmul.f32 %v2917, %v738
    %3004 = vmatpush.msra.mxu0 0.0
    %3005 = vmatpush.msra.mxu0 0.0
    %3006 = vmatpush.msra.mxu0 0.0
    %3007 = vmatpush.msra.mxu0 0.0
    %3008 = vmatpush.msra.mxu0 0.0
    %3009 = vmatpush.msra.mxu0 0.0
    %3010 = vmatpush.msra.mxu0 0.0
    %3011 = vmatpush.msra.mxu0 0.0
    %3012 = vmatpush.msra.mxu0 0.0
    %3013 = vmatpush.msra.mxu0 0.0
    %3014 = vmatpush.msra.mxu0 0.0
    %3015 = vmatpush.msra.mxu0 0.0
    %3016 = vmatpush.msra.mxu0 %v126
    %3017 = vmatpush.msra.mxu0 %v125
    %3018 = vmatpush.msra.mxu0 %v124
    %3019 = vmatpush.msra.mxu0 %v123
    %3020 = vmatmul.f32.gmra.mxu0 %v2533
    %v3021 = vpop.f32.mrf.mxu0
    %v3022 = vadd.f32 0.0, %v3021
    %3023 = vdwg.mxu0
    %v3024 = vadd.f32 %v3003, %v3022
    %v3025 = vadd.f32 %v3024, %v159
    %v3026 = vtanh.pop %v3025
    %v3027 = vmul.f32 %v2917, %v765
    %3028 = vmatpush.msra.mxu0 0.0
    %3029 = vmatpush.msra.mxu0 0.0
    %3030 = vmatpush.msra.mxu0 0.0
    %3031 = vmatpush.msra.mxu0 0.0
    %3032 = vmatpush.msra.mxu0 0.0
    %3033 = vmatpush.msra.mxu0 0.0
    %3034 = vmatpush.msra.mxu0 0.0
    %3035 = vmatpush.msra.mxu0 0.0
    %3036 = vmatpush.msra.mxu0 0.0
    %3037 = vmatpush.msra.mxu0 0.0
    %3038 = vmatpush.msra.mxu0 0.0
    %3039 = vmatpush.msra.mxu0 0.0
    %3040 = vmatpush.msra.mxu0 %v130
    %3041 = vmatpush.msra.mxu0 %v129
    %3042 = vmatpush.msra.mxu0 %v128
    %3043 = vmatpush.msra.mxu0 %v127
    %3044 = vmatmul.f32.gmra.mxu0 %v2533
    %v3045 = vpop.f32.mrf.mxu0
    %v3046 = vadd.f32 0.0, %v3045
    %3047 = vdwg.mxu0
    %v3048 = vadd.f32 %v3027, %v3046
    %v3049 = vadd.f32 %v3048, %v162
    %v3050 = vxor.u32 %v3049, 2147483648
    %v3051 = vmul.f32 %v3050, 1.442695
    %v3052 = vpow.pop %v3051
    %v3053 = vadd.f32 %v3052, 1.0
    %v3054 = vrcp.pop %v3053
    %v3055 = vmul.f32 %v3053, %v3054
    %v3056 = vsub.f32 1.0, %v3055
    %v3057 = vmul.f32 %v3054, %v3056
    %v3058 = vadd.f32 %v3054, %v3057
    %vm3059 = vweird.f32 %v3053
    %vm3060 = vweird.f32 %v3054
    %vm3061 = vmor %vm3059, %vm3060
    %v3062 = vsel %vm3061, %v3054, %v3058
    %v3063 = vand.u32 2147483647, %v3053
    %vm3064 = vcmp.eq.f32.partialorder %v3063, 8.507059e+37
    %v3065 = vand.u32 %v3053, 2147483648
    %v3066 = vor.u32 1.1754944e-38, %v3065
    %v3067 = vsel %vm3064, %v3066, %v3062
    %v3068 = vmul.f32 1.0, %v3067
    %v3069 = vmul.f32 %v3002, %v2506
    %v3070 = vmul.f32 %v2960, %v3026
    %v3071 = vadd.f32 %v3069, %v3070
    %v3072 = vtanh.pop %v3071
    %v3073 = vmul.f32 %v3068, %v3072
    %v3075 = vsel %vm164, %v3071, 0
    %3077 = vmatpush.msra.mxu0 0.0
    %3078 = vmatpush.msra.mxu0 0.0
    %3079 = vmatpush.msra.mxu0 0.0
    %3080 = vmatpush.msra.mxu0 0.0
    %3081 = vmatpush.msra.mxu0 0.0
    %3082 = vmatpush.msra.mxu0 0.0
    %3083 = vmatpush.msra.mxu0 0.0
    %3084 = vmatpush.msra.mxu0 0.0
    %3085 = vmatpush.msra.mxu0 0.0
    %3086 = vmatpush.msra.mxu0 0.0
    %3087 = vmatpush.msra.mxu0 0.0
    %3088 = vmatpush.msra.mxu0 0.0
    %3089 = vmatpush.msra.mxu0 %v102
    %3090 = vmatpush.msra.mxu0 %v101
    %3091 = vmatpush.msra.mxu0 %v100
    %3092 = vmatpush.msra.mxu0 %v99
    %3093 = vmatmul.f32.gmra.mxu0 %v3075
    %v3094 = vpop.f32.mrf.mxu0
    %v3095 = vadd.f32 0.0, %v3094
    %3096 = vdwg.mxu0
    %v3098 = vsel %vm164, %v3073, 0
    %3100 = vmatpush.msra.mxu0 0.0
    %3101 = vmatpush.msra.mxu0 0.0
    %3102 = vmatpush.msra.mxu0 0.0
    %3103 = vmatpush.msra.mxu0 0.0
    %3104 = vmatpush.msra.mxu0 0.0
    %3105 = vmatpush.msra.mxu0 0.0
    %3106 = vmatpush.msra.mxu0 0.0
    %3107 = vmatpush.msra.mxu0 0.0
    %3108 = vmatpush.msra.mxu0 0.0
    %3109 = vmatpush.msra.mxu0 0.0
    %3110 = vmatpush.msra.mxu0 0.0
    %3111 = vmatpush.msra.mxu0 0.0
    %3112 = vmatpush.msra.mxu0 %v98
    %3113 = vmatpush.msra.mxu0 %v97
    %3114 = vmatpush.msra.mxu0 %v96
    %3115 = vmatpush.msra.mxu0 %v95
    %3116 = vmatmul.f32.gmra.mxu0 %v3098
    %v3117 = vpop.f32.mrf.mxu0
    %v3118 = vadd.f32 %v3095, %v3117
    %3119 = vdwg.mxu0
    %v3120 = vadd.f32 %v3118, %v146
    %v3122 = vrot.slane %v3120, 1
    %v3123 = vrot.slane %v3120, 2
    %v3124 = vrot.slane %v3120, 3
    %v3125 = vrot.slane %v3120, 4
    %v3126 = vrot.slane %v3120, 5
    %v3127 = vrot.slane %v3120, 6
    %v3128 = vrot.slane %v3120, 7
    %v3129 = vperm.slane %v3120, 0
    %v3130 = vperm.slane %v3122, 0
    %v3131 = vperm.slane %v3123, 0
    %v3132 = vperm.slane %v3124, 0
    %v3133 = vperm.slane %v3125, 0
    %v3134 = vperm.slane %v3126, 0
    %v3135 = vperm.slane %v3127, 0
    %v3136 = vperm.slane %v3128, 0
    %v3145 = vadd.f32 %v207, %v3129
    %v3146 = vadd.f32 %v210, %v3130
    %v3147 = vadd.f32 %v213, %v3131
    %v3148 = vadd.f32 %v216, %v3132
    %v3149 = vadd.f32 %v219, %v3133
    %v3150 = vadd.f32 %v222, %v3134
    %v3151 = vadd.f32 %v225, %v3135
    %v3152 = vadd.f32 %v228, %v3136
    %v3153 = vtanh.pop %v3145
    %v3154 = vtanh.pop %v3146
    %v3155 = vtanh.pop %v3147
    %v3156 = vtanh.pop %v3148
    %v3157 = vtanh.pop %v3149
    %v3158 = vtanh.pop %v3150
    %v3159 = vtanh.pop %v3151
    %v3160 = vtanh.pop %v3152
    %v3161 = vmul.f32 %v3153, %v150
    %v3162 = vmul.f32 %v3154, %v150
    %v3163 = vmul.f32 %v3155, %v150
    %v3164 = vmul.f32 %v3156, %v150
    %v3165 = vmul.f32 %v3157, %v150
    %v3166 = vmul.f32 %v3158, %v150
    %v3167 = vmul.f32 %v3159, %v150
    %v3168 = vmul.f32 %v3160, %v150
    %v3169 = vsel %vm164, %v3161, 0.0
    %3170 = vadd.xlane.f32.xlu0 %v3169
    %v3171 = vpop.xlane.xlu0 %3170
    %v3172 = vsel %vm164, %v3162, 0.0
    %3173 = vadd.xlane.f32.xlu0 %v3172
    %v3174 = vpop.xlane.xlu0 %3173
    %v3175 = vsel %vm164, %v3163, 0.0
    %3176 = vadd.xlane.f32.xlu0 %v3175
    %v3177 = vpop.xlane.xlu0 %3176
    %v3178 = vsel %vm164, %v3164, 0.0
    %3179 = vadd.xlane.f32.xlu0 %v3178
    %v3180 = vpop.xlane.xlu0 %3179
    %v3181 = vsel %vm164, %v3165, 0.0
    %3182 = vadd.xlane.f32.xlu0 %v3181
    %v3183 = vpop.xlane.xlu0 %3182
    %v3184 = vsel %vm164, %v3166, 0.0
    %3185 = vadd.xlane.f32.xlu0 %v3184
    %v3186 = vpop.xlane.xlu0 %3185
    %v3187 = vsel %vm164, %v3167, 0.0
    %3188 = vadd.xlane.f32.xlu0 %v3187
    %v3189 = vpop.xlane.xlu0 %3188
    %v3190 = vsel %vm164, %v3168, 0.0
    %3191 = vadd.xlane.f32.xlu0 %v3190
    %v3192 = vpop.xlane.xlu0 %3191
    %v3201 = vperm.slane %v3171, %v355
    %v3202 = vperm.slane %v3174, %v355
    %v3203 = vperm.slane %v3177, %v355
    %v3204 = vperm.slane %v3180, %v355
    %v3205 = vperm.slane %v3183, %v355
    %v3206 = vperm.slane %v3186, %v355
    %v3207 = vperm.slane %v3189, %v355
    %v3208 = vperm.slane %v3192, %v355
    %v3209 = vsel %vm364, %v3202, %v3201
    %v3210 = vsel %vm366, %v3203, %v3209
    %v3211 = vsel %vm368, %v3204, %v3210
    %v3212 = vsel %vm370, %v3205, %v3211
    %v3213 = vsel %vm372, %v3206, %v3212
    %v3214 = vsel %vm374, %v3207, %v3213
    %v3215 = vsel %vm376, %v3208, %v3214
    %v3217 = vsel %vm379, %v3215, -inf
    %3218 = vmax.xlane.f32.xlu0 %v3217
    %v3219 = vpop.xlane.xlu0 %3218
    %v3221 = vperm.slane %v3219, 0
    %v3222 = vperm.slane %v3219, 1
    %v3223 = vperm.slane %v3219, 2
    %v3224 = vperm.slane %v3219, 3
    %v3225 = vperm.slane %v3219, 4
    %v3226 = vperm.slane %v3219, 5
    %v3227 = vperm.slane %v3219, 6
    %v3228 = vperm.slane %v3219, 7
    %v3237 = vsub.f32 %v3171, %v3221
    %v3238 = vsub.f32 %v3174, %v3222
    %v3239 = vsub.f32 %v3177, %v3223
    %v3240 = vsub.f32 %v3180, %v3224
    %v3241 = vsub.f32 %v3183, %v3225
    %v3242 = vsub.f32 %v3186, %v3226
    %v3243 = vsub.f32 %v3189, %v3227
    %v3244 = vsub.f32 %v3192, %v3228
    %v3245 = vmul.f32 %v3237, 1.442695
    %v3246 = vpow.pop %v3245
    %v3247 = vmul.f32 %v3238, 1.442695
    %v3248 = vpow.pop %v3247
    %v3249 = vmul.f32 %v3239, 1.442695
    %v3250 = vpow.pop %v3249
    %v3251 = vmul.f32 %v3240, 1.442695
    %v3252 = vpow.pop %v3251
    %v3253 = vmul.f32 %v3241, 1.442695
    %v3254 = vpow.pop %v3253
    %v3255 = vmul.f32 %v3242, 1.442695
    %v3256 = vpow.pop %v3255
    %v3257 = vmul.f32 %v3243, 1.442695
    %v3258 = vpow.pop %v3257
    %v3259 = vmul.f32 %v3244, 1.442695
    %v3260 = vpow.pop %v3259
    %3269 = vset.pattern.permute.xlu0 0
    %3270 = vperm.xlu0 %3269, %v3246
    %v3271 = vpop.permute.xlu0 %3270
    %3272 = vset.pattern.permute.xlu0 0
    %3273 = vperm.xlu0 %3272, %v3248
    %v3274 = vpop.permute.xlu0 %3273
    %3275 = vset.pattern.permute.xlu0 0
    %3276 = vperm.xlu0 %3275, %v3250
    %v3277 = vpop.permute.xlu0 %3276
    %3278 = vset.pattern.permute.xlu0 0
    %3279 = vperm.xlu0 %3278, %v3252
    %v3280 = vpop.permute.xlu0 %3279
    %3281 = vset.pattern.permute.xlu0 0
    %3282 = vperm.xlu0 %3281, %v3254
    %v3283 = vpop.permute.xlu0 %3282
    %3284 = vset.pattern.permute.xlu0 0
    %3285 = vperm.xlu0 %3284, %v3256
    %v3286 = vpop.permute.xlu0 %3285
    %3287 = vset.pattern.permute.xlu0 0
    %3288 = vperm.xlu0 %3287, %v3258
    %v3289 = vpop.permute.xlu0 %3288
    %3290 = vset.pattern.permute.xlu0 0
    %3291 = vperm.xlu0 %3290, %v3260
    %v3292 = vpop.permute.xlu0 %3291
    %v3293 = vperm.slane %v3271, %v355
    %v3294 = vperm.slane %v3274, %v355
    %v3295 = vperm.slane %v3277, %v355
    %v3296 = vperm.slane %v3280, %v355
    %v3297 = vperm.slane %v3283, %v355
    %v3298 = vperm.slane %v3286, %v355
    %v3299 = vperm.slane %v3289, %v355
    %v3300 = vperm.slane %v3292, %v355
    %v3301 = vsel %vm364, %v3294, %v3293
    %v3302 = vsel %vm366, %v3295, %v3301
    %v3303 = vsel %vm368, %v3296, %v3302
    %v3304 = vsel %vm370, %v3297, %v3303
    %v3305 = vsel %vm372, %v3298, %v3304
    %v3306 = vsel %vm374, %v3299, %v3305
    %v3307 = vsel %vm376, %v3300, %v3306
    %v3309 = vsel %vm379, %v3307, 0.0
    %3310 = vadd.xlane.f32.xlu0 %v3309
    %v3311 = vpop.xlane.xlu0 %3310
    %v3312 = vrcp.pop %v3311
    %v3314 = vperm.slane %v3312, 0
    %v3315 = vperm.slane %v3312, 1
    %v3316 = vperm.slane %v3312, 2
    %v3317 = vperm.slane %v3312, 3
    %v3318 = vperm.slane %v3312, 4
    %v3319 = vperm.slane %v3312, 5
    %v3320 = vperm.slane %v3312, 6
    %v3321 = vperm.slane %v3312, 7
    %v3330 = vmul.f32 %v3246, %v3314
    %v3331 = vmul.f32 %v3248, %v3315
    %v3332 = vmul.f32 %v3250, %v3316
    %v3333 = vmul.f32 %v3252, %v3317
    %v3334 = vmul.f32 %v3254, %v3318
    %v3335 = vmul.f32 %v3256, %v3319
    %v3336 = vmul.f32 %v3258, %v3320
    %v3337 = vmul.f32 %v3260, %v3321
    %3339 = vset.pattern.permute.xlu0 0
    %3340 = vperm.xlu0 %3339, %v3330
    %v3341 = vpop.permute.xlu0 %3340
    %3344 = vset.pattern.permute.xlu0 0
    %3345 = vperm.xlu0 %3344, %v3331
    %v3346 = vpop.permute.xlu0 %3345
    %3349 = vset.pattern.permute.xlu0 0
    %3350 = vperm.xlu0 %3349, %v3332
    %v3351 = vpop.permute.xlu0 %3350
    %3354 = vset.pattern.permute.xlu0 0
    %3355 = vperm.xlu0 %3354, %v3333
    %v3356 = vpop.permute.xlu0 %3355
    %3359 = vset.pattern.permute.xlu0 0
    %3360 = vperm.xlu0 %3359, %v3334
    %v3361 = vpop.permute.xlu0 %3360
    %3364 = vset.pattern.permute.xlu0 0
    %3365 = vperm.xlu0 %3364, %v3335
    %v3366 = vpop.permute.xlu0 %3365
    %3369 = vset.pattern.permute.xlu0 0
    %3370 = vperm.xlu0 %3369, %v3336
    %v3371 = vpop.permute.xlu0 %3370
    %3374 = vset.pattern.permute.xlu0 0
    %3375 = vperm.xlu0 %3374, %v3337
    %v3376 = vpop.permute.xlu0 %3375
    %v3378 = vmul.f32 %v3341, %v79
    %v3379 = vmul.f32 %v3346, %v80
    %v3380 = vmul.f32 %v3351, %v81
    %v3381 = vmul.f32 %v3356, %v82
    %v3382 = vmul.f32 %v3361, %v83
    %v3383 = vmul.f32 %v3366, %v84
    %v3384 = vmul.f32 %v3371, %v85
    %v3385 = vmul.f32 %v3376, %v86
    %v3386 = vsel %vm164, %v3378, 0.0
    %v3387 = vrot.slane %v3386, 4
    %v3388 = vadd.f32 %v3386, %v3387
    %v3389 = vrot.slane %v3388, 2
    %v3390 = vadd.f32 %v3388, %v3389
    %v3391 = vrot.slane %v3390, 1
    %v3392 = vadd.f32 %v3390, %v3391
    %v3393 = vsel %vm164, %v3379, 0.0
    %v3394 = vrot.slane %v3393, 4
    %v3395 = vadd.f32 %v3393, %v3394
    %v3396 = vrot.slane %v3395, 2
    %v3397 = vadd.f32 %v3395, %v3396
    %v3398 = vrot.slane %v3397, 1
    %v3399 = vadd.f32 %v3397, %v3398
    %v3400 = vsel %vm164, %v3380, 0.0
    %v3401 = vrot.slane %v3400, 4
    %v3402 = vadd.f32 %v3400, %v3401
    %v3403 = vrot.slane %v3402, 2
    %v3404 = vadd.f32 %v3402, %v3403
    %v3405 = vrot.slane %v3404, 1
    %v3406 = vadd.f32 %v3404, %v3405
    %v3407 = vsel %vm164, %v3381, 0.0
    %v3408 = vrot.slane %v3407, 4
    %v3409 = vadd.f32 %v3407, %v3408
    %v3410 = vrot.slane %v3409, 2
    %v3411 = vadd.f32 %v3409, %v3410
    %v3412 = vrot.slane %v3411, 1
    %v3413 = vadd.f32 %v3411, %v3412
    %v3414 = vsel %vm164, %v3382, 0.0
    %v3415 = vrot.slane %v3414, 4
    %v3416 = vadd.f32 %v3414, %v3415
    %v3417 = vrot.slane %v3416, 2
    %v3418 = vadd.f32 %v3416, %v3417
    %v3419 = vrot.slane %v3418, 1
    %v3420 = vadd.f32 %v3418, %v3419
    %v3421 = vsel %vm164, %v3383, 0.0
    %v3422 = vrot.slane %v3421, 4
    %v3423 = vadd.f32 %v3421, %v3422
    %v3424 = vrot.slane %v3423, 2
    %v3425 = vadd.f32 %v3423, %v3424
    %v3426 = vrot.slane %v3425, 1
    %v3427 = vadd.f32 %v3425, %v3426
    %v3428 = vsel %vm164, %v3384, 0.0
    %v3429 = vrot.slane %v3428, 4
    %v3430 = vadd.f32 %v3428, %v3429
    %v3431 = vrot.slane %v3430, 2
    %v3432 = vadd.f32 %v3430, %v3431
    %v3433 = vrot.slane %v3432, 1
    %v3434 = vadd.f32 %v3432, %v3433
    %v3435 = vsel %vm164, %v3385, 0.0
    %v3436 = vrot.slane %v3435, 4
    %v3437 = vadd.f32 %v3435, %v3436
    %v3438 = vrot.slane %v3437, 2
    %v3439 = vadd.f32 %v3437, %v3438
    %v3440 = vrot.slane %v3439, 1
    %v3441 = vadd.f32 %v3439, %v3440
    %v3450 = vsel %vm364, %v3399, %v3392
    %v3451 = vsel %vm366, %v3406, %v3450
    %v3452 = vsel %vm368, %v3413, %v3451
    %v3453 = vsel %vm370, %v3420, %v3452
    %v3454 = vsel %vm372, %v3427, %v3453
    %v3455 = vsel %vm374, %v3434, %v3454
    %v3456 = vsel %vm376, %v3441, %v3455
    %v3457 = vsel %vm164, %v3456, 0
    %3459 = vmatpush.msra.mxu0 0.0
    %3460 = vmatpush.msra.mxu0 0.0
    %3461 = vmatpush.msra.mxu0 0.0
    %3462 = vmatpush.msra.mxu0 0.0
    %3463 = vmatpush.msra.mxu0 0.0
    %3464 = vmatpush.msra.mxu0 0.0
    %3465 = vmatpush.msra.mxu0 0.0
    %3466 = vmatpush.msra.mxu0 0.0
    %3467 = vmatpush.msra.mxu0 0.0
    %3468 = vmatpush.msra.mxu0 0.0
    %3469 = vmatpush.msra.mxu0 0.0
    %3470 = vmatpush.msra.mxu0 0.0
    %3471 = vmatpush.msra.mxu0 %v110
    %3472 = vmatpush.msra.mxu0 %v109
    %3473 = vmatpush.msra.mxu0 %v108
    %3474 = vmatpush.msra.mxu0 %v107
    %3475 = vmatmul.f32.gmra.mxu0 %v3457
    %v3476 = vpop.f32.mrf.mxu0
    %v3477 = vadd.f32 %v92, %v3476
    %3478 = vdwg.mxu0
    %3480 = vset.pattern.permute.xlu0 0
    %3481 = vperm.xlu0 %3480, %v3477
    %v3482 = vpop.permute.xlu0 %3481
    %v3484 = vmul.f32 %v3482, %v648
    %3485 = vmatpush.msra.mxu0 0.0
    %3486 = vmatpush.msra.mxu0 0.0
    %3487 = vmatpush.msra.mxu0 0.0
    %3488 = vmatpush.msra.mxu0 0.0
    %3489 = vmatpush.msra.mxu0 0.0
    %3490 = vmatpush.msra.mxu0 0.0
    %3491 = vmatpush.msra.mxu0 0.0
    %3492 = vmatpush.msra.mxu0 0.0
    %3493 = vmatpush.msra.mxu0 0.0
    %3494 = vmatpush.msra.mxu0 0.0
    %3495 = vmatpush.msra.mxu0 0.0
    %3496 = vmatpush.msra.mxu0 0.0
    %3497 = vmatpush.msra.mxu0 %v118
    %3498 = vmatpush.msra.mxu0 %v117
    %3499 = vmatpush.msra.mxu0 %v116
    %3500 = vmatpush.msra.mxu0 %v115
    %3501 = vmatmul.f32.gmra.mxu0 %v3098
    %v3502 = vpop.f32.mrf.mxu0
    %v3503 = vadd.f32 0.0, %v3502
    %3504 = vdwg.mxu0
    %v3505 = vadd.f32 %v3484, %v3503
    %v3506 = vadd.f32 %v3505, %v153
    %v3507 = vxor.u32 %v3506, 2147483648
    %v3508 = vmul.f32 %v3507, 1.442695
    %v3509 = vpow.pop %v3508
    %v3510 = vadd.f32 %v3509, 1.0
    %v3511 = vrcp.pop %v3510
    %v3512 = vmul.f32 %v3510, %v3511
    %v3513 = vsub.f32 1.0, %v3512
    %v3514 = vmul.f32 %v3511, %v3513
    %v3515 = vadd.f32 %v3511, %v3514
    %vm3516 = vweird.f32 %v3510
    %vm3517 = vweird.f32 %v3511
    %vm3518 = vmor %vm3516, %vm3517
    %v3519 = vsel %vm3518, %v3511, %v3515
    %v3520 = vand.u32 2147483647, %v3510
    %vm3521 = vcmp.eq.f32.partialorder %v3520, 8.507059e+37
    %v3522 = vand.u32 %v3510, 2147483648
    %v3523 = vor.u32 1.1754944e-38, %v3522
    %v3524 = vsel %vm3521, %v3523, %v3519
    %v3525 = vmul.f32 1.0, %v3524
    %v3526 = vmul.f32 %v3482, %v693
    %3527 = vmatpush.msra.mxu0 0.0
    %3528 = vmatpush.msra.mxu0 0.0
    %3529 = vmatpush.msra.mxu0 0.0
    %3530 = vmatpush.msra.mxu0 0.0
    %3531 = vmatpush.msra.mxu0 0.0
    %3532 = vmatpush.msra.mxu0 0.0
    %3533 = vmatpush.msra.mxu0 0.0
    %3534 = vmatpush.msra.mxu0 0.0
    %3535 = vmatpush.msra.mxu0 0.0
    %3536 = vmatpush.msra.mxu0 0.0
    %3537 = vmatpush.msra.mxu0 0.0
    %3538 = vmatpush.msra.mxu0 0.0
    %3539 = vmatpush.msra.mxu0 %v122
    %3540 = vmatpush.msra.mxu0 %v121
    %3541 = vmatpush.msra.mxu0 %v120
    %3542 = vmatpush.msra.mxu0 %v119
    %3543 = vmatmul.f32.gmra.mxu0 %v3098
    %v3544 = vpop.f32.mrf.mxu0
    %v3545 = vadd.f32 0.0, %v3544
    %3546 = vdwg.mxu0
    %v3547 = vadd.f32 %v3526, %v3545
    %v3548 = vadd.f32 %v3547, %v156
    %v3549 = vxor.u32 %v3548, 2147483648
    %v3550 = vmul.f32 %v3549, 1.442695
    %v3551 = vpow.pop %v3550
    %v3552 = vadd.f32 %v3551, 1.0
    %v3553 = vrcp.pop %v3552
    %v3554 = vmul.f32 %v3552, %v3553
    %v3555 = vsub.f32 1.0, %v3554
    %v3556 = vmul.f32 %v3553, %v3555
    %v3557 = vadd.f32 %v3553, %v3556
    %vm3558 = vweird.f32 %v3552
    %vm3559 = vweird.f32 %v3553
    %vm3560 = vmor %vm3558, %vm3559
    %v3561 = vsel %vm3560, %v3553, %v3557
    %v3562 = vand.u32 2147483647, %v3552
    %vm3563 = vcmp.eq.f32.partialorder %v3562, 8.507059e+37
    %v3564 = vand.u32 %v3552, 2147483648
    %v3565 = vor.u32 1.1754944e-38, %v3564
    %v3566 = vsel %vm3563, %v3565, %v3561
    %v3567 = vmul.f32 1.0, %v3566
    %v3568 = vmul.f32 %v3482, %v738
    %3569 = vmatpush.msra.mxu0 0.0
    %3570 = vmatpush.msra.mxu0 0.0
    %3571 = vmatpush.msra.mxu0 0.0
    %3572 = vmatpush.msra.mxu0 0.0
    %3573 = vmatpush.msra.mxu0 0.0
    %3574 = vmatpush.msra.mxu0 0.0
    %3575 = vmatpush.msra.mxu0 0.0
    %3576 = vmatpush.msra.mxu0 0.0
    %3577 = vmatpush.msra.mxu0 0.0
    %3578 = vmatpush.msra.mxu0 0.0
    %3579 = vmatpush.msra.mxu0 0.0
    %3580 = vmatpush.msra.mxu0 0.0
    %3581 = vmatpush.msra.mxu0 %v126
    %3582 = vmatpush.msra.mxu0 %v125
    %3583 = vmatpush.msra.mxu0 %v124
    %3584 = vmatpush.msra.mxu0 %v123
    %3585 = vmatmul.f32.gmra.mxu0 %v3098
    %v3586 = vpop.f32.mrf.mxu0
    %v3587 = vadd.f32 0.0, %v3586
    %3588 = vdwg.mxu0
    %v3589 = vadd.f32 %v3568, %v3587
    %v3590 = vadd.f32 %v3589, %v159
    %v3591 = vtanh.pop %v3590
    %v3592 = vmul.f32 %v3482, %v765
    %3593 = vmatpush.msra.mxu0 0.0
    %3594 = vmatpush.msra.mxu0 0.0
    %3595 = vmatpush.msra.mxu0 0.0
    %3596 = vmatpush.msra.mxu0 0.0
    %3597 = vmatpush.msra.mxu0 0.0
    %3598 = vmatpush.msra.mxu0 0.0
    %3599 = vmatpush.msra.mxu0 0.0
    %3600 = vmatpush.msra.mxu0 0.0
    %3601 = vmatpush.msra.mxu0 0.0
    %3602 = vmatpush.msra.mxu0 0.0
    %3603 = vmatpush.msra.mxu0 0.0
    %3604 = vmatpush.msra.mxu0 0.0
    %3605 = vmatpush.msra.mxu0 %v130
    %3606 = vmatpush.msra.mxu0 %v129
    %3607 = vmatpush.msra.mxu0 %v128
    %3608 = vmatpush.msra.mxu0 %v127
    %3609 = vmatmul.f32.gmra.mxu0 %v3098
    %v3610 = vpop.f32.mrf.mxu0
    %v3611 = vadd.f32 0.0, %v3610
    %3612 = vdwg.mxu0
    %v3613 = vadd.f32 %v3592, %v3611
    %v3614 = vadd.f32 %v3613, %v162
    %v3615 = vxor.u32 %v3614, 2147483648
    %v3616 = vmul.f32 %v3615, 1.442695
    %v3617 = vpow.pop %v3616
    %v3618 = vadd.f32 %v3617, 1.0
    %v3619 = vrcp.pop %v3618
    %v3620 = vmul.f32 %v3618, %v3619
    %v3621 = vsub.f32 1.0, %v3620
    %v3622 = vmul.f32 %v3619, %v3621
    %v3623 = vadd.f32 %v3619, %v3622
    %vm3624 = vweird.f32 %v3618
    %vm3625 = vweird.f32 %v3619
    %vm3626 = vmor %vm3624, %vm3625
    %v3627 = vsel %vm3626, %v3619, %v3623
    %v3628 = vand.u32 2147483647, %v3618
    %vm3629 = vcmp.eq.f32.partialorder %v3628, 8.507059e+37
    %v3630 = vand.u32 %v3618, 2147483648
    %v3631 = vor.u32 1.1754944e-38, %v3630
    %v3632 = vsel %vm3629, %v3631, %v3627
    %v3633 = vmul.f32 1.0, %v3632
    %v3634 = vmul.f32 %v3567, %v3071
    %v3635 = vmul.f32 %v3525, %v3591
    %v3636 = vadd.f32 %v3634, %v3635
    %v3637 = vtanh.pop %v3636
    %v3638 = vmul.f32 %v3633, %v3637
    %v3640 = vsel %vm164, %v3636, 0
    %3642 = vmatpush.msra.mxu0 0.0
    %3643 = vmatpush.msra.mxu0 0.0
    %3644 = vmatpush.msra.mxu0 0.0
    %3645 = vmatpush.msra.mxu0 0.0
    %3646 = vmatpush.msra.mxu0 0.0
    %3647 = vmatpush.msra.mxu0 0.0
    %3648 = vmatpush.msra.mxu0 0.0
    %3649 = vmatpush.msra.mxu0 0.0
    %3650 = vmatpush.msra.mxu0 0.0
    %3651 = vmatpush.msra.mxu0 0.0
    %3652 = vmatpush.msra.mxu0 0.0
    %3653 = vmatpush.msra.mxu0 0.0
    %3654 = vmatpush.msra.mxu0 %v102
    %3655 = vmatpush.msra.mxu0 %v101
    %3656 = vmatpush.msra.mxu0 %v100
    %3657 = vmatpush.msra.mxu0 %v99
    %3658 = vmatmul.f32.gmra.mxu0 %v3640
    %v3659 = vpop.f32.mrf.mxu0
    %v3660 = vadd.f32 0.0, %v3659
    %3661 = vdwg.mxu0
    %v3663 = vsel %vm164, %v3638, 0
    %3665 = vmatpush.msra.mxu0 0.0
    %3666 = vmatpush.msra.mxu0 0.0
    %3667 = vmatpush.msra.mxu0 0.0
    %3668 = vmatpush.msra.mxu0 0.0
    %3669 = vmatpush.msra.mxu0 0.0
    %3670 = vmatpush.msra.mxu0 0.0
    %3671 = vmatpush.msra.mxu0 0.0
    %3672 = vmatpush.msra.mxu0 0.0
    %3673 = vmatpush.msra.mxu0 0.0
    %3674 = vmatpush.msra.mxu0 0.0
    %3675 = vmatpush.msra.mxu0 0.0
    %3676 = vmatpush.msra.mxu0 0.0
    %3677 = vmatpush.msra.mxu0 %v98
    %3678 = vmatpush.msra.mxu0 %v97
    %3679 = vmatpush.msra.mxu0 %v96
    %3680 = vmatpush.msra.mxu0 %v95
    %3681 = vmatmul.f32.gmra.mxu0 %v3663
    %v3682 = vpop.f32.mrf.mxu0
    %v3683 = vadd.f32 %v3660, %v3682
    %3684 = vdwg.mxu0
    %v3685 = vadd.f32 %v3683, %v146
    %v3687 = vrot.slane %v3685, 1
    %v3688 = vrot.slane %v3685, 2
    %v3689 = vrot.slane %v3685, 3
    %v3690 = vrot.slane %v3685, 4
    %v3691 = vrot.slane %v3685, 5
    %v3692 = vrot.slane %v3685, 6
    %v3693 = vrot.slane %v3685, 7
    %v3694 = vperm.slane %v3685, 0
    %v3695 = vperm.slane %v3687, 0
    %v3696 = vperm.slane %v3688, 0
    %v3697 = vperm.slane %v3689, 0
    %v3698 = vperm.slane %v3690, 0
    %v3699 = vperm.slane %v3691, 0
    %v3700 = vperm.slane %v3692, 0
    %v3701 = vperm.slane %v3693, 0
    %v3710 = vadd.f32 %v207, %v3694
    %v3711 = vadd.f32 %v210, %v3695
    %v3712 = vadd.f32 %v213, %v3696
    %v3713 = vadd.f32 %v216, %v3697
    %v3714 = vadd.f32 %v219, %v3698
    %v3715 = vadd.f32 %v222, %v3699
    %v3716 = vadd.f32 %v225, %v3700
    %v3717 = vadd.f32 %v228, %v3701
    %v3718 = vtanh.pop %v3710
    %v3719 = vtanh.pop %v3711
    %v3720 = vtanh.pop %v3712
    %v3721 = vtanh.pop %v3713
    %v3722 = vtanh.pop %v3714
    %v3723 = vtanh.pop %v3715
    %v3724 = vtanh.pop %v3716
    %v3725 = vtanh.pop %v3717
    %v3726 = vmul.f32 %v3718, %v150
    %v3727 = vmul.f32 %v3719, %v150
    %v3728 = vmul.f32 %v3720, %v150
    %v3729 = vmul.f32 %v3721, %v150
    %v3730 = vmul.f32 %v3722, %v150
    %v3731 = vmul.f32 %v3723, %v150
    %v3732 = vmul.f32 %v3724, %v150
    %v3733 = vmul.f32 %v3725, %v150
    %v3734 = vsel %vm164, %v3726, 0.0
    %3735 = vadd.xlane.f32.xlu0 %v3734
    %v3736 = vpop.xlane.xlu0 %3735
    %v3737 = vsel %vm164, %v3727, 0.0
    %3738 = vadd.xlane.f32.xlu0 %v3737
    %v3739 = vpop.xlane.xlu0 %3738
    %v3740 = vsel %vm164, %v3728, 0.0
    %3741 = vadd.xlane.f32.xlu0 %v3740
    %v3742 = vpop.xlane.xlu0 %3741
    %v3743 = vsel %vm164, %v3729, 0.0
    %3744 = vadd.xlane.f32.xlu0 %v3743
    %v3745 = vpop.xlane.xlu0 %3744
    %v3746 = vsel %vm164, %v3730, 0.0
    %3747 = vadd.xlane.f32.xlu0 %v3746
    %v3748 = vpop.xlane.xlu0 %3747
    %v3749 = vsel %vm164, %v3731, 0.0
    %3750 = vadd.xlane.f32.xlu0 %v3749
    %v3751 = vpop.xlane.xlu0 %3750
    %v3752 = vsel %vm164, %v3732, 0.0
    %3753 = vadd.xlane.f32.xlu0 %v3752
    %v3754 = vpop.xlane.xlu0 %3753
    %v3755 = vsel %vm164, %v3733, 0.0
    %3756 = vadd.xlane.f32.xlu0 %v3755
    %v3757 = vpop.xlane.xlu0 %3756
    %v3766 = vperm.slane %v3736, %v355
    %v3767 = vperm.slane %v3739, %v355
    %v3768 = vperm.slane %v3742, %v355
    %v3769 = vperm.slane %v3745, %v355
    %v3770 = vperm.slane %v3748, %v355
    %v3771 = vperm.slane %v3751, %v355
    %v3772 = vperm.slane %v3754, %v355
    %v3773 = vperm.slane %v3757, %v355
    %v3774 = vsel %vm364, %v3767, %v3766
    %v3775 = vsel %vm366, %v3768, %v3774
    %v3776 = vsel %vm368, %v3769, %v3775
    %v3777 = vsel %vm370, %v3770, %v3776
    %v3778 = vsel %vm372, %v3771, %v3777
    %v3779 = vsel %vm374, %v3772, %v3778
    %v3780 = vsel %vm376, %v3773, %v3779
    %v3782 = vsel %vm379, %v3780, -inf
    %3783 = vmax.xlane.f32.xlu0 %v3782
    %v3784 = vpop.xlane.xlu0 %3783
    %v3786 = vperm.slane %v3784, 0
    %v3787 = vperm.slane %v3784, 1
    %v3788 = vperm.slane %v3784, 2
    %v3789 = vperm.slane %v3784, 3
    %v3790 = vperm.slane %v3784, 4
    %v3791 = vperm.slane %v3784, 5
    %v3792 = vperm.slane %v3784, 6
    %v3793 = vperm.slane %v3784, 7
    %v3802 = vsub.f32 %v3736, %v3786
    %v3803 = vsub.f32 %v3739, %v3787
    %v3804 = vsub.f32 %v3742, %v3788
    %v3805 = vsub.f32 %v3745, %v3789
    %v3806 = vsub.f32 %v3748, %v3790
    %v3807 = vsub.f32 %v3751, %v3791
    %v3808 = vsub.f32 %v3754, %v3792
    %v3809 = vsub.f32 %v3757, %v3793
    %v3810 = vmul.f32 %v3802, 1.442695
    %v3811 = vpow.pop %v3810
    %v3812 = vmul.f32 %v3803, 1.442695
    %v3813 = vpow.pop %v3812
    %v3814 = vmul.f32 %v3804, 1.442695
    %v3815 = vpow.pop %v3814
    %v3816 = vmul.f32 %v3805, 1.442695
    %v3817 = vpow.pop %v3816
    %v3818 = vmul.f32 %v3806, 1.442695
    %v3819 = vpow.pop %v3818
    %v3820 = vmul.f32 %v3807, 1.442695
    %v3821 = vpow.pop %v3820
    %v3822 = vmul.f32 %v3808, 1.442695
    %v3823 = vpow.pop %v3822
    %v3824 = vmul.f32 %v3809, 1.442695
    %v3825 = vpow.pop %v3824
    %3834 = vset.pattern.permute.xlu0 0
    %3835 = vperm.xlu0 %3834, %v3811
    %v3836 = vpop.permute.xlu0 %3835
    %3837 = vset.pattern.permute.xlu0 0
    %3838 = vperm.xlu0 %3837, %v3813
    %v3839 = vpop.permute.xlu0 %3838
    %3840 = vset.pattern.permute.xlu0 0
    %3841 = vperm.xlu0 %3840, %v3815
    %v3842 = vpop.permute.xlu0 %3841
    %3843 = vset.pattern.permute.xlu0 0
    %3844 = vperm.xlu0 %3843, %v3817
    %v3845 = vpop.permute.xlu0 %3844
    %3846 = vset.pattern.permute.xlu0 0
    %3847 = vperm.xlu0 %3846, %v3819
    %v3848 = vpop.permute.xlu0 %3847
    %3849 = vset.pattern.permute.xlu0 0
    %3850 = vperm.xlu0 %3849, %v3821
    %v3851 = vpop.permute.xlu0 %3850
    %3852 = vset.pattern.permute.xlu0 0
    %3853 = vperm.xlu0 %3852, %v3823
    %v3854 = vpop.permute.xlu0 %3853
    %3855 = vset.pattern.permute.xlu0 0
    %3856 = vperm.xlu0 %3855, %v3825
    %v3857 = vpop.permute.xlu0 %3856
    %v3858 = vperm.slane %v3836, %v355
    %v3859 = vperm.slane %v3839, %v355
    %v3860 = vperm.slane %v3842, %v355
    %v3861 = vperm.slane %v3845, %v355
    %v3862 = vperm.slane %v3848, %v355
    %v3863 = vperm.slane %v3851, %v355
    %v3864 = vperm.slane %v3854, %v355
    %v3865 = vperm.slane %v3857, %v355
    %v3866 = vsel %vm364, %v3859, %v3858
    %v3867 = vsel %vm366, %v3860, %v3866
    %v3868 = vsel %vm368, %v3861, %v3867
    %v3869 = vsel %vm370, %v3862, %v3868
    %v3870 = vsel %vm372, %v3863, %v3869
    %v3871 = vsel %vm374, %v3864, %v3870
    %v3872 = vsel %vm376, %v3865, %v3871
    %v3874 = vsel %vm379, %v3872, 0.0
    %3875 = vadd.xlane.f32.xlu0 %v3874
    %v3876 = vpop.xlane.xlu0 %3875
    %v3877 = vrcp.pop %v3876
    %v3879 = vperm.slane %v3877, 0
    %v3880 = vperm.slane %v3877, 1
    %v3881 = vperm.slane %v3877, 2
    %v3882 = vperm.slane %v3877, 3
    %v3883 = vperm.slane %v3877, 4
    %v3884 = vperm.slane %v3877, 5
    %v3885 = vperm.slane %v3877, 6
    %v3886 = vperm.slane %v3877, 7
    %v3895 = vmul.f32 %v3811, %v3879
    %v3896 = vmul.f32 %v3813, %v3880
    %v3897 = vmul.f32 %v3815, %v3881
    %v3898 = vmul.f32 %v3817, %v3882
    %v3899 = vmul.f32 %v3819, %v3883
    %v3900 = vmul.f32 %v3821, %v3884
    %v3901 = vmul.f32 %v3823, %v3885
    %v3902 = vmul.f32 %v3825, %v3886
    %3904 = vset.pattern.permute.xlu0 0
    %3905 = vperm.xlu0 %3904, %v3895
    %v3906 = vpop.permute.xlu0 %3905
    %3909 = vset.pattern.permute.xlu0 0
    %3910 = vperm.xlu0 %3909, %v3896
    %v3911 = vpop.permute.xlu0 %3910
    %3914 = vset.pattern.permute.xlu0 0
    %3915 = vperm.xlu0 %3914, %v3897
    %v3916 = vpop.permute.xlu0 %3915
    %3919 = vset.pattern.permute.xlu0 0
    %3920 = vperm.xlu0 %3919, %v3898
    %v3921 = vpop.permute.xlu0 %3920
    %3924 = vset.pattern.permute.xlu0 0
    %3925 = vperm.xlu0 %3924, %v3899
    %v3926 = vpop.permute.xlu0 %3925
    %3929 = vset.pattern.permute.xlu0 0
    %3930 = vperm.xlu0 %3929, %v3900
    %v3931 = vpop.permute.xlu0 %3930
    %3934 = vset.pattern.permute.xlu0 0
    %3935 = vperm.xlu0 %3934, %v3901
    %v3936 = vpop.permute.xlu0 %3935
    %3939 = vset.pattern.permute.xlu0 0
    %3940 = vperm.xlu0 %3939, %v3902
    %v3941 = vpop.permute.xlu0 %3940
    %v3943 = vmul.f32 %v3906, %v79
    %v3944 = vmul.f32 %v3911, %v80
    %v3945 = vmul.f32 %v3916, %v81
    %v3946 = vmul.f32 %v3921, %v82
    %v3947 = vmul.f32 %v3926, %v83
    %v3948 = vmul.f32 %v3931, %v84
    %v3949 = vmul.f32 %v3936, %v85
    %v3950 = vmul.f32 %v3941, %v86
    %v3951 = vsel %vm164, %v3943, 0.0
    %v3952 = vrot.slane %v3951, 4
    %v3953 = vadd.f32 %v3951, %v3952
    %v3954 = vrot.slane %v3953, 2
    %v3955 = vadd.f32 %v3953, %v3954
    %v3956 = vrot.slane %v3955, 1
    %v3957 = vadd.f32 %v3955, %v3956
    %v3958 = vsel %vm164, %v3944, 0.0
    %v3959 = vrot.slane %v3958, 4
    %v3960 = vadd.f32 %v3958, %v3959
    %v3961 = vrot.slane %v3960, 2
    %v3962 = vadd.f32 %v3960, %v3961
    %v3963 = vrot.slane %v3962, 1
    %v3964 = vadd.f32 %v3962, %v3963
    %v3965 = vsel %vm164, %v3945, 0.0
    %v3966 = vrot.slane %v3965, 4
    %v3967 = vadd.f32 %v3965, %v3966
    %v3968 = vrot.slane %v3967, 2
    %v3969 = vadd.f32 %v3967, %v3968
    %v3970 = vrot.slane %v3969, 1
    %v3971 = vadd.f32 %v3969, %v3970
    %v3972 = vsel %vm164, %v3946, 0.0
    %v3973 = vrot.slane %v3972, 4
    %v3974 = vadd.f32 %v3972, %v3973
    %v3975 = vrot.slane %v3974, 2
    %v3976 = vadd.f32 %v3974, %v3975
    %v3977 = vrot.slane %v3976, 1
    %v3978 = vadd.f32 %v3976, %v3977
    %v3979 = vsel %vm164, %v3947, 0.0
    %v3980 = vrot.slane %v3979, 4
    %v3981 = vadd.f32 %v3979, %v3980
    %v3982 = vrot.slane %v3981, 2
    %v3983 = vadd.f32 %v3981, %v3982
    %v3984 = vrot.slane %v3983, 1
    %v3985 = vadd.f32 %v3983, %v3984
    %v3986 = vsel %vm164, %v3948, 0.0
    %v3987 = vrot.slane %v3986, 4
    %v3988 = vadd.f32 %v3986, %v3987
    %v3989 = vrot.slane %v3988, 2
    %v3990 = vadd.f32 %v3988, %v3989
    %v3991 = vrot.slane %v3990, 1
    %v3992 = vadd.f32 %v3990, %v3991
    %v3993 = vsel %vm164, %v3949, 0.0
    %v3994 = vrot.slane %v3993, 4
    %v3995 = vadd.f32 %v3993, %v3994
    %v3996 = vrot.slane %v3995, 2
    %v3997 = vadd.f32 %v3995, %v3996
    %v3998 = vrot.slane %v3997, 1
    %v3999 = vadd.f32 %v3997, %v3998
    %v4000 = vsel %vm164, %v3950, 0.0
    %v4001 = vrot.slane %v4000, 4
    %v4002 = vadd.f32 %v4000, %v4001
    %v4003 = vrot.slane %v4002, 2
    %v4004 = vadd.f32 %v4002, %v4003
    %v4005 = vrot.slane %v4004, 1
    %v4006 = vadd.f32 %v4004, %v4005
    %v4015 = vsel %vm364, %v3964, %v3957
    %v4016 = vsel %vm366, %v3971, %v4015
    %v4017 = vsel %vm368, %v3978, %v4016
    %v4018 = vsel %vm370, %v3985, %v4017
    %v4019 = vsel %vm372, %v3992, %v4018
    %v4020 = vsel %vm374, %v3999, %v4019
    %v4021 = vsel %vm376, %v4006, %v4020
    %v4022 = vsel %vm164, %v4021, 0
    %4024 = vmatpush.msra.mxu0 0.0
    %4025 = vmatpush.msra.mxu0 0.0
    %4026 = vmatpush.msra.mxu0 0.0
    %4027 = vmatpush.msra.mxu0 0.0
    %4028 = vmatpush.msra.mxu0 0.0
    %4029 = vmatpush.msra.mxu0 0.0
    %4030 = vmatpush.msra.mxu0 0.0
    %4031 = vmatpush.msra.mxu0 0.0
    %4032 = vmatpush.msra.mxu0 0.0
    %4033 = vmatpush.msra.mxu0 0.0
    %4034 = vmatpush.msra.mxu0 0.0
    %4035 = vmatpush.msra.mxu0 0.0
    %4036 = vmatpush.msra.mxu0 %v110
    %4037 = vmatpush.msra.mxu0 %v109
    %4038 = vmatpush.msra.mxu0 %v108
    %4039 = vmatpush.msra.mxu0 %v107
    %4040 = vmatmul.f32.gmra.mxu0 %v4022
    %v4041 = vpop.f32.mrf.mxu0
    %v4042 = vadd.f32 %v93, %v4041
    %4043 = vdwg.mxu0
    %4045 = vset.pattern.permute.xlu0 0
    %4046 = vperm.xlu0 %4045, %v4042
    %v4047 = vpop.permute.xlu0 %4046
    %v4049 = vmul.f32 %v4047, %v648
    %4050 = vmatpush.msra.mxu0 0.0
    %4051 = vmatpush.msra.mxu0 0.0
    %4052 = vmatpush.msra.mxu0 0.0
    %4053 = vmatpush.msra.mxu0 0.0
    %4054 = vmatpush.msra.mxu0 0.0
    %4055 = vmatpush.msra.mxu0 0.0
    %4056 = vmatpush.msra.mxu0 0.0
    %4057 = vmatpush.msra.mxu0 0.0
    %4058 = vmatpush.msra.mxu0 0.0
    %4059 = vmatpush.msra.mxu0 0.0
    %4060 = vmatpush.msra.mxu0 0.0
    %4061 = vmatpush.msra.mxu0 0.0
    %4062 = vmatpush.msra.mxu0 %v118
    %4063 = vmatpush.msra.mxu0 %v117
    %4064 = vmatpush.msra.mxu0 %v116
    %4065 = vmatpush.msra.mxu0 %v115
    %4066 = vmatmul.f32.gmra.mxu0 %v3663
    %v4067 = vpop.f32.mrf.mxu0
    %v4068 = vadd.f32 0.0, %v4067
    %4069 = vdwg.mxu0
    %v4070 = vadd.f32 %v4049, %v4068
    %v4071 = vadd.f32 %v4070, %v153
    %v4072 = vxor.u32 %v4071, 2147483648
    %v4073 = vmul.f32 %v4072, 1.442695
    %v4074 = vpow.pop %v4073
    %v4075 = vadd.f32 %v4074, 1.0
    %v4076 = vrcp.pop %v4075
    %v4077 = vmul.f32 %v4075, %v4076
    %v4078 = vsub.f32 1.0, %v4077
    %v4079 = vmul.f32 %v4076, %v4078
    %v4080 = vadd.f32 %v4076, %v4079
    %vm4081 = vweird.f32 %v4075
    %vm4082 = vweird.f32 %v4076
    %vm4083 = vmor %vm4081, %vm4082
    %v4084 = vsel %vm4083, %v4076, %v4080
    %v4085 = vand.u32 2147483647, %v4075
    %vm4086 = vcmp.eq.f32.partialorder %v4085, 8.507059e+37
    %v4087 = vand.u32 %v4075, 2147483648
    %v4088 = vor.u32 1.1754944e-38, %v4087
    %v4089 = vsel %vm4086, %v4088, %v4084
    %v4090 = vmul.f32 1.0, %v4089
    %v4091 = vmul.f32 %v4047, %v693
    %4092 = vmatpush.msra.mxu0 0.0
    %4093 = vmatpush.msra.mxu0 0.0
    %4094 = vmatpush.msra.mxu0 0.0
    %4095 = vmatpush.msra.mxu0 0.0
    %4096 = vmatpush.msra.mxu0 0.0
    %4097 = vmatpush.msra.mxu0 0.0
    %4098 = vmatpush.msra.mxu0 0.0
    %4099 = vmatpush.msra.mxu0 0.0
    %4100 = vmatpush.msra.mxu0 0.0
    %4101 = vmatpush.msra.mxu0 0.0
    %4102 = vmatpush.msra.mxu0 0.0
    %4103 = vmatpush.msra.mxu0 0.0
    %4104 = vmatpush.msra.mxu0 %v122
    %4105 = vmatpush.msra.mxu0 %v121
    %4106 = vmatpush.msra.mxu0 %v120
    %4107 = vmatpush.msra.mxu0 %v119
    %4108 = vmatmul.f32.gmra.mxu0 %v3663
    %v4109 = vpop.f32.mrf.mxu0
    %v4110 = vadd.f32 0.0, %v4109
    %4111 = vdwg.mxu0
    %v4112 = vadd.f32 %v4091, %v4110
    %v4113 = vadd.f32 %v4112, %v156
    %v4114 = vxor.u32 %v4113, 2147483648
    %v4115 = vmul.f32 %v4114, 1.442695
    %v4116 = vpow.pop %v4115
    %v4117 = vadd.f32 %v4116, 1.0
    %v4118 = vrcp.pop %v4117
    %v4119 = vmul.f32 %v4117, %v4118
    %v4120 = vsub.f32 1.0, %v4119
    %v4121 = vmul.f32 %v4118, %v4120
    %v4122 = vadd.f32 %v4118, %v4121
    %vm4123 = vweird.f32 %v4117
    %vm4124 = vweird.f32 %v4118
    %vm4125 = vmor %vm4123, %vm4124
    %v4126 = vsel %vm4125, %v4118, %v4122
    %v4127 = vand.u32 2147483647, %v4117
    %vm4128 = vcmp.eq.f32.partialorder %v4127, 8.507059e+37
    %v4129 = vand.u32 %v4117, 2147483648
    %v4130 = vor.u32 1.1754944e-38, %v4129
    %v4131 = vsel %vm4128, %v4130, %v4126
    %v4132 = vmul.f32 1.0, %v4131
    %v4133 = vmul.f32 %v4047, %v738
    %4134 = vmatpush.msra.mxu0 0.0
    %4135 = vmatpush.msra.mxu0 0.0
    %4136 = vmatpush.msra.mxu0 0.0
    %4137 = vmatpush.msra.mxu0 0.0
    %4138 = vmatpush.msra.mxu0 0.0
    %4139 = vmatpush.msra.mxu0 0.0
    %4140 = vmatpush.msra.mxu0 0.0
    %4141 = vmatpush.msra.mxu0 0.0
    %4142 = vmatpush.msra.mxu0 0.0
    %4143 = vmatpush.msra.mxu0 0.0
    %4144 = vmatpush.msra.mxu0 0.0
    %4145 = vmatpush.msra.mxu0 0.0
    %4146 = vmatpush.msra.mxu0 %v126
    %4147 = vmatpush.msra.mxu0 %v125
    %4148 = vmatpush.msra.mxu0 %v124
    %4149 = vmatpush.msra.mxu0 %v123
    %4150 = vmatmul.f32.gmra.mxu0 %v3663
    %v4151 = vpop.f32.mrf.mxu0
    %v4152 = vadd.f32 0.0, %v4151
    %4153 = vdwg.mxu0
    %v4154 = vadd.f32 %v4133, %v4152
    %v4155 = vadd.f32 %v4154, %v159
    %v4156 = vtanh.pop %v4155
    %v4157 = vmul.f32 %v4047, %v765
    %4158 = vmatpush.msra.mxu0 0.0
    %4159 = vmatpush.msra.mxu0 0.0
    %4160 = vmatpush.msra.mxu0 0.0
    %4161 = vmatpush.msra.mxu0 0.0
    %4162 = vmatpush.msra.mxu0 0.0
    %4163 = vmatpush.msra.mxu0 0.0
    %4164 = vmatpush.msra.mxu0 0.0
    %4165 = vmatpush.msra.mxu0 0.0
    %4166 = vmatpush.msra.mxu0 0.0
    %4167 = vmatpush.msra.mxu0 0.0
    %4168 = vmatpush.msra.mxu0 0.0
    %4169 = vmatpush.msra.mxu0 0.0
    %4170 = vmatpush.msra.mxu0 %v130
    %4171 = vmatpush.msra.mxu0 %v129
    %4172 = vmatpush.msra.mxu0 %v128
    %4173 = vmatpush.msra.mxu0 %v127
    %4174 = vmatmul.f32.gmra.mxu0 %v3663
    %v4175 = vpop.f32.mrf.mxu0
    %v4176 = vadd.f32 0.0, %v4175
    %4177 = vdwg.mxu0
    %v4178 = vadd.f32 %v4157, %v4176
    %v4179 = vadd.f32 %v4178, %v162
    %v4180 = vxor.u32 %v4179, 2147483648
    %v4181 = vmul.f32 %v4180, 1.442695
    %v4182 = vpow.pop %v4181
    %v4183 = vadd.f32 %v4182, 1.0
    %v4184 = vrcp.pop %v4183
    %v4185 = vmul.f32 %v4183, %v4184
    %v4186 = vsub.f32 1.0, %v4185
    %v4187 = vmul.f32 %v4184, %v4186
    %v4188 = vadd.f32 %v4184, %v4187
    %vm4189 = vweird.f32 %v4183
    %vm4190 = vweird.f32 %v4184
    %vm4191 = vmor %vm4189, %vm4190
    %v4192 = vsel %vm4191, %v4184, %v4188
    %v4193 = vand.u32 2147483647, %v4183
    %vm4194 = vcmp.eq.f32.partialorder %v4193, 8.507059e+37
    %v4195 = vand.u32 %v4183, 2147483648
    %v4196 = vor.u32 1.1754944e-38, %v4195
    %v4197 = vsel %vm4194, %v4196, %v4192
    %v4198 = vmul.f32 1.0, %v4197
    %v4199 = vmul.f32 %v4132, %v3636
    %v4200 = vmul.f32 %v4090, %v4156
    %v4201 = vadd.f32 %v4199, %v4200
    %v4202 = vtanh.pop %v4201
    %v4203 = vmul.f32 %v4198, %v4202
    %v4205 = vsel %vm164, %v4201, 0
    %4207 = vmatpush.msra.mxu0 0.0
    %4208 = vmatpush.msra.mxu0 0.0
    %4209 = vmatpush.msra.mxu0 0.0
    %4210 = vmatpush.msra.mxu0 0.0
    %4211 = vmatpush.msra.mxu0 0.0
    %4212 = vmatpush.msra.mxu0 0.0
    %4213 = vmatpush.msra.mxu0 0.0
    %4214 = vmatpush.msra.mxu0 0.0
    %4215 = vmatpush.msra.mxu0 0.0
    %4216 = vmatpush.msra.mxu0 0.0
    %4217 = vmatpush.msra.mxu0 0.0
    %4218 = vmatpush.msra.mxu0 0.0
    %4219 = vmatpush.msra.mxu0 %v102
    %4220 = vmatpush.msra.mxu0 %v101
    %4221 = vmatpush.msra.mxu0 %v100
    %4222 = vmatpush.msra.mxu0 %v99
    %4223 = vmatmul.f32.gmra.mxu0 %v4205
    %v4224 = vpop.f32.mrf.mxu0
    %v4225 = vadd.f32 0.0, %v4224
    %4226 = vdwg.mxu0
    %v4228 = vsel %vm164, %v4203, 0
    %4230 = vmatpush.msra.mxu0 0.0
    %4231 = vmatpush.msra.mxu0 0.0
    %4232 = vmatpush.msra.mxu0 0.0
    %4233 = vmatpush.msra.mxu0 0.0
    %4234 = vmatpush.msra.mxu0 0.0
    %4235 = vmatpush.msra.mxu0 0.0
    %4236 = vmatpush.msra.mxu0 0.0
    %4237 = vmatpush.msra.mxu0 0.0
    %4238 = vmatpush.msra.mxu0 0.0
    %4239 = vmatpush.msra.mxu0 0.0
    %4240 = vmatpush.msra.mxu0 0.0
    %4241 = vmatpush.msra.mxu0 0.0
    %4242 = vmatpush.msra.mxu0 %v98
    %4243 = vmatpush.msra.mxu0 %v97
    %4244 = vmatpush.msra.mxu0 %v96
    %4245 = vmatpush.msra.mxu0 %v95
    %4246 = vmatmul.f32.gmra.mxu0 %v4228
    %v4247 = vpop.f32.mrf.mxu0
    %v4248 = vadd.f32 %v4225, %v4247
    %4249 = vdwg.mxu0
    %v4250 = vadd.f32 %v4248, %v146
    %v4252 = vrot.slane %v4250, 1
    %v4253 = vrot.slane %v4250, 2
    %v4254 = vrot.slane %v4250, 3
    %v4255 = vrot.slane %v4250, 4
    %v4256 = vrot.slane %v4250, 5
    %v4257 = vrot.slane %v4250, 6
    %v4258 = vrot.slane %v4250, 7
    %v4259 = vperm.slane %v4250, 0
    %v4260 = vperm.slane %v4252, 0
    %v4261 = vperm.slane %v4253, 0
    %v4262 = vperm.slane %v4254, 0
    %v4263 = vperm.slane %v4255, 0
    %v4264 = vperm.slane %v4256, 0
    %v4265 = vperm.slane %v4257, 0
    %v4266 = vperm.slane %v4258, 0
    %v4275 = vadd.f32 %v207, %v4259
    %v4276 = vadd.f32 %v210, %v4260
    %v4277 = vadd.f32 %v213, %v4261
    %v4278 = vadd.f32 %v216, %v4262
    %v4279 = vadd.f32 %v219, %v4263
    %v4280 = vadd.f32 %v222, %v4264
    %v4281 = vadd.f32 %v225, %v4265
    %v4282 = vadd.f32 %v228, %v4266
    %v4283 = vtanh.pop %v4275
    %v4284 = vtanh.pop %v4276
    %v4285 = vtanh.pop %v4277
    %v4286 = vtanh.pop %v4278
    %v4287 = vtanh.pop %v4279
    %v4288 = vtanh.pop %v4280
    %v4289 = vtanh.pop %v4281
    %v4290 = vtanh.pop %v4282
    %v4291 = vmul.f32 %v4283, %v150
    %v4292 = vmul.f32 %v4284, %v150
    %v4293 = vmul.f32 %v4285, %v150
    %v4294 = vmul.f32 %v4286, %v150
    %v4295 = vmul.f32 %v4287, %v150
    %v4296 = vmul.f32 %v4288, %v150
    %v4297 = vmul.f32 %v4289, %v150
    %v4298 = vmul.f32 %v4290, %v150
    %v4299 = vsel %vm164, %v4291, 0.0
    %4300 = vadd.xlane.f32.xlu0 %v4299
    %v4301 = vpop.xlane.xlu0 %4300
    %v4302 = vsel %vm164, %v4292, 0.0
    %4303 = vadd.xlane.f32.xlu0 %v4302
    %v4304 = vpop.xlane.xlu0 %4303
    %v4305 = vsel %vm164, %v4293, 0.0
    %4306 = vadd.xlane.f32.xlu0 %v4305
    %v4307 = vpop.xlane.xlu0 %4306
    %v4308 = vsel %vm164, %v4294, 0.0
    %4309 = vadd.xlane.f32.xlu0 %v4308
    %v4310 = vpop.xlane.xlu0 %4309
    %v4311 = vsel %vm164, %v4295, 0.0
    %4312 = vadd.xlane.f32.xlu0 %v4311
    %v4313 = vpop.xlane.xlu0 %4312
    %v4314 = vsel %vm164, %v4296, 0.0
    %4315 = vadd.xlane.f32.xlu0 %v4314
    %v4316 = vpop.xlane.xlu0 %4315
    %v4317 = vsel %vm164, %v4297, 0.0
    %4318 = vadd.xlane.f32.xlu0 %v4317
    %v4319 = vpop.xlane.xlu0 %4318
    %v4320 = vsel %vm164, %v4298, 0.0
    %4321 = vadd.xlane.f32.xlu0 %v4320
    %v4322 = vpop.xlane.xlu0 %4321
    %v4331 = vperm.slane %v4301, %v355
    %v4332 = vperm.slane %v4304, %v355
    %v4333 = vperm.slane %v4307, %v355
    %v4334 = vperm.slane %v4310, %v355
    %v4335 = vperm.slane %v4313, %v355
    %v4336 = vperm.slane %v4316, %v355
    %v4337 = vperm.slane %v4319, %v355
    %v4338 = vperm.slane %v4322, %v355
    %v4339 = vsel %vm364, %v4332, %v4331
    %v4340 = vsel %vm366, %v4333, %v4339
    %v4341 = vsel %vm368, %v4334, %v4340
    %v4342 = vsel %vm370, %v4335, %v4341
    %v4343 = vsel %vm372, %v4336, %v4342
    %v4344 = vsel %vm374, %v4337, %v4343
    %v4345 = vsel %vm376, %v4338, %v4344
    %v4347 = vsel %vm379, %v4345, -inf
    %4348 = vmax.xlane.f32.xlu0 %v4347
    %v4349 = vpop.xlane.xlu0 %4348
    %v4351 = vperm.slane %v4349, 0
    %v4352 = vperm.slane %v4349, 1
    %v4353 = vperm.slane %v4349, 2
    %v4354 = vperm.slane %v4349, 3
    %v4355 = vperm.slane %v4349, 4
    %v4356 = vperm.slane %v4349, 5
    %v4357 = vperm.slane %v4349, 6
    %v4358 = vperm.slane %v4349, 7
    %v4367 = vsub.f32 %v4301, %v4351
    %v4368 = vsub.f32 %v4304, %v4352
    %v4369 = vsub.f32 %v4307, %v4353
    %v4370 = vsub.f32 %v4310, %v4354
    %v4371 = vsub.f32 %v4313, %v4355
    %v4372 = vsub.f32 %v4316, %v4356
    %v4373 = vsub.f32 %v4319, %v4357
    %v4374 = vsub.f32 %v4322, %v4358
    %v4375 = vmul.f32 %v4367, 1.442695
    %v4376 = vpow.pop %v4375
    %v4377 = vmul.f32 %v4368, 1.442695
    %v4378 = vpow.pop %v4377
    %v4379 = vmul.f32 %v4369, 1.442695
    %v4380 = vpow.pop %v4379
    %v4381 = vmul.f32 %v4370, 1.442695
    %v4382 = vpow.pop %v4381
    %v4383 = vmul.f32 %v4371, 1.442695
    %v4384 = vpow.pop %v4383
    %v4385 = vmul.f32 %v4372, 1.442695
    %v4386 = vpow.pop %v4385
    %v4387 = vmul.f32 %v4373, 1.442695
    %v4388 = vpow.pop %v4387
    %v4389 = vmul.f32 %v4374, 1.442695
    %v4390 = vpow.pop %v4389
    %4399 = vset.pattern.permute.xlu0 0
    %4400 = vperm.xlu0 %4399, %v4376
    %v4401 = vpop.permute.xlu0 %4400
    %4402 = vset.pattern.permute.xlu0 0
    %4403 = vperm.xlu0 %4402, %v4378
    %v4404 = vpop.permute.xlu0 %4403
    %4405 = vset.pattern.permute.xlu0 0
    %4406 = vperm.xlu0 %4405, %v4380
    %v4407 = vpop.permute.xlu0 %4406
    %4408 = vset.pattern.permute.xlu0 0
    %4409 = vperm.xlu0 %4408, %v4382
    %v4410 = vpop.permute.xlu0 %4409
    %4411 = vset.pattern.permute.xlu0 0
    %4412 = vperm.xlu0 %4411, %v4384
    %v4413 = vpop.permute.xlu0 %4412
    %4414 = vset.pattern.permute.xlu0 0
    %4415 = vperm.xlu0 %4414, %v4386
    %v4416 = vpop.permute.xlu0 %4415
    %4417 = vset.pattern.permute.xlu0 0
    %4418 = vperm.xlu0 %4417, %v4388
    %v4419 = vpop.permute.xlu0 %4418
    %4420 = vset.pattern.permute.xlu0 0
    %4421 = vperm.xlu0 %4420, %v4390
    %v4422 = vpop.permute.xlu0 %4421
    %v4423 = vperm.slane %v4401, %v355
    %v4424 = vperm.slane %v4404, %v355
    %v4425 = vperm.slane %v4407, %v355
    %v4426 = vperm.slane %v4410, %v355
    %v4427 = vperm.slane %v4413, %v355
    %v4428 = vperm.slane %v4416, %v355
    %v4429 = vperm.slane %v4419, %v355
    %v4430 = vperm.slane %v4422, %v355
    %v4431 = vsel %vm364, %v4424, %v4423
    %v4432 = vsel %vm366, %v4425, %v4431
    %v4433 = vsel %vm368, %v4426, %v4432
    %v4434 = vsel %vm370, %v4427, %v4433
    %v4435 = vsel %vm372, %v4428, %v4434
    %v4436 = vsel %vm374, %v4429, %v4435
    %v4437 = vsel %vm376, %v4430, %v4436
    %v4439 = vsel %vm379, %v4437, 0.0
    %4440 = vadd.xlane.f32.xlu0 %v4439
    %v4441 = vpop.xlane.xlu0 %4440
    %v4442 = vrcp.pop %v4441
    %v4444 = vperm.slane %v4442, 0
    %v4445 = vperm.slane %v4442, 1
    %v4446 = vperm.slane %v4442, 2
    %v4447 = vperm.slane %v4442, 3
    %v4448 = vperm.slane %v4442, 4
    %v4449 = vperm.slane %v4442, 5
    %v4450 = vperm.slane %v4442, 6
    %v4451 = vperm.slane %v4442, 7
    %v4460 = vmul.f32 %v4376, %v4444
    %v4461 = vmul.f32 %v4378, %v4445
    %v4462 = vmul.f32 %v4380, %v4446
    %v4463 = vmul.f32 %v4382, %v4447
    %v4464 = vmul.f32 %v4384, %v4448
    %v4465 = vmul.f32 %v4386, %v4449
    %v4466 = vmul.f32 %v4388, %v4450
    %v4467 = vmul.f32 %v4390, %v4451
    %4469 = vset.pattern.permute.xlu0 0
    %4470 = vperm.xlu0 %4469, %v4460
    %v4471 = vpop.permute.xlu0 %4470
    %4474 = vset.pattern.permute.xlu0 0
    %4475 = vperm.xlu0 %4474, %v4461
    %v4476 = vpop.permute.xlu0 %4475
    %4479 = vset.pattern.permute.xlu0 0
    %4480 = vperm.xlu0 %4479, %v4462
    %v4481 = vpop.permute.xlu0 %4480
    %4484 = vset.pattern.permute.xlu0 0
    %4485 = vperm.xlu0 %4484, %v4463
    %v4486 = vpop.permute.xlu0 %4485
    %4489 = vset.pattern.permute.xlu0 0
    %4490 = vperm.xlu0 %4489, %v4464
    %v4491 = vpop.permute.xlu0 %4490
    %4494 = vset.pattern.permute.xlu0 0
    %4495 = vperm.xlu0 %4494, %v4465
    %v4496 = vpop.permute.xlu0 %4495
    %4499 = vset.pattern.permute.xlu0 0
    %4500 = vperm.xlu0 %4499, %v4466
    %v4501 = vpop.permute.xlu0 %4500
    %4504 = vset.pattern.permute.xlu0 0
    %4505 = vperm.xlu0 %4504, %v4467
    %v4506 = vpop.permute.xlu0 %4505
    %v4508 = vmul.f32 %v4471, %v79
    %v4509 = vmul.f32 %v4476, %v80
    %v4510 = vmul.f32 %v4481, %v81
    %v4511 = vmul.f32 %v4486, %v82
    %v4512 = vmul.f32 %v4491, %v83
    %v4513 = vmul.f32 %v4496, %v84
    %v4514 = vmul.f32 %v4501, %v85
    %v4515 = vmul.f32 %v4506, %v86
    %v4516 = vsel %vm164, %v4508, 0.0
    %v4517 = vrot.slane %v4516, 4
    %v4518 = vadd.f32 %v4516, %v4517
    %v4519 = vrot.slane %v4518, 2
    %v4520 = vadd.f32 %v4518, %v4519
    %v4521 = vrot.slane %v4520, 1
    %v4522 = vadd.f32 %v4520, %v4521
    %v4523 = vsel %vm164, %v4509, 0.0
    %v4524 = vrot.slane %v4523, 4
    %v4525 = vadd.f32 %v4523, %v4524
    %v4526 = vrot.slane %v4525, 2
    %v4527 = vadd.f32 %v4525, %v4526
    %v4528 = vrot.slane %v4527, 1
    %v4529 = vadd.f32 %v4527, %v4528
    %v4530 = vsel %vm164, %v4510, 0.0
    %v4531 = vrot.slane %v4530, 4
    %v4532 = vadd.f32 %v4530, %v4531
    %v4533 = vrot.slane %v4532, 2
    %v4534 = vadd.f32 %v4532, %v4533
    %v4535 = vrot.slane %v4534, 1
    %v4536 = vadd.f32 %v4534, %v4535
    %v4537 = vsel %vm164, %v4511, 0.0
    %v4538 = vrot.slane %v4537, 4
    %v4539 = vadd.f32 %v4537, %v4538
    %v4540 = vrot.slane %v4539, 2
    %v4541 = vadd.f32 %v4539, %v4540
    %v4542 = vrot.slane %v4541, 1
    %v4543 = vadd.f32 %v4541, %v4542
    %v4544 = vsel %vm164, %v4512, 0.0
    %v4545 = vrot.slane %v4544, 4
    %v4546 = vadd.f32 %v4544, %v4545
    %v4547 = vrot.slane %v4546, 2
    %v4548 = vadd.f32 %v4546, %v4547
    %v4549 = vrot.slane %v4548, 1
    %v4550 = vadd.f32 %v4548, %v4549
    %v4551 = vsel %vm164, %v4513, 0.0
    %v4552 = vrot.slane %v4551, 4
    %v4553 = vadd.f32 %v4551, %v4552
    %v4554 = vrot.slane %v4553, 2
    %v4555 = vadd.f32 %v4553, %v4554
    %v4556 = vrot.slane %v4555, 1
    %v4557 = vadd.f32 %v4555, %v4556
    %v4558 = vsel %vm164, %v4514, 0.0
    %v4559 = vrot.slane %v4558, 4
    %v4560 = vadd.f32 %v4558, %v4559
    %v4561 = vrot.slane %v4560, 2
    %v4562 = vadd.f32 %v4560, %v4561
    %v4563 = vrot.slane %v4562, 1
    %v4564 = vadd.f32 %v4562, %v4563
    %v4565 = vsel %vm164, %v4515, 0.0
    %v4566 = vrot.slane %v4565, 4
    %v4567 = vadd.f32 %v4565, %v4566
    %v4568 = vrot.slane %v4567, 2
    %v4569 = vadd.f32 %v4567, %v4568
    %v4570 = vrot.slane %v4569, 1
    %v4571 = vadd.f32 %v4569, %v4570
    %v4580 = vsel %vm364, %v4529, %v4522
    %v4581 = vsel %vm366, %v4536, %v4580
    %v4582 = vsel %vm368, %v4543, %v4581
    %v4583 = vsel %vm370, %v4550, %v4582
    %v4584 = vsel %vm372, %v4557, %v4583
    %v4585 = vsel %vm374, %v4564, %v4584
    %v4586 = vsel %vm376, %v4571, %v4585
    %v4587 = vsel %vm164, %v4586, 0
    %4589 = vmatpush.msra.mxu0 0.0
    %4590 = vmatpush.msra.mxu0 0.0
    %4591 = vmatpush.msra.mxu0 0.0
    %4592 = vmatpush.msra.mxu0 0.0
    %4593 = vmatpush.msra.mxu0 0.0
    %4594 = vmatpush.msra.mxu0 0.0
    %4595 = vmatpush.msra.mxu0 0.0
    %4596 = vmatpush.msra.mxu0 0.0
    %4597 = vmatpush.msra.mxu0 0.0
    %4598 = vmatpush.msra.mxu0 0.0
    %4599 = vmatpush.msra.mxu0 0.0
    %4600 = vmatpush.msra.mxu0 0.0
    %4601 = vmatpush.msra.mxu0 %v110
    %4602 = vmatpush.msra.mxu0 %v109
    %4603 = vmatpush.msra.mxu0 %v108
    %4604 = vmatpush.msra.mxu0 %v107
    %4605 = vmatmul.f32.gmra.mxu0 %v4587
    %v4606 = vpop.f32.mrf.mxu0
    %v4607 = vadd.f32 %v94, %v4606
    %4608 = vdwg.mxu0
    %4610 = vset.pattern.permute.xlu0 0
    %4611 = vperm.xlu0 %4610, %v4607
    %v4612 = vpop.permute.xlu0 %4611
    %v4614 = vmul.f32 %v4612, %v648
    %4615 = vmatpush.msra.mxu0 0.0
    %4616 = vmatpush.msra.mxu0 0.0
    %4617 = vmatpush.msra.mxu0 0.0
    %4618 = vmatpush.msra.mxu0 0.0
    %4619 = vmatpush.msra.mxu0 0.0
    %4620 = vmatpush.msra.mxu0 0.0
    %4621 = vmatpush.msra.mxu0 0.0
    %4622 = vmatpush.msra.mxu0 0.0
    %4623 = vmatpush.msra.mxu0 0.0
    %4624 = vmatpush.msra.mxu0 0.0
    %4625 = vmatpush.msra.mxu0 0.0
    %4626 = vmatpush.msra.mxu0 0.0
    %4627 = vmatpush.msra.mxu0 %v118
    %4628 = vmatpush.msra.mxu0 %v117
    %4629 = vmatpush.msra.mxu0 %v116
    %4630 = vmatpush.msra.mxu0 %v115
    %4631 = vmatmul.f32.gmra.mxu0 %v4228
    %v4632 = vpop.f32.mrf.mxu0
    %v4633 = vadd.f32 0.0, %v4632
    %4634 = vdwg.mxu0
    %v4635 = vadd.f32 %v4614, %v4633
    %v4636 = vadd.f32 %v4635, %v153
    %v4637 = vxor.u32 %v4636, 2147483648
    %v4638 = vmul.f32 %v4637, 1.442695
    %v4639 = vpow.pop %v4638
    %v4640 = vadd.f32 %v4639, 1.0
    %v4641 = vrcp.pop %v4640
    %v4642 = vmul.f32 %v4640, %v4641
    %v4643 = vsub.f32 1.0, %v4642
    %v4644 = vmul.f32 %v4641, %v4643
    %v4645 = vadd.f32 %v4641, %v4644
    %vm4646 = vweird.f32 %v4640
    %vm4647 = vweird.f32 %v4641
    %vm4648 = vmor %vm4646, %vm4647
    %v4649 = vsel %vm4648, %v4641, %v4645
    %v4650 = vand.u32 2147483647, %v4640
    %vm4651 = vcmp.eq.f32.partialorder %v4650, 8.507059e+37
    %v4652 = vand.u32 %v4640, 2147483648
    %v4653 = vor.u32 1.1754944e-38, %v4652
    %v4654 = vsel %vm4651, %v4653, %v4649
    %v4655 = vmul.f32 1.0, %v4654
    %v4656 = vmul.f32 %v4612, %v693
    %4657 = vmatpush.msra.mxu0 0.0
    %4658 = vmatpush.msra.mxu0 0.0
    %4659 = vmatpush.msra.mxu0 0.0
    %4660 = vmatpush.msra.mxu0 0.0
    %4661 = vmatpush.msra.mxu0 0.0
    %4662 = vmatpush.msra.mxu0 0.0
    %4663 = vmatpush.msra.mxu0 0.0
    %4664 = vmatpush.msra.mxu0 0.0
    %4665 = vmatpush.msra.mxu0 0.0
    %4666 = vmatpush.msra.mxu0 0.0
    %4667 = vmatpush.msra.mxu0 0.0
    %4668 = vmatpush.msra.mxu0 0.0
    %4669 = vmatpush.msra.mxu0 %v122
    %4670 = vmatpush.msra.mxu0 %v121
    %4671 = vmatpush.msra.mxu0 %v120
    %4672 = vmatpush.msra.mxu0 %v119
    %4673 = vmatmul.f32.gmra.mxu0 %v4228
    %v4674 = vpop.f32.mrf.mxu0
    %v4675 = vadd.f32 0.0, %v4674
    %4676 = vdwg.mxu0
    %v4677 = vadd.f32 %v4656, %v4675
    %v4678 = vadd.f32 %v4677, %v156
    %v4679 = vxor.u32 %v4678, 2147483648
    %v4680 = vmul.f32 %v4679, 1.442695
    %v4681 = vpow.pop %v4680
    %v4682 = vadd.f32 %v4681, 1.0
    %v4683 = vrcp.pop %v4682
    %v4684 = vmul.f32 %v4682, %v4683
    %v4685 = vsub.f32 1.0, %v4684
    %v4686 = vmul.f32 %v4683, %v4685
    %v4687 = vadd.f32 %v4683, %v4686
    %vm4688 = vweird.f32 %v4682
    %vm4689 = vweird.f32 %v4683
    %vm4690 = vmor %vm4688, %vm4689
    %v4691 = vsel %vm4690, %v4683, %v4687
    %v4692 = vand.u32 2147483647, %v4682
    %vm4693 = vcmp.eq.f32.partialorder %v4692, 8.507059e+37
    %v4694 = vand.u32 %v4682, 2147483648
    %v4695 = vor.u32 1.1754944e-38, %v4694
    %v4696 = vsel %vm4693, %v4695, %v4691
    %v4697 = vmul.f32 1.0, %v4696
    %v4698 = vmul.f32 %v4612, %v738
    %4699 = vmatpush.msra.mxu0 0.0
    %4700 = vmatpush.msra.mxu0 0.0
    %4701 = vmatpush.msra.mxu0 0.0
    %4702 = vmatpush.msra.mxu0 0.0
    %4703 = vmatpush.msra.mxu0 0.0
    %4704 = vmatpush.msra.mxu0 0.0
    %4705 = vmatpush.msra.mxu0 0.0
    %4706 = vmatpush.msra.mxu0 0.0
    %4707 = vmatpush.msra.mxu0 0.0
    %4708 = vmatpush.msra.mxu0 0.0
    %4709 = vmatpush.msra.mxu0 0.0
    %4710 = vmatpush.msra.mxu0 0.0
    %4711 = vmatpush.msra.mxu0 %v126
    %4712 = vmatpush.msra.mxu0 %v125
    %4713 = vmatpush.msra.mxu0 %v124
    %4714 = vmatpush.msra.mxu0 %v123
    %4715 = vmatmul.f32.gmra.mxu0 %v4228
    %v4716 = vpop.f32.mrf.mxu0
    %v4717 = vadd.f32 0.0, %v4716
    %4718 = vdwg.mxu0
    %v4719 = vadd.f32 %v4698, %v4717
    %v4720 = vadd.f32 %v4719, %v159
    %v4721 = vtanh.pop %v4720
    %v4722 = vmul.f32 %v4612, %v765
    %4723 = vmatpush.msra.mxu0 0.0
    %4724 = vmatpush.msra.mxu0 0.0
    %4725 = vmatpush.msra.mxu0 0.0
    %4726 = vmatpush.msra.mxu0 0.0
    %4727 = vmatpush.msra.mxu0 0.0
    %4728 = vmatpush.msra.mxu0 0.0
    %4729 = vmatpush.msra.mxu0 0.0
    %4730 = vmatpush.msra.mxu0 0.0
    %4731 = vmatpush.msra.mxu0 0.0
    %4732 = vmatpush.msra.mxu0 0.0
    %4733 = vmatpush.msra.mxu0 0.0
    %4734 = vmatpush.msra.mxu0 0.0
    %4735 = vmatpush.msra.mxu0 %v130
    %4736 = vmatpush.msra.mxu0 %v129
    %4737 = vmatpush.msra.mxu0 %v128
    %4738 = vmatpush.msra.mxu0 %v127
    %4739 = vmatmul.f32.gmra.mxu0 %v4228
    %v4740 = vpop.f32.mrf.mxu0
    %v4741 = vadd.f32 0.0, %v4740
    %4742 = vdwg.mxu0
    %v4743 = vadd.f32 %v4722, %v4741
    %v4744 = vadd.f32 %v4743, %v162
    %v4745 = vxor.u32 %v4744, 2147483648
    %v4746 = vmul.f32 %v4745, 1.442695
    %v4747 = vpow.pop %v4746
    %v4748 = vadd.f32 %v4747, 1.0
    %v4749 = vrcp.pop %v4748
    %v4750 = vmul.f32 %v4748, %v4749
    %v4751 = vsub.f32 1.0, %v4750
    %v4752 = vmul.f32 %v4749, %v4751
    %v4753 = vadd.f32 %v4749, %v4752
    %vm4754 = vweird.f32 %v4748
    %vm4755 = vweird.f32 %v4749
    %vm4756 = vmor %vm4754, %vm4755
    %v4757 = vsel %vm4756, %v4749, %v4753
    %v4758 = vand.u32 2147483647, %v4748
    %vm4759 = vcmp.eq.f32.partialorder %v4758, 8.507059e+37
    %v4760 = vand.u32 %v4748, 2147483648
    %v4761 = vor.u32 1.1754944e-38, %v4760
    %v4762 = vsel %vm4759, %v4761, %v4757
    %v4763 = vmul.f32 1.0, %v4762
    %v4764 = vmul.f32 %v4697, %v4201
    %v4765 = vmul.f32 %v4655, %v4721
    %v4766 = vadd.f32 %v4764, %v4765
    %v4767 = vtanh.pop %v4766
    %v4768 = vmul.f32 %v4763, %v4767
    %4769 = vmatpush.msra.mxu0 0.0
    %4770 = vmatpush.msra.mxu0 0.0
    %4771 = vmatpush.msra.mxu0 0.0
    %4772 = vmatpush.msra.mxu0 0.0
    %4773 = vmatpush.msra.mxu0 0.0
    %4774 = vmatpush.msra.mxu0 0.0
    %4775 = vmatpush.msra.mxu0 0.0
    %4776 = vmatpush.msra.mxu0 0.0
    %4777 = vmatpush.msra.mxu0 0.0
    %4778 = vmatpush.msra.mxu0 0.0
    %4779 = vmatpush.msra.mxu0 0.0
    %4780 = vmatpush.msra.mxu0 0.0
    %4781 = vmatpush.msra.mxu0 %v142
    %4782 = vmatpush.msra.mxu0 %v141
    %4783 = vmatpush.msra.mxu0 %v140
    %4784 = vmatpush.msra.mxu0 %v139
    %4785 = vmatmul.f32.gmra.mxu0 %v4587
    %v4786 = vpop.f32.mrf.mxu0
    %v4787 = vadd.f32 0.0, %v4786
    %4788 = vdwg.mxu0
    %v4790 = vsel %vm164, %v4768, 0
    %4792 = vmatpush.msra.mxu0 0.0
    %4793 = vmatpush.msra.mxu0 0.0
    %4794 = vmatpush.msra.mxu0 0.0
    %4795 = vmatpush.msra.mxu0 0.0
    %4796 = vmatpush.msra.mxu0 0.0
    %4797 = vmatpush.msra.mxu0 0.0
    %4798 = vmatpush.msra.mxu0 0.0
    %4799 = vmatpush.msra.mxu0 0.0
    %4800 = vmatpush.msra.mxu0 0.0
    %4801 = vmatpush.msra.mxu0 0.0
    %4802 = vmatpush.msra.mxu0 0.0
    %4803 = vmatpush.msra.mxu0 0.0
    %4804 = vmatpush.msra.mxu0 %v138
    %4805 = vmatpush.msra.mxu0 %v137
    %4806 = vmatpush.msra.mxu0 %v136
    %4807 = vmatpush.msra.mxu0 %v135
    %4808 = vmatmul.f32.gmra.mxu0 %v4790
    %v4809 = vpop.f32.mrf.mxu0
    %v4810 = vadd.f32 %v4787, %v4809
    %4811 = vdwg.mxu0
    %v4813 = vperm.slane %v143, 0
    %v4815 = vadd.f32 %v4810, %v4813
    %vm4816 = vcmask 7168
    %4817 = vst.msk [vmem:[%s14] sm:$0xff] %vm4816, %v4815
    // Predicated region
    $region66: #{tpu_custom_call.1} parent=1 // pred_check
      _
    $region67: #{tpu_custom_call.1} parent=1 // pred_check_branch
      %4819 = sbr.rel (0) target = $region69
    $region68: #{tpu_custom_call.1} parent=1 // pred_region
      _
    $region69: #{tpu_custom_call.1} parent=1 // pred_fallthru
      _
    // Predicated region
    $region70: #{tpu_custom_call.1} parent=1 // pred_check
      _
    $region71: #{tpu_custom_call.1} parent=1 // pred_check_branch
      %4821 = sbr.rel (0) target = $region73
    $region72: #{tpu_custom_call.1} parent=1 // pred_region
      _
    $region73: #{tpu_custom_call.1} parent=1 // pred_fallthru
      _
    %4822 = vsyncpa [#allocation4], 1
    %4823 = vsyncpa [#allocation6], 1

</llo_original>
